<compile_context>
chip_gen: v6e
topology: v6e:2x2x1
jax: 0.10.0
libtpu: 0.0.40
codegen_flags: <defaults>
</compile_context>

<pallas_src>
import functools

import jax
import jax.numpy as jnp
from jax.experimental import pallas as pl
from jax.experimental.pallas import tpu as pltpu


# -----------------------------------------------------------------------------
# Fused conv (as matmul) + BatchNorm(batch stats) + ReLU, two-phase grid.
# -----------------------------------------------------------------------------
def _conv_bn_relu_kernel(w_ref, p_ref, g_ref, b_ref, o_ref,
                         sum_scr, sq_scr, scale_scr, shift_scr,
                         *, count, eps):
    phase = pl.program_id(0)           # 0: stats pass, 1: apply pass
    mi = pl.program_id(1)              # lane-tile index

    # [Cout, Kd] @ [Kd, tile_m] -> [Cout, tile_m], f32 accumulate on the MXU.
    acc = jnp.dot(w_ref[...], p_ref[...], preferred_element_type=jnp.float32)

    @pl.when((phase == 0) & (mi == 0))
    def _init():
        sum_scr[...] = jnp.zeros_like(sum_scr)
        sq_scr[...] = jnp.zeros_like(sq_scr)

    @pl.when(phase == 0)
    def _stats():
        # Zero-padded lane columns contribute exactly zero to both sums.
        sum_scr[...] += jnp.sum(acc, axis=1, keepdims=True)
        sq_scr[...] += jnp.sum(acc * acc, axis=1, keepdims=True)

    @pl.when((phase == 1) & (mi == 0))
    def _finalize():
        inv_n = 1.0 / count
        mean = sum_scr[...] * inv_n                     # [Cout, 1]
        var = sq_scr[...] * inv_n - mean * mean         # biased variance
        scale = g_ref[...] * jax.lax.rsqrt(var + eps)   # [Cout, 1]
        scale_scr[...] = scale
        shift_scr[...] = b_ref[...] - mean * scale

    @pl.when(phase == 1)
    def _store():
        o_ref[...] = jnp.maximum(acc * scale_scr[...] + shift_scr[...], 0.0)


# -----------------------------------------------------------------------------
# MaxPool2d(k, stride): max over k*k pre-extracted windows, lane-tiled.
# -----------------------------------------------------------------------------
def _maxpool_kernel(p_ref, o_ref):
    kk = p_ref.shape[1]
    m = p_ref[:, 0, :]
    for i in range(1, kk):             # static unrolled loop of kk-1 maxes
        m = jnp.maximum(m, p_ref[:, i, :])
    o_ref[...] = m


# -----------------------------------------------------------------------------
# Host-side glue (channel-major [C, N, H, W] layout between layers).
# -----------------------------------------------------------------------------
def _round_up(a, b):
    return (a + b - 1) // b * b


def _im2col_cm(x_cm, k, stride, padding, kd_pad, total_pad):
    """x_cm: [C, N, H, W] -> bf16 patches [kd_pad, total_pad].

    Row order (c, kh, kw) matches weight.reshape(Cout, Cin*k*k); column order
    (n, oh, ow).  Padded rows/columns are exactly zero.
    """
    C, N, H, W = x_cm.shape
    OH = (H - k + 2 * padding) // stride + 1
    OW = (W - k + 2 * padding) // stride + 1
    xp = jnp.pad(x_cm.astype(jnp.bfloat16),
                 ((0, 0), (0, 0), (padding, padding), (padding, padding)))
    cols = []
    for kh in range(k):
        for kw in range(k):
            cols.append(xp[:, :,
                           kh:kh + stride * (OH - 1) + 1:stride,
                           kw:kw + stride * (OW - 1) + 1:stride])
    patches = jnp.stack(cols, axis=1)                     # [C, k*k, N, OH, OW]
    patches = patches.reshape(C * k * k, N * OH * OW)     # [Kd, M]
    Kd, M = C * k * k, N * OH * OW
    patches = jnp.pad(patches, ((0, kd_pad - Kd), (0, total_pad - M)))
    return patches, OH, OW


def conv_bn_relu(x_cm, weight, gamma, beta, *, stride=1, padding=0,
                 eps=1e-5, max_tile_m=2048):
    """x_cm: [Cin, N, H, W] f32, weight: [Cout, Cin, k, k] -> [Cout, N, OH, OW] f32."""
    Cin, N, H, W = x_cm.shape
    Cout, _, k, _ = weight.shape
    OH = (H - k + 2 * padding) // stride + 1
    OW = (W - k + 2 * padding) // stride + 1
    M = N * OH * OW                               # batch folded into lanes
    Kd = Cin * k * k
    kd_pad = _round_up(Kd, 32)

    tile_m = max_tile_m if M > max_tile_m else _round_up(M, 128)
    total_pad = _round_up(M, tile_m)
    n_tiles = total_pad // tile_m

    patches, _, _ = _im2col_cm(x_cm, k, stride, padding, kd_pad, total_pad)
    w_mat = jnp.pad(weight.reshape(Cout, Kd),
                    ((0, 0), (0, kd_pad - Kd))).astype(jnp.bfloat16)
    g2 = gamma.reshape(Cout, 1).astype(jnp.float32)
    b2 = beta.reshape(Cout, 1).astype(jnp.float32)

    out = pl.pallas_call(
        functools.partial(_conv_bn_relu_kernel, count=float(M), eps=eps),
        out_shape=jax.ShapeDtypeStruct((Cout, total_pad), jnp.float32),
        grid_spec=pltpu.PrefetchScalarGridSpec(
            num_scalar_prefetch=0,
            grid=(2, n_tiles),                     # (phase, lane tiles)
            in_specs=[
                pl.BlockSpec((Cout, kd_pad), lambda ph, mi: (0, 0)),   # resident
                pl.BlockSpec((kd_pad, tile_m), lambda ph, mi: (0, mi)),
                pl.BlockSpec((Cout, 1), lambda ph, mi: (0, 0)),        # gamma
                pl.BlockSpec((Cout, 1), lambda ph, mi: (0, 0)),        # beta
            ],
            # Phase 0 never writes; pin its block index to 0 so no spurious
            # writebacks happen before phase 1 fills every tile.
            out_specs=pl.BlockSpec((Cout, tile_m), lambda ph, mi: (0, mi * ph)),
            scratch_shapes=[
                pltpu.VMEM((Cout, 1), jnp.float32),   # sum
                pltpu.VMEM((Cout, 1), jnp.float32),   # sum of squares
                pltpu.VMEM((Cout, 1), jnp.float32),   # BN scale
                pltpu.VMEM((Cout, 1), jnp.float32),   # BN shift
            ],
        ),
        compiler_params=pltpu.CompilerParams(
            dimension_semantics=("arbitrary", "arbitrary"),
            vmem_limit_bytes=32 * 1024 * 1024),
    )(w_mat, patches, g2, b2)

    out = out[:, :M]                               # drop zero-padded columns
    return out.reshape(Cout, N, OH, OW)            # next layer's input layout


def maxpool2d(x_cm, k=3, stride=2, max_tile_m=2048):
    """x_cm: [C, N, H, W] -> [C, N, OH, OW] (PyTorch MaxPool2d(k, stride), pad=0)."""
    C, N, H, W = x_cm.shape
    OH = (H - k) // stride + 1
    OW = (W - k) // stride + 1
    M = N * OH * OW
    tile_m = max_tile_m if M > max_tile_m else _round_up(M, 128)
    total_pad = _round_up(M, tile_m)

    views = []
    for kh in range(k):
        for kw in range(k):
            views.append(x_cm[:, :,
                              kh:kh + stride * (OH - 1) + 1:stride,
                              kw:kw + stride * (OW - 1) + 1:stride])
    patches = jnp.stack(views, axis=1).reshape(C, k * k, M)
    if total_pad != M:
        patches = jnp.pad(patches, ((0, 0), (0, 0), (0, total_pad - M)))

    out = pl.pallas_call(
        _maxpool_kernel,
        out_shape=jax.ShapeDtypeStruct((C, total_pad), x_cm.dtype),
        grid_spec=pltpu.PrefetchScalarGridSpec(
            num_scalar_prefetch=0,
            grid=(total_pad // tile_m,),
            in_specs=[pl.BlockSpec((C, k * k, tile_m), lambda mi: (0, 0, mi))],
            out_specs=pl.BlockSpec((C, tile_m), lambda mi: (0, mi)),
        ),
        compiler_params=pltpu.CompilerParams(
            dimension_semantics=("parallel",),
            vmem_limit_bytes=32 * 1024 * 1024),
    )(patches)

    return out[:, :M].reshape(C, N, OH, OW)


# -----------------------------------------------------------------------------
# Stem forward: conv1(3->32, s=2) -> conv2(32->32) -> conv3(32->64, p=1) -> pool
# -----------------------------------------------------------------------------
def stem_forward(x, params):
    # One small transpose into channel-major layout; all layers stay in it.
    xc = jnp.transpose(x, (1, 0, 2, 3))                        # [C, N, H, W]
    xc = conv_bn_relu(xc, params["w1"], params["g1"], params["b1"],
                      stride=2, padding=0)
    xc = conv_bn_relu(xc, params["w2"], params["g2"], params["b2"],
                      stride=1, padding=0)
    xc = conv_bn_relu(xc, params["w3"], params["g3"], params["b3"],
                      stride=1, padding=1)
    xc = maxpool2d(xc, k=3, stride=2)
    return jnp.transpose(xc, (1, 0, 2, 3))                     # back to NCHW


if __name__ == "__main__":
    key = jax.random.PRNGKey(0)
    kx, k1, k2, k3 = jax.random.split(key, 4)

    N, Cin, H, W = 2, 3, 32, 32
    x = jax.random.normal(kx, (N, Cin, H, W), dtype=jnp.float32)

    params = {
        "w1": jax.random.normal(k1, (32, 3, 3, 3), dtype=jnp.float32),
        "g1": jnp.ones((32,), jnp.float32),
        "b1": jnp.zeros((32,), jnp.float32),
        "w2": jax.random.normal(k2, (32, 32, 3, 3), dtype=jnp.float32),
        "g2": jnp.ones((32,), jnp.float32),
        "b2": jnp.zeros((32,), jnp.float32),
        "w3": jax.random.normal(k3, (64, 32, 3, 3), dtype=jnp.float32),
        "g3": jnp.ones((64,), jnp.float32),
        "b3": jnp.zeros((64,), jnp.float32),
    }

    out = jax.jit(stem_forward)(x, params)
    jax.block_until_ready(out)

    # 32 -conv1(s2)-> 15 -conv2-> 13 -conv3(p1)-> 13 -pool(3,2)-> 6
    assert out.shape == (N, 64, 6, 6), out.shape
    assert bool(jnp.all(jnp.isfinite(out))), "non-finite output"
    print("KERNEL_OK")
</pallas_src>

<mosaic_0001>
module attributes {stable_mosaic.version = 11 : i64} {
  func.func @_conv_bn_relu_kernel(%arg0: i32, %arg1: i32, %arg2: memref<32x32xbf16, #tpu.memory_space<vmem>>, %arg3: memref<32x512xbf16, #tpu.memory_space<vmem>>, %arg4: memref<32x1xf32, #tpu.memory_space<vmem>>, %arg5: memref<32x1xf32, #tpu.memory_space<vmem>>, %arg6: memref<32x512xf32, #tpu.memory_space<vmem>>, %arg7: memref<32x1xf32, #tpu.memory_space<vmem>>, %arg8: memref<32x1xf32, #tpu.memory_space<vmem>>, %arg9: memref<32x1xf32, #tpu.memory_space<vmem>>, %arg10: memref<32x1xf32, #tpu.memory_space<vmem>>) attributes {dimension_semantics = [#tpu.dimension_semantics<arbitrary>, #tpu.dimension_semantics<arbitrary>], iteration_bounds = array<i64: 2, 1>, scalar_prefetch = 0 : i64, scratch_operands = 4 : i64, tpu.core_type = #tpu.core_type<tc>, window_params = [{pipeline_mode = #tpu.pipeline_mode<synchronous>, transform_indices = @transform_0, window_bounds = array<i64: 32, 32>}, {transform_indices = @transform_1, window_bounds = array<i64: 32, 512>}, {pipeline_mode = #tpu.pipeline_mode<synchronous>, transform_indices = @transform_2, window_bounds = array<i64: 32, 1>}, {pipeline_mode = #tpu.pipeline_mode<synchronous>, transform_indices = @transform_3, window_bounds = array<i64: 32, 1>}, {transform_indices = @transform_4, window_bounds = array<i64: 32, 512>}]} {
    %c0 = arith.constant 0 : index
    %c0_0 = arith.constant 0 : index
    %0 = vector.load %arg2[%c0, %c0_0] : memref<32x32xbf16, #tpu.memory_space<vmem>>, vector<32x32xbf16>
    %c0_1 = arith.constant 0 : index
    %c0_2 = arith.constant 0 : index
    %1 = vector.load %arg3[%c0_1, %c0_2] : memref<32x512xbf16, #tpu.memory_space<vmem>>, vector<32x512xbf16>
    %cst = arith.constant dense<0.000000e+00> : vector<32x512xf32>
    %2 = tpu.matmul %0, %1, %cst {dimension_numbers = #tpu.dot_dimension_numbers<[1], [0], [0], [1], [0, 0, 1, 1], [], []>} : vector<32x32xbf16>, vector<32x512xbf16>, vector<32x512xf32> -> vector<32x512xf32>
    %c0_i32 = arith.constant 0 : i32
    %3 = arith.cmpi eq, %arg0, %c0_i32 : i32
    %c0_i32_3 = arith.constant 0 : i32
    %4 = arith.cmpi eq, %arg1, %c0_i32_3 : i32
    %5 = arith.andi %3, %4 : i1
    %6 = arith.extui %5 : i1 to i32
    %c0_i32_4 = arith.constant 0 : i32
    %7 = arith.cmpi ne, %6, %c0_i32_4 : i32
    scf.if %7 {
      %cst_11 = arith.constant 0.000000e+00 : f32
      %19 = vector.broadcast %cst_11 : f32 to vector<32x1xf32>
      %c0_12 = arith.constant 0 : index
      %c0_13 = arith.constant 0 : index
      %20 = vector.load %arg7[%c0_12, %c0_13] : memref<32x1xf32, #tpu.memory_space<vmem>>, vector<32x1xf32>
      tpu.vector_store %arg7[%c0_12, %c0_13], %19 {strides = array<i32>} : memref<32x1xf32, #tpu.memory_space<vmem>>, vector<32x1xf32>,
      %cst_14 = arith.constant 0.000000e+00 : f32
      %21 = vector.broadcast %cst_14 : f32 to vector<32x1xf32>
      %c0_15 = arith.constant 0 : index
      %c0_16 = arith.constant 0 : index
      %22 = vector.load %arg8[%c0_15, %c0_16] : memref<32x1xf32, #tpu.memory_space<vmem>>, vector<32x1xf32>
      tpu.vector_store %arg8[%c0_15, %c0_16], %21 {strides = array<i32>} : memref<32x1xf32, #tpu.memory_space<vmem>>, vector<32x1xf32>,
    } else {
    }
    %c0_i32_5 = arith.constant 0 : i32
    %8 = arith.cmpi eq, %arg0, %c0_i32_5 : i32
    %9 = arith.extui %8 : i1 to i32
    %c0_i32_6 = arith.constant 0 : i32
    %10 = arith.cmpi ne, %9, %c0_i32_6 : i32
    scf.if %10 {
      %c0_11 = arith.constant 0 : index
      %c0_12 = arith.constant 0 : index
      %19 = vector.load %arg7[%c0_11, %c0_12] : memref<32x1xf32, #tpu.memory_space<vmem>>, vector<32x1xf32>
      %cst_13 = arith.constant dense<0.000000e+00> : vector<32xf32>
      %20 = vector.multi_reduction <add>, %2, %cst_13 [1] : vector<32x512xf32> to vector<32xf32>
      %21 = vector.shape_cast %20 : vector<32xf32> to vector<32x1xf32>
      %22 = arith.addf %19, %21 : vector<32x1xf32>
      %c0_14 = arith.constant 0 : index
      %c0_15 = arith.constant 0 : index
      %23 = vector.load %arg7[%c0_14, %c0_15] : memref<32x1xf32, #tpu.memory_space<vmem>>, vector<32x1xf32>
      tpu.vector_store %arg7[%c0_14, %c0_15], %22 {strides = array<i32>} : memref<32x1xf32, #tpu.memory_space<vmem>>, vector<32x1xf32>,
      %c0_16 = arith.constant 0 : index
      %c0_17 = arith.constant 0 : index
      %24 = vector.load %arg8[%c0_16, %c0_17] : memref<32x1xf32, #tpu.memory_space<vmem>>, vector<32x1xf32>
      %25 = arith.mulf %2, %2 : vector<32x512xf32>
      %cst_18 = arith.constant dense<0.000000e+00> : vector<32xf32>
      %26 = vector.multi_reduction <add>, %25, %cst_18 [1] : vector<32x512xf32> to vector<32xf32>
      %27 = vector.shape_cast %26 : vector<32xf32> to vector<32x1xf32>
      %28 = arith.addf %24, %27 : vector<32x1xf32>
      %c0_19 = arith.constant 0 : index
      %c0_20 = arith.constant 0 : index
      %29 = vector.load %arg8[%c0_19, %c0_20] : memref<32x1xf32, #tpu.memory_space<vmem>>, vector<32x1xf32>
      tpu.vector_store %arg8[%c0_19, %c0_20], %28 {strides = array<i32>} : memref<32x1xf32, #tpu.memory_space<vmem>>, vector<32x1xf32>,
    } else {
    }
    %c1_i32 = arith.constant 1 : i32
    %11 = arith.cmpi eq, %arg0, %c1_i32 : i32
    %c0_i32_7 = arith.constant 0 : i32
    %12 = arith.cmpi eq, %arg1, %c0_i32_7 : i32
    %13 = arith.andi %11, %12 : i1
    %14 = arith.extui %13 : i1 to i32
    %c0_i32_8 = arith.constant 0 : i32
    %15 = arith.cmpi ne, %14, %c0_i32_8 : i32
    scf.if %15 {
      %c0_11 = arith.constant 0 : index
      %c0_12 = arith.constant 0 : index
      %19 = vector.load %arg7[%c0_11, %c0_12] : memref<32x1xf32, #tpu.memory_space<vmem>>, vector<32x1xf32>
      %cst_13 = arith.constant 0.00222222228 : f32
      %20 = vector.broadcast %cst_13 : f32 to vector<32x1xf32>
      %21 = arith.mulf %19, %20 : vector<32x1xf32>
      %c0_14 = arith.constant 0 : index
      %c0_15 = arith.constant 0 : index
      %22 = vector.load %arg8[%c0_14, %c0_15] : memref<32x1xf32, #tpu.memory_space<vmem>>, vector<32x1xf32>
      %cst_16 = arith.constant 0.00222222228 : f32
      %23 = vector.broadcast %cst_16 : f32 to vector<32x1xf32>
      %24 = arith.mulf %22, %23 : vector<32x1xf32>
      %25 = arith.mulf %21, %21 : vector<32x1xf32>
      %26 = arith.subf %24, %25 : vector<32x1xf32>
      %c0_17 = arith.constant 0 : index
      %c0_18 = arith.constant 0 : index
      %27 = vector.load %arg4[%c0_17, %c0_18] : memref<32x1xf32, #tpu.memory_space<vmem>>, vector<32x1xf32>
      %cst_19 = arith.constant 9.99999974E-6 : f32
      %28 = vector.broadcast %cst_19 : f32 to vector<32x1xf32>
      %29 = arith.addf %26, %28 : vector<32x1xf32>
      %30 = math.rsqrt %29 : vector<32x1xf32>
      %31 = arith.mulf %27, %30 : vector<32x1xf32>
      %c0_20 = arith.constant 0 : index
      %c0_21 = arith.constant 0 : index
      %32 = vector.load %arg9[%c0_20, %c0_21] : memref<32x1xf32, #tpu.memory_space<vmem>>, vector<32x1xf32>
      tpu.vector_store %arg9[%c0_20, %c0_21], %31 {strides = array<i32>} : memref<32x1xf32, #tpu.memory_space<vmem>>, vector<32x1xf32>,
      %c0_22 = arith.constant 0 : index
      %c0_23 = arith.constant 0 : index
      %33 = vector.load %arg5[%c0_22, %c0_23] : memref<32x1xf32, #tpu.memory_space<vmem>>, vector<32x1xf32>
      %34 = arith.mulf %21, %31 : vector<32x1xf32>
      %35 = arith.subf %33, %34 : vector<32x1xf32>
      %c0_24 = arith.constant 0 : index
      %c0_25 = arith.constant 0 : index
      %36 = vector.load %arg10[%c0_24, %c0_25] : memref<32x1xf32, #tpu.memory_space<vmem>>, vector<32x1xf32>
      tpu.vector_store %arg10[%c0_24, %c0_25], %35 {strides = array<i32>} : memref<32x1xf32, #tpu.memory_space<vmem>>, vector<32x1xf32>,
    } else {
    }
    %c1_i32_9 = arith.constant 1 : i32
    %16 = arith.cmpi eq, %arg0, %c1_i32_9 : i32
    %17 = arith.extui %16 : i1 to i32
    %c0_i32_10 = arith.constant 0 : i32
    %18 = arith.cmpi ne, %17, %c0_i32_10 : i32
    scf.if %18 {
      %c0_11 = arith.constant 0 : index
      %c0_12 = arith.constant 0 : index
      %19 = vector.load %arg9[%c0_11, %c0_12] : memref<32x1xf32, #tpu.memory_space<vmem>>, vector<32x1xf32>
      %20 = vector.broadcast %19 : vector<32x1xf32> to vector<32x512xf32>
      %21 = arith.mulf %2, %20 : vector<32x512xf32>
      %c0_13 = arith.constant 0 : index
      %c0_14 = arith.constant 0 : index
      %22 = vector.load %arg10[%c0_13, %c0_14] : memref<32x1xf32, #tpu.memory_space<vmem>>, vector<32x1xf32>
      %23 = vector.broadcast %22 : vector<32x1xf32> to vector<32x512xf32>
      %24 = arith.addf %21, %23 : vector<32x512xf32>
      %cst_15 = arith.constant 0.000000e+00 : f32
      %25 = vector.broadcast %cst_15 : f32 to vector<32x512xf32>
      %26 = arith.maximumf %24, %25 : vector<32x512xf32>
      %c0_16 = arith.constant 0 : index
      %c0_17 = arith.constant 0 : index
      %27 = vector.load %arg6[%c0_16, %c0_17] : memref<32x512xf32, #tpu.memory_space<vmem>>, vector<32x512xf32>
      tpu.vector_store %arg6[%c0_16, %c0_17], %26 {strides = array<i32>} : memref<32x512xf32, #tpu.memory_space<vmem>>, vector<32x512xf32>,
    } else {
    }
    return
  }
  func.func @transform_0(%arg0: i32, %arg1: i32) -> (i32, i32) {
    %c0_i32 = arith.constant 0 : i32
    %c0_i32_0 = arith.constant 0 : i32
    %c0_i32_1 = arith.constant 0 : i32
    return %c0_i32, %c0_i32_0 : i32, i32
  }
  func.func @transform_1(%arg0: i32, %arg1: i32) -> (i32, i32) {
    %c0_i32 = arith.constant 0 : i32
    %c0_i32_0 = arith.constant 0 : i32
    return %c0_i32, %arg1 : i32, i32
  }
  func.func @transform_2(%arg0: i32, %arg1: i32) -> (i32, i32) {
    %c0_i32 = arith.constant 0 : i32
    %c0_i32_0 = arith.constant 0 : i32
    %c0_i32_1 = arith.constant 0 : i32
    return %c0_i32, %c0_i32_0 : i32, i32
  }
  func.func @transform_3(%arg0: i32, %arg1: i32) -> (i32, i32) {
    %c0_i32 = arith.constant 0 : i32
    %c0_i32_0 = arith.constant 0 : i32
    %c0_i32_1 = arith.constant 0 : i32
    return %c0_i32, %c0_i32_0 : i32, i32
  }
  func.func @transform_4(%arg0: i32, %arg1: i32) -> (i32, i32) {
    %0 = arith.muli %arg1, %arg0 : i32
    %c0_i32 = arith.constant 0 : i32
    %c0_i32_0 = arith.constant 0 : i32
    return %c0_i32, %0 : i32, i32
  }
}

module attributes {stable_mosaic.version = 11 : i64} {
  func.func @_conv_bn_relu_kernel(%arg0: i32, %arg1: i32, %arg2: memref<32x288xbf16, #tpu.memory_space<vmem>>, %arg3: memref<288x384xbf16, #tpu.memory_space<vmem>>, %arg4: memref<32x1xf32, #tpu.memory_space<vmem>>, %arg5: memref<32x1xf32, #tpu.memory_space<vmem>>, %arg6: memref<32x384xf32, #tpu.memory_space<vmem>>, %arg7: memref<32x1xf32, #tpu.memory_space<vmem>>, %arg8: memref<32x1xf32, #tpu.memory_space<vmem>>, %arg9: memref<32x1xf32, #tpu.memory_space<vmem>>, %arg10: memref<32x1xf32, #tpu.memory_space<vmem>>) attributes {dimension_semantics = [#tpu.dimension_semantics<arbitrary>, #tpu.dimension_semantics<arbitrary>], iteration_bounds = array<i64: 2, 1>, scalar_prefetch = 0 : i64, scratch_operands = 4 : i64, tpu.core_type = #tpu.core_type<tc>, window_params = [{pipeline_mode = #tpu.pipeline_mode<synchronous>, transform_indices = @transform_0, window_bounds = array<i64: 32, 288>}, {transform_indices = @transform_1, window_bounds = array<i64: 288, 384>}, {pipeline_mode = #tpu.pipeline_mode<synchronous>, transform_indices = @transform_2, window_bounds = array<i64: 32, 1>}, {pipeline_mode = #tpu.pipeline_mode<synchronous>, transform_indices = @transform_3, window_bounds = array<i64: 32, 1>}, {transform_indices = @transform_4, window_bounds = array<i64: 32, 384>}]} {
    %c0 = arith.constant 0 : index
    %c0_0 = arith.constant 0 : index
    %0 = vector.load %arg2[%c0, %c0_0] : memref<32x288xbf16, #tpu.memory_space<vmem>>, vector<32x288xbf16>
    %c0_1 = arith.constant 0 : index
    %c0_2 = arith.constant 0 : index
    %1 = vector.load %arg3[%c0_1, %c0_2] : memref<288x384xbf16, #tpu.memory_space<vmem>>, vector<288x384xbf16>
    %cst = arith.constant dense<0.000000e+00> : vector<32x384xf32>
    %2 = tpu.matmul %0, %1, %cst {dimension_numbers = #tpu.dot_dimension_numbers<[1], [0], [0], [1], [0, 0, 1, 1], [], []>} : vector<32x288xbf16>, vector<288x384xbf16>, vector<32x384xf32> -> vector<32x384xf32>
    %c0_i32 = arith.constant 0 : i32
    %3 = arith.cmpi eq, %arg0, %c0_i32 : i32
    %c0_i32_3 = arith.constant 0 : i32
    %4 = arith.cmpi eq, %arg1, %c0_i32_3 : i32
    %5 = arith.andi %3, %4 : i1
    %6 = arith.extui %5 : i1 to i32
    %c0_i32_4 = arith.constant 0 : i32
    %7 = arith.cmpi ne, %6, %c0_i32_4 : i32
    scf.if %7 {
      %cst_11 = arith.constant 0.000000e+00 : f32
      %19 = vector.broadcast %cst_11 : f32 to vector<32x1xf32>
      %c0_12 = arith.constant 0 : index
      %c0_13 = arith.constant 0 : index
      %20 = vector.load %arg7[%c0_12, %c0_13] : memref<32x1xf32, #tpu.memory_space<vmem>>, vector<32x1xf32>
      tpu.vector_store %arg7[%c0_12, %c0_13], %19 {strides = array<i32>} : memref<32x1xf32, #tpu.memory_space<vmem>>, vector<32x1xf32>,
      %cst_14 = arith.constant 0.000000e+00 : f32
      %21 = vector.broadcast %cst_14 : f32 to vector<32x1xf32>
      %c0_15 = arith.constant 0 : index
      %c0_16 = arith.constant 0 : index
      %22 = vector.load %arg8[%c0_15, %c0_16] : memref<32x1xf32, #tpu.memory_space<vmem>>, vector<32x1xf32>
      tpu.vector_store %arg8[%c0_15, %c0_16], %21 {strides = array<i32>} : memref<32x1xf32, #tpu.memory_space<vmem>>, vector<32x1xf32>,
    } else {
    }
    %c0_i32_5 = arith.constant 0 : i32
    %8 = arith.cmpi eq, %arg0, %c0_i32_5 : i32
    %9 = arith.extui %8 : i1 to i32
    %c0_i32_6 = arith.constant 0 : i32
    %10 = arith.cmpi ne, %9, %c0_i32_6 : i32
    scf.if %10 {
      %c0_11 = arith.constant 0 : index
      %c0_12 = arith.constant 0 : index
      %19 = vector.load %arg7[%c0_11, %c0_12] : memref<32x1xf32, #tpu.memory_space<vmem>>, vector<32x1xf32>
      %cst_13 = arith.constant dense<0.000000e+00> : vector<32xf32>
      %20 = vector.multi_reduction <add>, %2, %cst_13 [1] : vector<32x384xf32> to vector<32xf32>
      %21 = vector.shape_cast %20 : vector<32xf32> to vector<32x1xf32>
      %22 = arith.addf %19, %21 : vector<32x1xf32>
      %c0_14 = arith.constant 0 : index
      %c0_15 = arith.constant 0 : index
      %23 = vector.load %arg7[%c0_14, %c0_15] : memref<32x1xf32, #tpu.memory_space<vmem>>, vector<32x1xf32>
      tpu.vector_store %arg7[%c0_14, %c0_15], %22 {strides = array<i32>} : memref<32x1xf32, #tpu.memory_space<vmem>>, vector<32x1xf32>,
      %c0_16 = arith.constant 0 : index
      %c0_17 = arith.constant 0 : index
      %24 = vector.load %arg8[%c0_16, %c0_17] : memref<32x1xf32, #tpu.memory_space<vmem>>, vector<32x1xf32>
      %25 = arith.mulf %2, %2 : vector<32x384xf32>
      %cst_18 = arith.constant dense<0.000000e+00> : vector<32xf32>
      %26 = vector.multi_reduction <add>, %25, %cst_18 [1] : vector<32x384xf32> to vector<32xf32>
      %27 = vector.shape_cast %26 : vector<32xf32> to vector<32x1xf32>
      %28 = arith.addf %24, %27 : vector<32x1xf32>
      %c0_19 = arith.constant 0 : index
      %c0_20 = arith.constant 0 : index
      %29 = vector.load %arg8[%c0_19, %c0_20] : memref<32x1xf32, #tpu.memory_space<vmem>>, vector<32x1xf32>
      tpu.vector_store %arg8[%c0_19, %c0_20], %28 {strides = array<i32>} : memref<32x1xf32, #tpu.memory_space<vmem>>, vector<32x1xf32>,
    } else {
    }
    %c1_i32 = arith.constant 1 : i32
    %11 = arith.cmpi eq, %arg0, %c1_i32 : i32
    %c0_i32_7 = arith.constant 0 : i32
    %12 = arith.cmpi eq, %arg1, %c0_i32_7 : i32
    %13 = arith.andi %11, %12 : i1
    %14 = arith.extui %13 : i1 to i32
    %c0_i32_8 = arith.constant 0 : i32
    %15 = arith.cmpi ne, %14, %c0_i32_8 : i32
    scf.if %15 {
      %c0_11 = arith.constant 0 : index
      %c0_12 = arith.constant 0 : index
      %19 = vector.load %arg7[%c0_11, %c0_12] : memref<32x1xf32, #tpu.memory_space<vmem>>, vector<32x1xf32>
      %cst_13 = arith.constant 2.958580e-03 : f32
      %20 = vector.broadcast %cst_13 : f32 to vector<32x1xf32>
      %21 = arith.mulf %19, %20 : vector<32x1xf32>
      %c0_14 = arith.constant 0 : index
      %c0_15 = arith.constant 0 : index
      %22 = vector.load %arg8[%c0_14, %c0_15] : memref<32x1xf32, #tpu.memory_space<vmem>>, vector<32x1xf32>
      %cst_16 = arith.constant 2.958580e-03 : f32
      %23 = vector.broadcast %cst_16 : f32 to vector<32x1xf32>
      %24 = arith.mulf %22, %23 : vector<32x1xf32>
      %25 = arith.mulf %21, %21 : vector<32x1xf32>
      %26 = arith.subf %24, %25 : vector<32x1xf32>
      %c0_17 = arith.constant 0 : index
      %c0_18 = arith.constant 0 : index
      %27 = vector.load %arg4[%c0_17, %c0_18] : memref<32x1xf32, #tpu.memory_space<vmem>>, vector<32x1xf32>
      %cst_19 = arith.constant 9.99999974E-6 : f32
      %28 = vector.broadcast %cst_19 : f32 to vector<32x1xf32>
      %29 = arith.addf %26, %28 : vector<32x1xf32>
      %30 = math.rsqrt %29 : vector<32x1xf32>
      %31 = arith.mulf %27, %30 : vector<32x1xf32>
      %c0_20 = arith.constant 0 : index
      %c0_21 = arith.constant 0 : index
      %32 = vector.load %arg9[%c0_20, %c0_21] : memref<32x1xf32, #tpu.memory_space<vmem>>, vector<32x1xf32>
      tpu.vector_store %arg9[%c0_20, %c0_21], %31 {strides = array<i32>} : memref<32x1xf32, #tpu.memory_space<vmem>>, vector<32x1xf32>,
      %c0_22 = arith.constant 0 : index
      %c0_23 = arith.constant 0 : index
      %33 = vector.load %arg5[%c0_22, %c0_23] : memref<32x1xf32, #tpu.memory_space<vmem>>, vector<32x1xf32>
      %34 = arith.mulf %21, %31 : vector<32x1xf32>
      %35 = arith.subf %33, %34 : vector<32x1xf32>
      %c0_24 = arith.constant 0 : index
      %c0_25 = arith.constant 0 : index
      %36 = vector.load %arg10[%c0_24, %c0_25] : memref<32x1xf32, #tpu.memory_space<vmem>>, vector<32x1xf32>
      tpu.vector_store %arg10[%c0_24, %c0_25], %35 {strides = array<i32>} : memref<32x1xf32, #tpu.memory_space<vmem>>, vector<32x1xf32>,
    } else {
    }
    %c1_i32_9 = arith.constant 1 : i32
    %16 = arith.cmpi eq, %arg0, %c1_i32_9 : i32
    %17 = arith.extui %16 : i1 to i32
    %c0_i32_10 = arith.constant 0 : i32
    %18 = arith.cmpi ne, %17, %c0_i32_10 : i32
    scf.if %18 {
      %c0_11 = arith.constant 0 : index
      %c0_12 = arith.constant 0 : index
      %19 = vector.load %arg9[%c0_11, %c0_12] : memref<32x1xf32, #tpu.memory_space<vmem>>, vector<32x1xf32>
      %20 = vector.broadcast %19 : vector<32x1xf32> to vector<32x384xf32>
      %21 = arith.mulf %2, %20 : vector<32x384xf32>
      %c0_13 = arith.constant 0 : index
      %c0_14 = arith.constant 0 : index
      %22 = vector.load %arg10[%c0_13, %c0_14] : memref<32x1xf32, #tpu.memory_space<vmem>>, vector<32x1xf32>
      %23 = vector.broadcast %22 : vector<32x1xf32> to vector<32x384xf32>
      %24 = arith.addf %21, %23 : vector<32x384xf32>
      %cst_15 = arith.constant 0.000000e+00 : f32
      %25 = vector.broadcast %cst_15 : f32 to vector<32x384xf32>
      %26 = arith.maximumf %24, %25 : vector<32x384xf32>
      %c0_16 = arith.constant 0 : index
      %c0_17 = arith.constant 0 : index
      %27 = vector.load %arg6[%c0_16, %c0_17] : memref<32x384xf32, #tpu.memory_space<vmem>>, vector<32x384xf32>
      tpu.vector_store %arg6[%c0_16, %c0_17], %26 {strides = array<i32>} : memref<32x384xf32, #tpu.memory_space<vmem>>, vector<32x384xf32>,
    } else {
    }
    return
  }
  func.func @transform_0(%arg0: i32, %arg1: i32) -> (i32, i32) {
    %c0_i32 = arith.constant 0 : i32
    %c0_i32_0 = arith.constant 0 : i32
    %c0_i32_1 = arith.constant 0 : i32
    return %c0_i32, %c0_i32_0 : i32, i32
  }
  func.func @transform_1(%arg0: i32, %arg1: i32) -> (i32, i32) {
    %c0_i32 = arith.constant 0 : i32
    %c0_i32_0 = arith.constant 0 : i32
    return %c0_i32, %arg1 : i32, i32
  }
  func.func @transform_2(%arg0: i32, %arg1: i32) -> (i32, i32) {
    %c0_i32 = arith.constant 0 : i32
    %c0_i32_0 = arith.constant 0 : i32
    %c0_i32_1 = arith.constant 0 : i32
    return %c0_i32, %c0_i32_0 : i32, i32
  }
  func.func @transform_3(%arg0: i32, %arg1: i32) -> (i32, i32) {
    %c0_i32 = arith.constant 0 : i32
    %c0_i32_0 = arith.constant 0 : i32
    %c0_i32_1 = arith.constant 0 : i32
    return %c0_i32, %c0_i32_0 : i32, i32
  }
  func.func @transform_4(%arg0: i32, %arg1: i32) -> (i32, i32) {
    %0 = arith.muli %arg1, %arg0 : i32
    %c0_i32 = arith.constant 0 : i32
    %c0_i32_0 = arith.constant 0 : i32
    return %c0_i32, %0 : i32, i32
  }
}

module attributes {stable_mosaic.version = 11 : i64} {
  func.func @_conv_bn_relu_kernel(%arg0: i32, %arg1: i32, %arg2: memref<64x288xbf16, #tpu.memory_space<vmem>>, %arg3: memref<288x384xbf16, #tpu.memory_space<vmem>>, %arg4: memref<64x1xf32, #tpu.memory_space<vmem>>, %arg5: memref<64x1xf32, #tpu.memory_space<vmem>>, %arg6: memref<64x384xf32, #tpu.memory_space<vmem>>, %arg7: memref<64x1xf32, #tpu.memory_space<vmem>>, %arg8: memref<64x1xf32, #tpu.memory_space<vmem>>, %arg9: memref<64x1xf32, #tpu.memory_space<vmem>>, %arg10: memref<64x1xf32, #tpu.memory_space<vmem>>) attributes {dimension_semantics = [#tpu.dimension_semantics<arbitrary>, #tpu.dimension_semantics<arbitrary>], iteration_bounds = array<i64: 2, 1>, scalar_prefetch = 0 : i64, scratch_operands = 4 : i64, tpu.core_type = #tpu.core_type<tc>, window_params = [{pipeline_mode = #tpu.pipeline_mode<synchronous>, transform_indices = @transform_0, window_bounds = array<i64: 64, 288>}, {transform_indices = @transform_1, window_bounds = array<i64: 288, 384>}, {pipeline_mode = #tpu.pipeline_mode<synchronous>, transform_indices = @transform_2, window_bounds = array<i64: 64, 1>}, {pipeline_mode = #tpu.pipeline_mode<synchronous>, transform_indices = @transform_3, window_bounds = array<i64: 64, 1>}, {transform_indices = @transform_4, window_bounds = array<i64: 64, 384>}]} {
    %c0 = arith.constant 0 : index
    %c0_0 = arith.constant 0 : index
    %0 = vector.load %arg2[%c0, %c0_0] : memref<64x288xbf16, #tpu.memory_space<vmem>>, vector<64x288xbf16>
    %c0_1 = arith.constant 0 : index
    %c0_2 = arith.constant 0 : index
    %1 = vector.load %arg3[%c0_1, %c0_2] : memref<288x384xbf16, #tpu.memory_space<vmem>>, vector<288x384xbf16>
    %cst = arith.constant dense<0.000000e+00> : vector<64x384xf32>
    %2 = tpu.matmul %0, %1, %cst {dimension_numbers = #tpu.dot_dimension_numbers<[1], [0], [0], [1], [0, 0, 1, 1], [], []>} : vector<64x288xbf16>, vector<288x384xbf16>, vector<64x384xf32> -> vector<64x384xf32>
    %c0_i32 = arith.constant 0 : i32
    %3 = arith.cmpi eq, %arg0, %c0_i32 : i32
    %c0_i32_3 = arith.constant 0 : i32
    %4 = arith.cmpi eq, %arg1, %c0_i32_3 : i32
    %5 = arith.andi %3, %4 : i1
    %6 = arith.extui %5 : i1 to i32
    %c0_i32_4 = arith.constant 0 : i32
    %7 = arith.cmpi ne, %6, %c0_i32_4 : i32
    scf.if %7 {
      %cst_11 = arith.constant 0.000000e+00 : f32
      %19 = vector.broadcast %cst_11 : f32 to vector<64x1xf32>
      %c0_12 = arith.constant 0 : index
      %c0_13 = arith.constant 0 : index
      %20 = vector.load %arg7[%c0_12, %c0_13] : memref<64x1xf32, #tpu.memory_space<vmem>>, vector<64x1xf32>
      tpu.vector_store %arg7[%c0_12, %c0_13], %19 {strides = array<i32>} : memref<64x1xf32, #tpu.memory_space<vmem>>, vector<64x1xf32>,
      %cst_14 = arith.constant 0.000000e+00 : f32
      %21 = vector.broadcast %cst_14 : f32 to vector<64x1xf32>
      %c0_15 = arith.constant 0 : index
      %c0_16 = arith.constant 0 : index
      %22 = vector.load %arg8[%c0_15, %c0_16] : memref<64x1xf32, #tpu.memory_space<vmem>>, vector<64x1xf32>
      tpu.vector_store %arg8[%c0_15, %c0_16], %21 {strides = array<i32>} : memref<64x1xf32, #tpu.memory_space<vmem>>, vector<64x1xf32>,
    } else {
    }
    %c0_i32_5 = arith.constant 0 : i32
    %8 = arith.cmpi eq, %arg0, %c0_i32_5 : i32
    %9 = arith.extui %8 : i1 to i32
    %c0_i32_6 = arith.constant 0 : i32
    %10 = arith.cmpi ne, %9, %c0_i32_6 : i32
    scf.if %10 {
      %c0_11 = arith.constant 0 : index
      %c0_12 = arith.constant 0 : index
      %19 = vector.load %arg7[%c0_11, %c0_12] : memref<64x1xf32, #tpu.memory_space<vmem>>, vector<64x1xf32>
      %cst_13 = arith.constant dense<0.000000e+00> : vector<64xf32>
      %20 = vector.multi_reduction <add>, %2, %cst_13 [1] : vector<64x384xf32> to vector<64xf32>
      %21 = vector.shape_cast %20 : vector<64xf32> to vector<64x1xf32>
      %22 = arith.addf %19, %21 : vector<64x1xf32>
      %c0_14 = arith.constant 0 : index
      %c0_15 = arith.constant 0 : index
      %23 = vector.load %arg7[%c0_14, %c0_15] : memref<64x1xf32, #tpu.memory_space<vmem>>, vector<64x1xf32>
      tpu.vector_store %arg7[%c0_14, %c0_15], %22 {strides = array<i32>} : memref<64x1xf32, #tpu.memory_space<vmem>>, vector<64x1xf32>,
      %c0_16 = arith.constant 0 : index
      %c0_17 = arith.constant 0 : index
      %24 = vector.load %arg8[%c0_16, %c0_17] : memref<64x1xf32, #tpu.memory_space<vmem>>, vector<64x1xf32>
      %25 = arith.mulf %2, %2 : vector<64x384xf32>
      %cst_18 = arith.constant dense<0.000000e+00> : vector<64xf32>
      %26 = vector.multi_reduction <add>, %25, %cst_18 [1] : vector<64x384xf32> to vector<64xf32>
      %27 = vector.shape_cast %26 : vector<64xf32> to vector<64x1xf32>
      %28 = arith.addf %24, %27 : vector<64x1xf32>
      %c0_19 = arith.constant 0 : index
      %c0_20 = arith.constant 0 : index
      %29 = vector.load %arg8[%c0_19, %c0_20] : memref<64x1xf32, #tpu.memory_space<vmem>>, vector<64x1xf32>
      tpu.vector_store %arg8[%c0_19, %c0_20], %28 {strides = array<i32>} : memref<64x1xf32, #tpu.memory_space<vmem>>, vector<64x1xf32>,
    } else {
    }
    %c1_i32 = arith.constant 1 : i32
    %11 = arith.cmpi eq, %arg0, %c1_i32 : i32
    %c0_i32_7 = arith.constant 0 : i32
    %12 = arith.cmpi eq, %arg1, %c0_i32_7 : i32
    %13 = arith.andi %11, %12 : i1
    %14 = arith.extui %13 : i1 to i32
    %c0_i32_8 = arith.constant 0 : i32
    %15 = arith.cmpi ne, %14, %c0_i32_8 : i32
    scf.if %15 {
      %c0_11 = arith.constant 0 : index
      %c0_12 = arith.constant 0 : index
      %19 = vector.load %arg7[%c0_11, %c0_12] : memref<64x1xf32, #tpu.memory_space<vmem>>, vector<64x1xf32>
      %cst_13 = arith.constant 2.958580e-03 : f32
      %20 = vector.broadcast %cst_13 : f32 to vector<64x1xf32>
      %21 = arith.mulf %19, %20 : vector<64x1xf32>
      %c0_14 = arith.constant 0 : index
      %c0_15 = arith.constant 0 : index
      %22 = vector.load %arg8[%c0_14, %c0_15] : memref<64x1xf32, #tpu.memory_space<vmem>>, vector<64x1xf32>
      %cst_16 = arith.constant 2.958580e-03 : f32
      %23 = vector.broadcast %cst_16 : f32 to vector<64x1xf32>
      %24 = arith.mulf %22, %23 : vector<64x1xf32>
      %25 = arith.mulf %21, %21 : vector<64x1xf32>
      %26 = arith.subf %24, %25 : vector<64x1xf32>
      %c0_17 = arith.constant 0 : index
      %c0_18 = arith.constant 0 : index
      %27 = vector.load %arg4[%c0_17, %c0_18] : memref<64x1xf32, #tpu.memory_space<vmem>>, vector<64x1xf32>
      %cst_19 = arith.constant 9.99999974E-6 : f32
      %28 = vector.broadcast %cst_19 : f32 to vector<64x1xf32>
      %29 = arith.addf %26, %28 : vector<64x1xf32>
      %30 = math.rsqrt %29 : vector<64x1xf32>
      %31 = arith.mulf %27, %30 : vector<64x1xf32>
      %c0_20 = arith.constant 0 : index
      %c0_21 = arith.constant 0 : index
      %32 = vector.load %arg9[%c0_20, %c0_21] : memref<64x1xf32, #tpu.memory_space<vmem>>, vector<64x1xf32>
      tpu.vector_store %arg9[%c0_20, %c0_21], %31 {strides = array<i32>} : memref<64x1xf32, #tpu.memory_space<vmem>>, vector<64x1xf32>,
      %c0_22 = arith.constant 0 : index
      %c0_23 = arith.constant 0 : index
      %33 = vector.load %arg5[%c0_22, %c0_23] : memref<64x1xf32, #tpu.memory_space<vmem>>, vector<64x1xf32>
      %34 = arith.mulf %21, %31 : vector<64x1xf32>
      %35 = arith.subf %33, %34 : vector<64x1xf32>
      %c0_24 = arith.constant 0 : index
      %c0_25 = arith.constant 0 : index
      %36 = vector.load %arg10[%c0_24, %c0_25] : memref<64x1xf32, #tpu.memory_space<vmem>>, vector<64x1xf32>
      tpu.vector_store %arg10[%c0_24, %c0_25], %35 {strides = array<i32>} : memref<64x1xf32, #tpu.memory_space<vmem>>, vector<64x1xf32>,
    } else {
    }
    %c1_i32_9 = arith.constant 1 : i32
    %16 = arith.cmpi eq, %arg0, %c1_i32_9 : i32
    %17 = arith.extui %16 : i1 to i32
    %c0_i32_10 = arith.constant 0 : i32
    %18 = arith.cmpi ne, %17, %c0_i32_10 : i32
    scf.if %18 {
      %c0_11 = arith.constant 0 : index
      %c0_12 = arith.constant 0 : index
      %19 = vector.load %arg9[%c0_11, %c0_12] : memref<64x1xf32, #tpu.memory_space<vmem>>, vector<64x1xf32>
      %20 = vector.broadcast %19 : vector<64x1xf32> to vector<64x384xf32>
      %21 = arith.mulf %2, %20 : vector<64x384xf32>
      %c0_13 = arith.constant 0 : index
      %c0_14 = arith.constant 0 : index
      %22 = vector.load %arg10[%c0_13, %c0_14] : memref<64x1xf32, #tpu.memory_space<vmem>>, vector<64x1xf32>
      %23 = vector.broadcast %22 : vector<64x1xf32> to vector<64x384xf32>
      %24 = arith.addf %21, %23 : vector<64x384xf32>
      %cst_15 = arith.constant 0.000000e+00 : f32
      %25 = vector.broadcast %cst_15 : f32 to vector<64x384xf32>
      %26 = arith.maximumf %24, %25 : vector<64x384xf32>
      %c0_16 = arith.constant 0 : index
      %c0_17 = arith.constant 0 : index
      %27 = vector.load %arg6[%c0_16, %c0_17] : memref<64x384xf32, #tpu.memory_space<vmem>>, vector<64x384xf32>
      tpu.vector_store %arg6[%c0_16, %c0_17], %26 {strides = array<i32>} : memref<64x384xf32, #tpu.memory_space<vmem>>, vector<64x384xf32>,
    } else {
    }
    return
  }
  func.func @transform_0(%arg0: i32, %arg1: i32) -> (i32, i32) {
    %c0_i32 = arith.constant 0 : i32
    %c0_i32_0 = arith.constant 0 : i32
    %c0_i32_1 = arith.constant 0 : i32
    return %c0_i32, %c0_i32_0 : i32, i32
  }
  func.func @transform_1(%arg0: i32, %arg1: i32) -> (i32, i32) {
    %c0_i32 = arith.constant 0 : i32
    %c0_i32_0 = arith.constant 0 : i32
    return %c0_i32, %arg1 : i32, i32
  }
  func.func @transform_2(%arg0: i32, %arg1: i32) -> (i32, i32) {
    %c0_i32 = arith.constant 0 : i32
    %c0_i32_0 = arith.constant 0 : i32
    %c0_i32_1 = arith.constant 0 : i32
    return %c0_i32, %c0_i32_0 : i32, i32
  }
  func.func @transform_3(%arg0: i32, %arg1: i32) -> (i32, i32) {
    %c0_i32 = arith.constant 0 : i32
    %c0_i32_0 = arith.constant 0 : i32
    %c0_i32_1 = arith.constant 0 : i32
    return %c0_i32, %c0_i32_0 : i32, i32
  }
  func.func @transform_4(%arg0: i32, %arg1: i32) -> (i32, i32) {
    %0 = arith.muli %arg1, %arg0 : i32
    %c0_i32 = arith.constant 0 : i32
    %c0_i32_0 = arith.constant 0 : i32
    return %c0_i32, %0 : i32, i32
  }
}

module attributes {stable_mosaic.version = 11 : i64} {
  func.func @_maxpool_kernel(%arg0: i32, %arg1: memref<64x9x128xf32, #tpu.memory_space<vmem>>, %arg2: memref<64x128xf32, #tpu.memory_space<vmem>>) attributes {dimension_semantics = [#tpu.dimension_semantics<parallel>], iteration_bounds = array<i64: 1>, scalar_prefetch = 0 : i64, scratch_operands = 0 : i64, tpu.core_type = #tpu.core_type<tc>, window_params = [{transform_indices = @transform_0, window_bounds = array<i64: 64, 9, 128>}, {transform_indices = @transform_1, window_bounds = array<i64: 64, 128>}]} {
    %c0 = arith.constant 0 : index
    %c0_0 = arith.constant 0 : index
    %c0_1 = arith.constant 0 : index
    %0 = vector.load %arg1[%c0, %c0_0, %c0_1] : memref<64x9x128xf32, #tpu.memory_space<vmem>>, vector<64x1x128xf32>
    %1 = vector.shape_cast %0 : vector<64x1x128xf32> to vector<64x128xf32>
    %c0_2 = arith.constant 0 : index
    %c1 = arith.constant 1 : index
    %c0_3 = arith.constant 0 : index
    %2 = vector.load %arg1[%c0_2, %c1, %c0_3] : memref<64x9x128xf32, #tpu.memory_space<vmem>>, vector<64x1x128xf32>
    %3 = vector.shape_cast %2 : vector<64x1x128xf32> to vector<64x128xf32>
    %4 = arith.maximumf %1, %3 : vector<64x128xf32>
    %c0_4 = arith.constant 0 : index
    %c2 = arith.constant 2 : index
    %c0_5 = arith.constant 0 : index
    %5 = vector.load %arg1[%c0_4, %c2, %c0_5] : memref<64x9x128xf32, #tpu.memory_space<vmem>>, vector<64x1x128xf32>
    %6 = vector.shape_cast %5 : vector<64x1x128xf32> to vector<64x128xf32>
    %7 = arith.maximumf %4, %6 : vector<64x128xf32>
    %c0_6 = arith.constant 0 : index
    %c3 = arith.constant 3 : index
    %c0_7 = arith.constant 0 : index
    %8 = vector.load %arg1[%c0_6, %c3, %c0_7] : memref<64x9x128xf32, #tpu.memory_space<vmem>>, vector<64x1x128xf32>
    %9 = vector.shape_cast %8 : vector<64x1x128xf32> to vector<64x128xf32>
    %10 = arith.maximumf %7, %9 : vector<64x128xf32>
    %c0_8 = arith.constant 0 : index
    %c4 = arith.constant 4 : index
    %c0_9 = arith.constant 0 : index
    %11 = vector.load %arg1[%c0_8, %c4, %c0_9] : memref<64x9x128xf32, #tpu.memory_space<vmem>>, vector<64x1x128xf32>
    %12 = vector.shape_cast %11 : vector<64x1x128xf32> to vector<64x128xf32>
    %13 = arith.maximumf %10, %12 : vector<64x128xf32>
    %c0_10 = arith.constant 0 : index
    %c5 = arith.constant 5 : index
    %c0_11 = arith.constant 0 : index
    %14 = vector.load %arg1[%c0_10, %c5, %c0_11] : memref<64x9x128xf32, #tpu.memory_space<vmem>>, vector<64x1x128xf32>
    %15 = vector.shape_cast %14 : vector<64x1x128xf32> to vector<64x128xf32>
    %16 = arith.maximumf %13, %15 : vector<64x128xf32>
    %c0_12 = arith.constant 0 : index
    %c6 = arith.constant 6 : index
    %c0_13 = arith.constant 0 : index
    %17 = vector.load %arg1[%c0_12, %c6, %c0_13] : memref<64x9x128xf32, #tpu.memory_space<vmem>>, vector<64x1x128xf32>
    %18 = vector.shape_cast %17 : vector<64x1x128xf32> to vector<64x128xf32>
    %19 = arith.maximumf %16, %18 : vector<64x128xf32>
    %c0_14 = arith.constant 0 : index
    %c7 = arith.constant 7 : index
    %c0_15 = arith.constant 0 : index
    %20 = vector.load %arg1[%c0_14, %c7, %c0_15] : memref<64x9x128xf32, #tpu.memory_space<vmem>>, vector<64x1x128xf32>
    %21 = vector.shape_cast %20 : vector<64x1x128xf32> to vector<64x128xf32>
    %22 = arith.maximumf %19, %21 : vector<64x128xf32>
    %c0_16 = arith.constant 0 : index
    %c8 = arith.constant 8 : index
    %c0_17 = arith.constant 0 : index
    %23 = vector.load %arg1[%c0_16, %c8, %c0_17] : memref<64x9x128xf32, #tpu.memory_space<vmem>>, vector<64x1x128xf32>
    %24 = vector.shape_cast %23 : vector<64x1x128xf32> to vector<64x128xf32>
    %25 = arith.maximumf %22, %24 : vector<64x128xf32>
    %c0_18 = arith.constant 0 : index
    %c0_19 = arith.constant 0 : index
    %26 = vector.load %arg2[%c0_18, %c0_19] : memref<64x128xf32, #tpu.memory_space<vmem>>, vector<64x128xf32>
    tpu.vector_store %arg2[%c0_18, %c0_19], %25 {strides = array<i32>} : memref<64x128xf32, #tpu.memory_space<vmem>>, vector<64x128xf32>,
    return
  }
  func.func @transform_0(%arg0: i32) -> (i32, i32, i32) {
    %c0_i32 = arith.constant 0 : i32
    %c0_i32_0 = arith.constant 0 : i32
    %c0_i32_1 = arith.constant 0 : i32
    return %c0_i32, %c0_i32_0, %arg0 : i32, i32, i32
  }
  func.func @transform_1(%arg0: i32) -> (i32, i32) {
    %c0_i32 = arith.constant 0 : i32
    %c0_i32_0 = arith.constant 0 : i32
    return %c0_i32, %arg0 : i32, i32
  }
}

</mosaic_0001>

<llo_original>
// kernel: stem_forward.4
$region0: #{stem_forward.4}
  #allocation0 [shape = 'u32[]', space=smem, size = 0x4, offset = 0x4, fixed_abs, tag = 'smem constant byte address 0x4 - core index']
  #allocation1 [shape = 'u32[144,128]{1,0:T(1,128)}', space=vmem, size = 0x12000, scoped, tag = 'internal scratch']
  #allocation2 [shape = 'f32[32,1]{1,0:T(8,128)}', space=vmem, size = 0x4000, scoped, tag = 'scratch operand']
  #allocation3 [shape = 'f32[32,1]{1,0:T(8,128)}', space=vmem, size = 0x4000, scoped, tag = 'scratch operand']
  #allocation4 [shape = 'f32[32,1]{1,0:T(8,128)}', space=vmem, size = 0x4000, scoped, tag = 'scratch operand']
  #allocation5 [shape = 'f32[32,1]{1,0:T(8,128)}', space=vmem, size = 0x4000, scoped, tag = 'scratch operand']
  %s0 = inlined_call_operand.vmem [shape: bf16[32,32], index: 0, kind: input, shape index: {}]
  %s1 = inlined_call_operand.vmem [shape: bf16[32,512], index: 1, kind: input, shape index: {}]
  %s2 = inlined_call_operand.vmem [shape: f32[32,1], index: 2, kind: input, shape index: {}]
  %s3 = inlined_call_operand.vmem [shape: f32[32,1], index: 3, kind: input, shape index: {}]
  %s4 = inlined_call_operand.vmem [shape: f32[32,512], index: 4, kind: output, shape index: {}]
  %s5 = sld [smem:[#allocation0]]
  $region65: #{stem_forward.4} parent=0
    _
  %s7 = ssub.s32 1, %s5
  %s8 = scalar_select 0, %s7, %s5
  loop: start=0, step=1, limit=4
  $region2: #{stem_forward.4} parent=0 // loop_pre_header
    _
  $region3: #{stem_forward.4} parent=0 // loop_header
    %s10 = sphi 0, %s14
    %p11 = scmp.ge.s32.totalorder %s10, 4
    %s17 = sphi 0, %s29
    %s18 = sphi 0, %s25
    %s19 = sphi 0, %s17
    %s20 = sphi 0, %s18
    %s21 = sphi 0, %s19
    %s22 = sphi 0, %s20
    %s30 = sphi 0, %s30
    %s32 = sphi 0, %s30
    %s33 = sphi 0, %s32
    %s47 = sphi 0, %s33
    %s53 = sphi 0, %s55
    %s56 = sphi 0, %s53
    %s57 = sphi 0, %s56
    %s73 = sphi 0, %s57
    %s77 = sphi 0, %s77
    %s79 = sphi 0, %s77
    %s80 = sphi 0, %s79
    %s94 = sphi 0, %s80
    %s98 = sphi 0, %s98
    %s100 = sphi 0, %s98
    %s101 = sphi 0, %s100
    %s115 = sphi 0, %s101
    %s123 = sphi 0, %s125
    %s126 = sphi 0, %s123
    %s127 = sphi 0, %s126
    %s143 = sphi 0, %s127
  $region4: #{stem_forward.4} parent=0 // loop_header_branch
    %13 = sbr.rel (%p11) target = $region8
  $region5: #{stem_forward.4} parent=0 // loop_body
    %s15 = ssub.s32 %s10, 1
    %s16 = ssub.s32 %s10, 2
    %s23 = sadd.s32 1, %s18
    %p24 = scmp.ge.s32.totalorder %s23, 1
    %s25 = scalar_select %p24, 0, %s23
    %s26 = sadd.s32 1, %s17
    %s27 = scalar_select %p24, %s26, %s17
    %p28 = scmp.ge.s32.totalorder %s27, 2
    %s29 = scalar_select %p28, 0, %s27
    %s31 = sadd.s32 %s30, 1
    %p34 = scmp.eq.s32.totalorder %s10, 1
    %p35 = scmp.ne.s32.totalorder %s30, %s32
    %p36 = scmp.eq.s32.totalorder %s10, 0
    %p37 = por %p35, %p36
    %p38 = scmp.ne.s32.totalorder %s30, %s32
    %p39 = scmp.eq.s32.totalorder %s15, 1
    %p40 = por %p38, %p39
    %p41 = scmp.ne.s32.totalorder %s32, %s33
    %p42 = scmp.eq.s32.totalorder %s15, 0
    %p43 = por %p41, %p42
    %p44 = scmp.ne.s32.totalorder %s32, %s33
    %p45 = scmp.eq.s32.totalorder %s16, 1
    %p46 = por %p44, %p45
    %p48 = scmp.ne.s32.totalorder %s33, %s47
    %p49 = scmp.eq.s32.totalorder %s16, 0
    %p50 = por %p48, %p49
    %s51 = ssub.s32 %s18, %s25
    %p52 = scmp.eq.s32.totalorder %s51, 0
    %s54 = sadd.s32 %s53, 1
    %s55 = scalar_select %p52, %s53, %s54
    %p58 = pneg %p52
    %p59 = scmp.eq.s32.totalorder %s10, 1
    %p60 = por %p58, %p59
    %p61 = scmp.ne.s32.totalorder %s53, %s56
    %p62 = scmp.eq.s32.totalorder %s10, 0
    %p63 = por %p61, %p62
    %p64 = scmp.ne.s32.totalorder %s53, %s56
    %p65 = scmp.eq.s32.totalorder %s15, 1
    %p66 = por %p64, %p65
    %p67 = scmp.ne.s32.totalorder %s56, %s57
    %p68 = scmp.eq.s32.totalorder %s15, 0
    %p69 = por %p67, %p68
    %p70 = scmp.ne.s32.totalorder %s56, %s57
    %p71 = scmp.eq.s32.totalorder %s16, 1
    %p72 = por %p70, %p71
    %p74 = scmp.ne.s32.totalorder %s57, %s73
    %p75 = scmp.eq.s32.totalorder %s16, 0
    %p76 = por %p74, %p75
    %s78 = sadd.s32 %s77, 1
    %p81 = scmp.eq.s32.totalorder %s10, 1
    %p82 = scmp.ne.s32.totalorder %s77, %s79
    %p83 = scmp.eq.s32.totalorder %s10, 0
    %p84 = por %p82, %p83
    %p85 = scmp.ne.s32.totalorder %s77, %s79
    %p86 = scmp.eq.s32.totalorder %s15, 1
    %p87 = por %p85, %p86
    %p88 = scmp.ne.s32.totalorder %s79, %s80
    %p89 = scmp.eq.s32.totalorder %s15, 0
    %p90 = por %p88, %p89
    %p91 = scmp.ne.s32.totalorder %s79, %s80
    %p92 = scmp.eq.s32.totalorder %s16, 1
    %p93 = por %p91, %p92
    %p95 = scmp.ne.s32.totalorder %s80, %s94
    %p96 = scmp.eq.s32.totalorder %s16, 0
    %p97 = por %p95, %p96
    %s99 = sadd.s32 %s98, 1
    %p102 = scmp.eq.s32.totalorder %s10, 1
    %p103 = scmp.ne.s32.totalorder %s98, %s100
    %p104 = scmp.eq.s32.totalorder %s10, 0
    %p105 = por %p103, %p104
    %p106 = scmp.ne.s32.totalorder %s98, %s100
    %p107 = scmp.eq.s32.totalorder %s15, 1
    %p108 = por %p106, %p107
    %p109 = scmp.ne.s32.totalorder %s100, %s101
    %p110 = scmp.eq.s32.totalorder %s15, 0
    %p111 = por %p109, %p110
    %p112 = scmp.ne.s32.totalorder %s100, %s101
    %p113 = scmp.eq.s32.totalorder %s16, 1
    %p114 = por %p112, %p113
    %p116 = scmp.ne.s32.totalorder %s101, %s115
    %p117 = scmp.eq.s32.totalorder %s16, 0
    %p118 = por %p116, %p117
    %s119 = smul.u32 %s18, %s17
    %s120 = smul.u32 %s25, %s29
    %s121 = ssub.s32 %s119, %s120
    %p122 = scmp.eq.s32.totalorder %s121, 0
    %s124 = sadd.s32 %s123, 1
    %s125 = scalar_select %p122, %s123, %s124
    %p128 = pneg %p122
    %p129 = scmp.eq.s32.totalorder %s10, 1
    %p130 = por %p128, %p129
    %p131 = scmp.ne.s32.totalorder %s123, %s126
    %p132 = scmp.eq.s32.totalorder %s10, 0
    %p133 = por %p131, %p132
    %p134 = scmp.ne.s32.totalorder %s123, %s126
    %p135 = scmp.eq.s32.totalorder %s15, 1
    %p136 = por %p134, %p135
    %p137 = scmp.ne.s32.totalorder %s126, %s127
    %p138 = scmp.eq.s32.totalorder %s15, 0
    %p139 = por %p137, %p138
    %p140 = scmp.ne.s32.totalorder %s126, %s127
    %p141 = scmp.eq.s32.totalorder %s16, 1
    %p142 = por %p140, %p141
    %p144 = scmp.ne.s32.totalorder %s127, %s143
    %p145 = scmp.eq.s32.totalorder %s16, 0
    %p146 = por %p144, %p145
    %p147 = scmp.le.s32.totalorder 1, %s10
    %p148 = scmp.lt.s32.totalorder %s10, 3
    %p149 = pnand %p147, %p148
    %p150 = pneg %p149
    // Predicated region
    $region9: #{stem_forward.4} parent=5 // pred_check
      _
    $region10: #{stem_forward.4} parent=5 // pred_check_branch
      %152 = sbr.rel (%p149) target = $region12
    $region11: #{stem_forward.4} parent=5 // pred_region
      %s153 = ssub.s32 %s10, 1
      // Predicated region
      $region13: #{stem_forward.4} parent=11 // pred_check
        %p154 = pneg %p43
      $region14: #{stem_forward.4} parent=11 // pred_check_branch
        %156 = sbr.rel (%p154) target = $region16
      $region15: #{stem_forward.4} parent=11 // pred_region
        _
      $region16: #{stem_forward.4} parent=11 // pred_fallthru
        _
      // Predicated region
      $region17: #{stem_forward.4} parent=11 // pred_check
        %p157 = pneg %p69
      $region18: #{stem_forward.4} parent=11 // pred_check_branch
        %159 = sbr.rel (%p157) target = $region20
      $region19: #{stem_forward.4} parent=11 // pred_region
        %s160 = smul.u32 4, %s20
        %p161 = scmp.lt.s32.totalorder %s160, 3
        %s162 = scalar_select %p161, %s160, 3
        %s163 = smul.addr %s162, 4
        %s164 = scalar_lea.vmem %s1, %s163
        %s165 = smul.u32 4, %s20
      $region20: #{stem_forward.4} parent=11 // pred_fallthru
        _
      // Predicated region
      $region21: #{stem_forward.4} parent=11 // pred_check
        %p166 = pneg %p90
      $region22: #{stem_forward.4} parent=11 // pred_check_branch
        %168 = sbr.rel (%p166) target = $region24
      $region23: #{stem_forward.4} parent=11 // pred_region
        _
      $region24: #{stem_forward.4} parent=11 // pred_fallthru
        _
      // Predicated region
      $region25: #{stem_forward.4} parent=11 // pred_check
        %p169 = pneg %p111
      $region26: #{stem_forward.4} parent=11 // pred_check_branch
        %171 = sbr.rel (%p169) target = $region28
      $region27: #{stem_forward.4} parent=11 // pred_region
        _
      $region28: #{stem_forward.4} parent=11 // pred_fallthru
        _
    $region12: #{stem_forward.4} parent=5 // pred_fallthru
      _
    %p172 = scmp.lt.s32.totalorder %s10, 2
    // Predicated region
    $region29: #{stem_forward.4} parent=5 // pred_check
      %p173 = pneg %p172
    $region30: #{stem_forward.4} parent=5 // pred_check_branch
      %175 = sbr.rel (%p173) target = $region32
    $region31: #{stem_forward.4} parent=5 // pred_region
      _
    $region32: #{stem_forward.4} parent=5 // pred_fallthru
      _
    %p176 = scmp.le.s32.totalorder 1, %s10
    %p177 = scmp.lt.s32.totalorder %s10, 3
    %p178 = pnand %p176, %p177
    %p179 = pneg %p178
    // Predicated region
    $region33: #{stem_forward.4} parent=5 // pred_check
      _
    $region34: #{stem_forward.4} parent=5 // pred_check_branch
      %181 = sbr.rel (%p178) target = $region36
    $region35: #{stem_forward.4} parent=5 // pred_region
      %s182 = ssub.s32 %s10, 1
      %p183 = pneg %p43
      %p184 = pneg %p40
      %s185 = smul.u32 4, %s20
      %p186 = scmp.lt.s32.totalorder %s185, 3
      %s187 = scalar_select %p186, %s185, 3
      %s188 = smul.addr %s187, 4
      %s189 = scalar_lea.vmem %s1, %s188
      %p190 = pneg %p69
      %p191 = pneg %p66
      %p192 = pneg %p90
      %p193 = pneg %p87
      %p194 = pneg %p111
      %p195 = pneg %p108
      %p196 = pneg %p139
      %p197 = pneg %p136
      %s198 = smul.u32 %s20, %s19
      %s199 = smul.u32 4, %s198
      %p200 = scmp.lt.s32.totalorder %s199, 3
      %s201 = scalar_select %p200, %s199, 3
      %s202 = smul.addr %s201, 8
      %s203 = scalar_lea.vmem %s4, %s202
      %s204 = smul.u32 4, %s20
      %p205 = scmp.lt.s32.totalorder %s204, 3
      %s206 = scalar_select %p205, %s204, 3
      %s207 = smul.addr %s206, 4
      %s208 = scalar_lea.vmem %s1, %s207
      %s209 = smul.u32 4, %s20
      %s210 = smul.u32 %s20, %s19
      %s211 = smul.u32 4, %s210
      %p212 = scmp.lt.s32.totalorder %s211, 3
      %s213 = scalar_select %p212, %s211, 3
      %s214 = smul.addr %s213, 8
      %s215 = scalar_lea.vmem %s4, %s214
      %s216 = smul.u32 %s20, %s19
      %s217 = smul.u32 4, %s216
      %v219 = vld [vmem:[%s0] sm:$0xf]
      %v220 = vld [vmem:[%s0 + $0x4] sm:$0xf]
      %v221 = vld [vmem:[%s0 + $0x8] sm:$0xf]
      %v222 = vld [vmem:[%s0 + $0xc] sm:$0xf]
      %v223 = vld [vmem:[%s208] sm:$0xff]
      %v224 = vld [vmem:[%s208 + $0x8] sm:$0xff]
      %v225 = vld [vmem:[%s208 + $0x10] sm:$0xff]
      %v226 = vld [vmem:[%s208 + $0x18] sm:$0xff]
      %v227 = vld [vmem:[%s208 + $0x20] sm:$0xff]
      %v228 = vld [vmem:[%s208 + $0x28] sm:$0xff]
      %v229 = vld [vmem:[%s208 + $0x30] sm:$0xff]
      %v230 = vld [vmem:[%s208 + $0x38] sm:$0xff]
      %v235 = vunpack.c.l.b16 %v219
      %v236 = vunpack.c.l.b16 %v220
      %v237 = vunpack.c.l.b16 %v221
      %v238 = vunpack.c.l.b16 %v222
      %v239 = vpack.c.b16 %v236, %v235
      %v240 = vpack.c.b16 %v238, %v237
      %v249 = vunpack.c.l.b16 %v223
      %v250 = vunpack.c.h.b16 %v223
      %v251 = vunpack.c.l.b16 %v224
      %v252 = vunpack.c.h.b16 %v224
      %v253 = vunpack.c.l.b16 %v225
      %v254 = vunpack.c.h.b16 %v225
      %v255 = vunpack.c.l.b16 %v226
      %v256 = vunpack.c.h.b16 %v226
      %v257 = vunpack.c.l.b16 %v227
      %v258 = vunpack.c.h.b16 %v227
      %v259 = vunpack.c.l.b16 %v228
      %v260 = vunpack.c.h.b16 %v228
      %v261 = vunpack.c.l.b16 %v229
      %v262 = vunpack.c.h.b16 %v229
      %v263 = vunpack.c.l.b16 %v230
      %v264 = vunpack.c.h.b16 %v230
      %v265 = vpack.c.b16 %v253, %v249
      %v266 = vpack.c.b16 %v254, %v250
      %v267 = vpack.c.b16 %v255, %v251
      %v268 = vpack.c.b16 %v256, %v252
      %v269 = vpack.c.b16 %v261, %v257
      %v270 = vpack.c.b16 %v262, %v258
      %v271 = vpack.c.b16 %v263, %v259
      %v272 = vpack.c.b16 %v264, %v260
      %vm281 = vcmask 261120
      %v283 = vsel %vm281, %v239, 0
      %v286 = vsel %vm281, %v240, 0
      %288 = vmatprep.subr.bf16.mxu0 0
      %289 = vmatpush1.bf16.msra.mxu0 0
      %290 = vmatprep.subr.bf16.mxu0 0
      %291 = vmatpush1.bf16.msra.mxu0 0
      %292 = vmatprep.subr.bf16.mxu0 0
      %293 = vmatpush1.bf16.msra.mxu0 0
      %294 = vmatprep.subr.bf16.mxu0 0
      %295 = vmatpush1.bf16.msra.mxu0 0
      %296 = vmatprep.subr.bf16.mxu0 0
      %297 = vmatpush1.bf16.msra.mxu0 0
      %298 = vmatprep.subr.bf16.mxu0 0
      %299 = vmatpush1.bf16.msra.mxu0 0
      %300 = vmatprep.subr.bf16.mxu0 %v270
      %301 = vmatpush1.bf16.msra.mxu0 %v269
      %302 = vmatprep.subr.bf16.mxu0 %v266
      %303 = vmatpush1.bf16.msra.mxu0 %v265
      %304 = vmatprep.subr.bf16.mxu0 0
      %305 = vmatpush2.bf16.msra.mxu0 0
      %306 = vmatprep.subr.bf16.mxu0 0
      %307 = vmatpush2.bf16.msra.mxu0 0
      %308 = vmatprep.subr.bf16.mxu0 0
      %309 = vmatpush2.bf16.msra.mxu0 0
      %310 = vmatprep.subr.bf16.mxu0 0
      %311 = vmatpush2.bf16.msra.mxu0 0
      %312 = vmatprep.subr.bf16.mxu0 0
      %313 = vmatpush2.bf16.msra.mxu0 0
      %314 = vmatprep.subr.bf16.mxu0 0
      %315 = vmatpush2.bf16.msra.mxu0 0
      %316 = vmatprep.subr.bf16.mxu0 0
      %317 = vmatpush2.bf16.msra.mxu0 0
      %318 = vmatprep.subr.bf16.mxu0 0
      %319 = vmatpush2.bf16.msra.mxu0 0
      %320 = vmatprep.mubr.bf16.mxu0 0
      %321 = vmatmul.mubr.bf16.gmra.mxu0 %v283
      %v322 = vpop.f32.mrf.mxu0
      %v323 = vadd.f32 0.0, %v322
      %v324 = vpop.f32.mrf.mxu0
      %v325 = vadd.f32 0.0, %v324
      %v326 = vpop.f32.mrf.mxu0
      %v327 = vadd.f32 0.0, %v326
      %v328 = vpop.f32.mrf.mxu0
      %v329 = vadd.f32 0.0, %v328
      %330 = vmatprep.mubr.bf16.mxu0 0
      %331 = vmatmul.mubr.bf16.gmra.mxu0 %v286
      %v332 = vpop.f32.mrf.mxu0
      %v333 = vadd.f32 0.0, %v332
      %v334 = vpop.f32.mrf.mxu0
      %v335 = vadd.f32 0.0, %v334
      %v336 = vpop.f32.mrf.mxu0
      %v337 = vadd.f32 0.0, %v336
      %v338 = vpop.f32.mrf.mxu0
      %v339 = vadd.f32 0.0, %v338
      %340 = vdwg.mxu0
      %341 = vmatprep.subr.bf16.mxu0 0
      %342 = vmatpush1.bf16.msra.mxu0 0
      %343 = vmatprep.subr.bf16.mxu0 0
      %344 = vmatpush1.bf16.msra.mxu0 0
      %345 = vmatprep.subr.bf16.mxu0 0
      %346 = vmatpush1.bf16.msra.mxu0 0
      %347 = vmatprep.subr.bf16.mxu0 0
      %348 = vmatpush1.bf16.msra.mxu0 0
      %349 = vmatprep.subr.bf16.mxu0 0
      %350 = vmatpush1.bf16.msra.mxu0 0
      %351 = vmatprep.subr.bf16.mxu0 0
      %352 = vmatpush1.bf16.msra.mxu0 0
      %353 = vmatprep.subr.bf16.mxu0 %v272
      %354 = vmatpush1.bf16.msra.mxu0 %v271
      %355 = vmatprep.subr.bf16.mxu0 %v268
      %356 = vmatpush1.bf16.msra.mxu0 %v267
      %357 = vmatprep.subr.bf16.mxu0 0
      %358 = vmatpush2.bf16.msra.mxu0 0
      %359 = vmatprep.subr.bf16.mxu0 0
      %360 = vmatpush2.bf16.msra.mxu0 0
      %361 = vmatprep.subr.bf16.mxu0 0
      %362 = vmatpush2.bf16.msra.mxu0 0
      %363 = vmatprep.subr.bf16.mxu0 0
      %364 = vmatpush2.bf16.msra.mxu0 0
      %365 = vmatprep.subr.bf16.mxu0 0
      %366 = vmatpush2.bf16.msra.mxu0 0
      %367 = vmatprep.subr.bf16.mxu0 0
      %368 = vmatpush2.bf16.msra.mxu0 0
      %369 = vmatprep.subr.bf16.mxu0 0
      %370 = vmatpush2.bf16.msra.mxu0 0
      %371 = vmatprep.subr.bf16.mxu0 0
      %372 = vmatpush2.bf16.msra.mxu0 0
      %373 = vmatprep.mubr.bf16.mxu0 0
      %374 = vmatmul.mubr.bf16.gmra.mxu0 %v283
      %v375 = vpop.f32.mrf.mxu0
      %v376 = vadd.f32 0.0, %v375
      %v377 = vpop.f32.mrf.mxu0
      %v378 = vadd.f32 0.0, %v377
      %v379 = vpop.f32.mrf.mxu0
      %v380 = vadd.f32 0.0, %v379
      %v381 = vpop.f32.mrf.mxu0
      %v382 = vadd.f32 0.0, %v381
      %383 = vmatprep.mubr.bf16.mxu0 0
      %384 = vmatmul.mubr.bf16.gmra.mxu0 %v286
      %v385 = vpop.f32.mrf.mxu0
      %v386 = vadd.f32 0.0, %v385
      %v387 = vpop.f32.mrf.mxu0
      %v388 = vadd.f32 0.0, %v387
      %v389 = vpop.f32.mrf.mxu0
      %v390 = vadd.f32 0.0, %v389
      %v391 = vpop.f32.mrf.mxu0
      %v392 = vadd.f32 0.0, %v391
      %393 = vdwg.mxu0
      %p394 = scmp.eq.s32.totalorder %s19, 0
      %p395 = scmp.eq.s32.totalorder %s20, 0
      %p396 = pnand %p394, %p395
      %p397 = pneg %p396
      // Predicated region
      $region37: #{stem_forward.4} parent=35 // pred_check
        _
      $region38: #{stem_forward.4} parent=35 // pred_check_branch
        %399 = sbr.rel (%p396) target = $region40
      $region39: #{stem_forward.4} parent=35 // pred_region
        %vm400 = vcmask 7168
        %401 = vst.msk [vmem:[#allocation2] sm:$0xff] %vm400, 0.0
        %402 = vst.msk [vmem:[#allocation2 + $0x8] sm:$0xff] %vm400, 0.0
        %403 = vst.msk [vmem:[#allocation2 + $0x10] sm:$0xff] %vm400, 0.0
        %404 = vst.msk [vmem:[#allocation2 + $0x18] sm:$0xff] %vm400, 0.0
        %405 = vst.msk [vmem:[#allocation3] sm:$0xff] %vm400, 0.0
        %406 = vst.msk [vmem:[#allocation3 + $0x8] sm:$0xff] %vm400, 0.0
        %407 = vst.msk [vmem:[#allocation3 + $0x10] sm:$0xff] %vm400, 0.0
        %408 = vst.msk [vmem:[#allocation3 + $0x18] sm:$0xff] %vm400, 0.0
      $region40: #{stem_forward.4} parent=35 // pred_fallthru
        _
      // Predicated region
      $region41: #{stem_forward.4} parent=35 // pred_check
        %p409 = pneg %p394
      $region42: #{stem_forward.4} parent=35 // pred_check_branch
        %411 = sbr.rel (%p409) target = $region44
      $region43: #{stem_forward.4} parent=35 // pred_region
        %v412 = vld [vmem:[#allocation2] sm:$0xff]
        %v413 = vld [vmem:[#allocation2 + $0x8] sm:$0xff]
        %v414 = vld [vmem:[#allocation2 + $0x10] sm:$0xff]
        %v415 = vld [vmem:[#allocation2 + $0x18] sm:$0xff]
        %v416 = vadd.f32 %v323, %v325
        %v417 = vadd.f32 %v416, %v376
        %v418 = vadd.f32 %v417, %v378
        %419 = vadd.xlane.f32.xlu0 %v418
        %v420 = vpop.xlane.xlu0 %419
        %v421 = vadd.f32 %v327, %v329
        %v422 = vadd.f32 %v421, %v380
        %v423 = vadd.f32 %v422, %v382
        %424 = vadd.xlane.f32.xlu0 %v423
        %v425 = vpop.xlane.xlu0 %424
        %v426 = vadd.f32 %v333, %v335
        %v427 = vadd.f32 %v426, %v386
        %v428 = vadd.f32 %v427, %v388
        %429 = vadd.xlane.f32.xlu0 %v428
        %v430 = vpop.xlane.xlu0 %429
        %v431 = vadd.f32 %v337, %v339
        %v432 = vadd.f32 %v431, %v390
        %v433 = vadd.f32 %v432, %v392
        %434 = vadd.xlane.f32.xlu0 %v433
        %v435 = vpop.xlane.xlu0 %434
        %v436 = vadd.f32 %v412, %v420
        %v437 = vadd.f32 %v413, %v425
        %v438 = vadd.f32 %v414, %v430
        %v439 = vadd.f32 %v415, %v435
        %vm440 = vcmask 7168
        %441 = vst.msk [vmem:[#allocation2] sm:$0xff] %vm440, %v436
        %442 = vst.msk [vmem:[#allocation2 + $0x8] sm:$0xff] %vm440, %v437
        %443 = vst.msk [vmem:[#allocation2 + $0x10] sm:$0xff] %vm440, %v438
        %444 = vst.msk [vmem:[#allocation2 + $0x18] sm:$0xff] %vm440, %v439
        %v445 = vld [vmem:[#allocation3] sm:$0xff]
        %v446 = vld [vmem:[#allocation3 + $0x8] sm:$0xff]
        %v447 = vld [vmem:[#allocation3 + $0x10] sm:$0xff]
        %v448 = vld [vmem:[#allocation3 + $0x18] sm:$0xff]
        %v449 = vmul.f32 %v323, %v323
        %v450 = vmul.f32 %v325, %v325
        %v451 = vmul.f32 %v376, %v376
        %v452 = vmul.f32 %v378, %v378
        %v453 = vmul.f32 %v327, %v327
        %v454 = vmul.f32 %v329, %v329
        %v455 = vmul.f32 %v380, %v380
        %v456 = vmul.f32 %v382, %v382
        %v457 = vmul.f32 %v333, %v333
        %v458 = vmul.f32 %v335, %v335
        %v459 = vmul.f32 %v386, %v386
        %v460 = vmul.f32 %v388, %v388
        %v461 = vmul.f32 %v337, %v337
        %v462 = vmul.f32 %v339, %v339
        %v463 = vmul.f32 %v390, %v390
        %v464 = vmul.f32 %v392, %v392
        %v465 = vadd.f32 %v449, %v450
        %v466 = vadd.f32 %v465, %v451
        %v467 = vadd.f32 %v466, %v452
        %468 = vadd.xlane.f32.xlu0 %v467
        %v469 = vpop.xlane.xlu0 %468
        %v470 = vadd.f32 %v453, %v454
        %v471 = vadd.f32 %v470, %v455
        %v472 = vadd.f32 %v471, %v456
        %473 = vadd.xlane.f32.xlu0 %v472
        %v474 = vpop.xlane.xlu0 %473
        %v475 = vadd.f32 %v457, %v458
        %v476 = vadd.f32 %v475, %v459
        %v477 = vadd.f32 %v476, %v460
        %478 = vadd.xlane.f32.xlu0 %v477
        %v479 = vpop.xlane.xlu0 %478
        %v480 = vadd.f32 %v461, %v462
        %v481 = vadd.f32 %v480, %v463
        %v482 = vadd.f32 %v481, %v464
        %483 = vadd.xlane.f32.xlu0 %v482
        %v484 = vpop.xlane.xlu0 %483
        %v485 = vadd.f32 %v445, %v469
        %v486 = vadd.f32 %v446, %v474
        %v487 = vadd.f32 %v447, %v479
        %v488 = vadd.f32 %v448, %v484
        %489 = vst.msk [vmem:[#allocation3] sm:$0xff] %vm440, %v485
        %490 = vst.msk [vmem:[#allocation3 + $0x8] sm:$0xff] %vm440, %v486
        %491 = vst.msk [vmem:[#allocation3 + $0x10] sm:$0xff] %vm440, %v487
        %492 = vst.msk [vmem:[#allocation3 + $0x18] sm:$0xff] %vm440, %v488
      $region44: #{stem_forward.4} parent=35 // pred_fallthru
        _
      %p493 = scmp.eq.s32.totalorder %s19, 1
      %p494 = pnand %p493, %p395
      %p495 = pneg %p494
      // Predicated region
      $region45: #{stem_forward.4} parent=35 // pred_check
        _
      $region46: #{stem_forward.4} parent=35 // pred_check_branch
        %497 = sbr.rel (%p494) target = $region48
      $region47: #{stem_forward.4} parent=35 // pred_region
        %v498 = vld [vmem:[#allocation2] sm:$0xff]
        %v499 = vld [vmem:[#allocation2 + $0x8] sm:$0xff]
        %v500 = vld [vmem:[#allocation2 + $0x10] sm:$0xff]
        %v501 = vld [vmem:[#allocation2 + $0x18] sm:$0xff]
        %v502 = vmul.f32 %v498, 0.0022222223
        %v503 = vmul.f32 %v499, 0.0022222223
        %v504 = vmul.f32 %v500, 0.0022222223
        %v505 = vmul.f32 %v501, 0.0022222223
        %v506 = vld [vmem:[#allocation3] sm:$0xff]
        %v507 = vld [vmem:[#allocation3 + $0x8] sm:$0xff]
        %v508 = vld [vmem:[#allocation3 + $0x10] sm:$0xff]
        %v509 = vld [vmem:[#allocation3 + $0x18] sm:$0xff]
        %v510 = vmul.f32 %v506, 0.0022222223
        %v511 = vmul.f32 %v507, 0.0022222223
        %v512 = vmul.f32 %v508, 0.0022222223
        %v513 = vmul.f32 %v509, 0.0022222223
        %v514 = vmul.f32 %v502, %v502
        %v515 = vmul.f32 %v503, %v503
        %v516 = vmul.f32 %v504, %v504
        %v517 = vmul.f32 %v505, %v505
        %v518 = vsub.f32 %v510, %v514
        %v519 = vsub.f32 %v511, %v515
        %v520 = vsub.f32 %v512, %v516
        %v521 = vsub.f32 %v513, %v517
        %v522 = vld [vmem:[%s2] sm:$0xff]
        %v523 = vld [vmem:[%s2 + $0x8] sm:$0xff]
        %v524 = vld [vmem:[%s2 + $0x10] sm:$0xff]
        %v525 = vld [vmem:[%s2 + $0x18] sm:$0xff]
        %v526 = vadd.f32 %v518, 1e-05
        %v527 = vadd.f32 %v519, 1e-05
        %v528 = vadd.f32 %v520, 1e-05
        %v529 = vadd.f32 %v521, 1e-05
        %v530 = vrsqrt.pop %v526
        %v531 = vrsqrt.pop %v527
        %v532 = vrsqrt.pop %v528
        %v533 = vrsqrt.pop %v529
        %v534 = vmul.f32 %v522, %v530
        %v535 = vmul.f32 %v523, %v531
        %v536 = vmul.f32 %v524, %v532
        %v537 = vmul.f32 %v525, %v533
        %vm538 = vcmask 7168
        %539 = vst.msk [vmem:[#allocation4] sm:$0xff] %vm538, %v534
        %540 = vst.msk [vmem:[#allocation4 + $0x8] sm:$0xff] %vm538, %v535
        %541 = vst.msk [vmem:[#allocation4 + $0x10] sm:$0xff] %vm538, %v536
        %542 = vst.msk [vmem:[#allocation4 + $0x18] sm:$0xff] %vm538, %v537
        %v543 = vld [vmem:[%s3] sm:$0xff]
        %v544 = vld [vmem:[%s3 + $0x8] sm:$0xff]
        %v545 = vld [vmem:[%s3 + $0x10] sm:$0xff]
        %v546 = vld [vmem:[%s3 + $0x18] sm:$0xff]
        %v547 = vmul.f32 %v502, %v534
        %v548 = vmul.f32 %v503, %v535
        %v549 = vmul.f32 %v504, %v536
        %v550 = vmul.f32 %v505, %v537
        %v551 = vsub.f32 %v543, %v547
        %v552 = vsub.f32 %v544, %v548
        %v553 = vsub.f32 %v545, %v549
        %v554 = vsub.f32 %v546, %v550
        %555 = vst.msk [vmem:[#allocation5] sm:$0xff] %vm538, %v551
        %556 = vst.msk [vmem:[#allocation5 + $0x8] sm:$0xff] %vm538, %v552
        %557 = vst.msk [vmem:[#allocation5 + $0x10] sm:$0xff] %vm538, %v553
        %558 = vst.msk [vmem:[#allocation5 + $0x18] sm:$0xff] %vm538, %v554
      $region48: #{stem_forward.4} parent=35 // pred_fallthru
        _
      // Predicated region
      $region49: #{stem_forward.4} parent=35 // pred_check
        %p559 = pneg %p493
      $region50: #{stem_forward.4} parent=35 // pred_check_branch
        %561 = sbr.rel (%p559) target = $region52
      $region51: #{stem_forward.4} parent=35 // pred_region
        %v562 = vld [vmem:[#allocation4] sm:$0xff]
        %v563 = vld [vmem:[#allocation4 + $0x8] sm:$0xff]
        %v564 = vld [vmem:[#allocation4 + $0x10] sm:$0xff]
        %v565 = vld [vmem:[#allocation4 + $0x18] sm:$0xff]
        %567 = vset.pattern.permute.xlu0 0
        %568 = vperm.xlu0 %567, %v562
        %v569 = vpop.permute.xlu0 %568
        %572 = vset.pattern.permute.xlu0 0
        %573 = vperm.xlu0 %572, %v563
        %v574 = vpop.permute.xlu0 %573
        %577 = vset.pattern.permute.xlu0 0
        %578 = vperm.xlu0 %577, %v564
        %v579 = vpop.permute.xlu0 %578
        %582 = vset.pattern.permute.xlu0 0
        %583 = vperm.xlu0 %582, %v565
        %v584 = vpop.permute.xlu0 %583
        %v586 = vmul.f32 %v323, %v569
        %v587 = vmul.f32 %v325, %v569
        %v588 = vmul.f32 %v376, %v569
        %v589 = vmul.f32 %v378, %v569
        %v590 = vmul.f32 %v327, %v574
        %v591 = vmul.f32 %v329, %v574
        %v592 = vmul.f32 %v380, %v574
        %v593 = vmul.f32 %v382, %v574
        %v594 = vmul.f32 %v333, %v579
        %v595 = vmul.f32 %v335, %v579
        %v596 = vmul.f32 %v386, %v579
        %v597 = vmul.f32 %v388, %v579
        %v598 = vmul.f32 %v337, %v584
        %v599 = vmul.f32 %v339, %v584
        %v600 = vmul.f32 %v390, %v584
        %v601 = vmul.f32 %v392, %v584
        %v602 = vld [vmem:[#allocation5] sm:$0xff]
        %v603 = vld [vmem:[#allocation5 + $0x8] sm:$0xff]
        %v604 = vld [vmem:[#allocation5 + $0x10] sm:$0xff]
        %v605 = vld [vmem:[#allocation5 + $0x18] sm:$0xff]
        %607 = vset.pattern.permute.xlu0 0
        %608 = vperm.xlu0 %607, %v602
        %v609 = vpop.permute.xlu0 %608
        %612 = vset.pattern.permute.xlu0 0
        %613 = vperm.xlu0 %612, %v603
        %v614 = vpop.permute.xlu0 %613
        %617 = vset.pattern.permute.xlu0 0
        %618 = vperm.xlu0 %617, %v604
        %v619 = vpop.permute.xlu0 %618
        %622 = vset.pattern.permute.xlu0 0
        %623 = vperm.xlu0 %622, %v605
        %v624 = vpop.permute.xlu0 %623
        %v626 = vadd.f32 %v586, %v609
        %v627 = vadd.f32 %v587, %v609
        %v628 = vadd.f32 %v588, %v609
        %v629 = vadd.f32 %v589, %v609
        %v630 = vadd.f32 %v590, %v614
        %v631 = vadd.f32 %v591, %v614
        %v632 = vadd.f32 %v592, %v614
        %v633 = vadd.f32 %v593, %v614
        %v634 = vadd.f32 %v594, %v619
        %v635 = vadd.f32 %v595, %v619
        %v636 = vadd.f32 %v596, %v619
        %v637 = vadd.f32 %v597, %v619
        %v638 = vadd.f32 %v598, %v624
        %v639 = vadd.f32 %v599, %v624
        %v640 = vadd.f32 %v600, %v624
        %v641 = vadd.f32 %v601, %v624
        %v642 = vmax.f32 %v626, 0.0
        %v643 = vmax.f32 %v627, 0.0
        %v644 = vmax.f32 %v628, 0.0
        %v645 = vmax.f32 %v629, 0.0
        %v646 = vmax.f32 %v630, 0.0
        %v647 = vmax.f32 %v631, 0.0
        %v648 = vmax.f32 %v632, 0.0
        %v649 = vmax.f32 %v633, 0.0
        %v650 = vmax.f32 %v634, 0.0
        %v651 = vmax.f32 %v635, 0.0
        %v652 = vmax.f32 %v636, 0.0
        %v653 = vmax.f32 %v637, 0.0
        %v654 = vmax.f32 %v638, 0.0
        %v655 = vmax.f32 %v639, 0.0
        %v656 = vmax.f32 %v640, 0.0
        %v657 = vmax.f32 %v641, 0.0
        %658 = vst [vmem:[%s215] sm:$0xff] %v642
        %659 = vst [vmem:[%s215 + $0x8] sm:$0xff] %v643
        %660 = vst [vmem:[%s215 + $0x10] sm:$0xff] %v644
        %661 = vst [vmem:[%s215 + $0x18] sm:$0xff] %v645
        %662 = vst [vmem:[%s215 + $0x20] sm:$0xff] %v646
        %663 = vst [vmem:[%s215 + $0x28] sm:$0xff] %v647
        %664 = vst [vmem:[%s215 + $0x30] sm:$0xff] %v648
        %665 = vst [vmem:[%s215 + $0x38] sm:$0xff] %v649
        %666 = vst [vmem:[%s215 + $0x40] sm:$0xff] %v650
        %667 = vst [vmem:[%s215 + $0x48] sm:$0xff] %v651
        %668 = vst [vmem:[%s215 + $0x50] sm:$0xff] %v652
        %669 = vst [vmem:[%s215 + $0x58] sm:$0xff] %v653
        %670 = vst [vmem:[%s215 + $0x60] sm:$0xff] %v654
        %671 = vst [vmem:[%s215 + $0x68] sm:$0xff] %v655
        %672 = vst [vmem:[%s215 + $0x70] sm:$0xff] %v656
        %673 = vst [vmem:[%s215 + $0x78] sm:$0xff] %v657
      $region52: #{stem_forward.4} parent=35 // pred_fallthru
        _
      %s674 = smul.u32 %s20, %s19
      %s675 = smul.u32 4, %s674
      %p676 = scmp.lt.s32.totalorder %s675, 3
      %s677 = scalar_select %p676, %s675, 3
      %s678 = smul.addr %s677, 8
      %s679 = scalar_lea.vmem %s4, %s678
      // Predicated region
      $region53: #{stem_forward.4} parent=35 // pred_check
        %p680 = pneg %p136
      $region54: #{stem_forward.4} parent=35 // pred_check_branch
        %682 = sbr.rel (%p680) target = $region56
      $region55: #{stem_forward.4} parent=35 // pred_region
        %s683 = smul.u32 %s20, %s19
        %s684 = smul.u32 4, %s683
      $region56: #{stem_forward.4} parent=35 // pred_fallthru
        _
    $region36: #{stem_forward.4} parent=5 // pred_fallthru
      _
    %p685 = scmp.le.s32.totalorder 2, %s10
    // Predicated region
    $region57: #{stem_forward.4} parent=5 // pred_check
      %p686 = pneg %p685
    $region58: #{stem_forward.4} parent=5 // pred_check_branch
      %688 = sbr.rel (%p686) target = $region60
    $region59: #{stem_forward.4} parent=5 // pred_region
      %s689 = ssub.s32 %s10, 2
      // Predicated region
      $region61: #{stem_forward.4} parent=59 // pred_check
        %p690 = pneg %p142
      $region62: #{stem_forward.4} parent=59 // pred_check_branch
        %692 = sbr.rel (%p690) target = $region64
      $region63: #{stem_forward.4} parent=59 // pred_region
        %s693 = smul.u32 %s22, %s21
        %s694 = smul.u32 4, %s693
        %p695 = scmp.lt.s32.totalorder %s694, 3
        %s696 = scalar_select %p695, %s694, 3
        %s697 = smul.addr %s696, 8
        %s698 = scalar_lea.vmem %s4, %s697
      $region64: #{stem_forward.4} parent=59 // pred_fallthru
        _
    $region60: #{stem_forward.4} parent=5 // pred_fallthru
      _
  $region6: #{stem_forward.4} parent=0 // loop_footer
    %s14 = sadd.s32 1, %s10
  $region7: #{stem_forward.4} parent=0 // loop_footer_branch
    %9 = sbr.rel target = $region3
  $region8: #{stem_forward.4} parent=0 // loop_exit
    _

// kernel: stem_forward.5
$region0: #{stem_forward.5}
  #allocation0 [shape = 'u32[]', space=smem, size = 0x4, offset = 0x4, fixed_abs, tag = 'smem constant byte address 0x4 - core index']
  #allocation1 [shape = 'u32[144,128]{1,0:T(1,128)}', space=vmem, size = 0x12000, scoped, tag = 'internal scratch']
  #allocation2 [shape = 'f32[32,1]{1,0:T(8,128)}', space=vmem, size = 0x4000, scoped, tag = 'scratch operand']
  #allocation3 [shape = 'f32[32,1]{1,0:T(8,128)}', space=vmem, size = 0x4000, scoped, tag = 'scratch operand']
  #allocation4 [shape = 'f32[32,1]{1,0:T(8,128)}', space=vmem, size = 0x4000, scoped, tag = 'scratch operand']
  #allocation5 [shape = 'f32[32,1]{1,0:T(8,128)}', space=vmem, size = 0x4000, scoped, tag = 'scratch operand']
  %s0 = inlined_call_operand.vmem [shape: bf16[32,288], index: 0, kind: input, shape index: {}]
  %s1 = inlined_call_operand.vmem [shape: bf16[288,384], index: 1, kind: input, shape index: {}]
  %s2 = inlined_call_operand.vmem [shape: f32[32,1], index: 2, kind: input, shape index: {}]
  %s3 = inlined_call_operand.vmem [shape: f32[32,1], index: 3, kind: input, shape index: {}]
  %s4 = inlined_call_operand.vmem [shape: f32[32,384], index: 4, kind: output, shape index: {}]
  %s5 = sld [smem:[#allocation0]]
  $region65: #{stem_forward.5} parent=0
    _
  %s7 = ssub.s32 1, %s5
  %s8 = scalar_select 0, %s7, %s5
  loop: start=0, step=1, limit=4
  $region2: #{stem_forward.5} parent=0 // loop_pre_header
    _
  $region3: #{stem_forward.5} parent=0 // loop_header
    %s10 = sphi 0, %s14
    %p11 = scmp.ge.s32.totalorder %s10, 4
    %s17 = sphi 0, %s29
    %s18 = sphi 0, %s25
    %s19 = sphi 0, %s17
    %s20 = sphi 0, %s18
    %s21 = sphi 0, %s19
    %s22 = sphi 0, %s20
    %s30 = sphi 0, %s30
    %s32 = sphi 0, %s30
    %s33 = sphi 0, %s32
    %s47 = sphi 0, %s33
    %s53 = sphi 0, %s55
    %s56 = sphi 0, %s53
    %s57 = sphi 0, %s56
    %s73 = sphi 0, %s57
    %s77 = sphi 0, %s77
    %s79 = sphi 0, %s77
    %s80 = sphi 0, %s79
    %s94 = sphi 0, %s80
    %s98 = sphi 0, %s98
    %s100 = sphi 0, %s98
    %s101 = sphi 0, %s100
    %s115 = sphi 0, %s101
    %s123 = sphi 0, %s125
    %s126 = sphi 0, %s123
    %s127 = sphi 0, %s126
    %s143 = sphi 0, %s127
  $region4: #{stem_forward.5} parent=0 // loop_header_branch
    %13 = sbr.rel (%p11) target = $region8
  $region5: #{stem_forward.5} parent=0 // loop_body
    %s15 = ssub.s32 %s10, 1
    %s16 = ssub.s32 %s10, 2
    %s23 = sadd.s32 1, %s18
    %p24 = scmp.ge.s32.totalorder %s23, 1
    %s25 = scalar_select %p24, 0, %s23
    %s26 = sadd.s32 1, %s17
    %s27 = scalar_select %p24, %s26, %s17
    %p28 = scmp.ge.s32.totalorder %s27, 2
    %s29 = scalar_select %p28, 0, %s27
    %s31 = sadd.s32 %s30, 1
    %p34 = scmp.eq.s32.totalorder %s10, 1
    %p35 = scmp.ne.s32.totalorder %s30, %s32
    %p36 = scmp.eq.s32.totalorder %s10, 0
    %p37 = por %p35, %p36
    %p38 = scmp.ne.s32.totalorder %s30, %s32
    %p39 = scmp.eq.s32.totalorder %s15, 1
    %p40 = por %p38, %p39
    %p41 = scmp.ne.s32.totalorder %s32, %s33
    %p42 = scmp.eq.s32.totalorder %s15, 0
    %p43 = por %p41, %p42
    %p44 = scmp.ne.s32.totalorder %s32, %s33
    %p45 = scmp.eq.s32.totalorder %s16, 1
    %p46 = por %p44, %p45
    %p48 = scmp.ne.s32.totalorder %s33, %s47
    %p49 = scmp.eq.s32.totalorder %s16, 0
    %p50 = por %p48, %p49
    %s51 = ssub.s32 %s18, %s25
    %p52 = scmp.eq.s32.totalorder %s51, 0
    %s54 = sadd.s32 %s53, 1
    %s55 = scalar_select %p52, %s53, %s54
    %p58 = pneg %p52
    %p59 = scmp.eq.s32.totalorder %s10, 1
    %p60 = por %p58, %p59
    %p61 = scmp.ne.s32.totalorder %s53, %s56
    %p62 = scmp.eq.s32.totalorder %s10, 0
    %p63 = por %p61, %p62
    %p64 = scmp.ne.s32.totalorder %s53, %s56
    %p65 = scmp.eq.s32.totalorder %s15, 1
    %p66 = por %p64, %p65
    %p67 = scmp.ne.s32.totalorder %s56, %s57
    %p68 = scmp.eq.s32.totalorder %s15, 0
    %p69 = por %p67, %p68
    %p70 = scmp.ne.s32.totalorder %s56, %s57
    %p71 = scmp.eq.s32.totalorder %s16, 1
    %p72 = por %p70, %p71
    %p74 = scmp.ne.s32.totalorder %s57, %s73
    %p75 = scmp.eq.s32.totalorder %s16, 0
    %p76 = por %p74, %p75
    %s78 = sadd.s32 %s77, 1
    %p81 = scmp.eq.s32.totalorder %s10, 1
    %p82 = scmp.ne.s32.totalorder %s77, %s79
    %p83 = scmp.eq.s32.totalorder %s10, 0
    %p84 = por %p82, %p83
    %p85 = scmp.ne.s32.totalorder %s77, %s79
    %p86 = scmp.eq.s32.totalorder %s15, 1
    %p87 = por %p85, %p86
    %p88 = scmp.ne.s32.totalorder %s79, %s80
    %p89 = scmp.eq.s32.totalorder %s15, 0
    %p90 = por %p88, %p89
    %p91 = scmp.ne.s32.totalorder %s79, %s80
    %p92 = scmp.eq.s32.totalorder %s16, 1
    %p93 = por %p91, %p92
    %p95 = scmp.ne.s32.totalorder %s80, %s94
    %p96 = scmp.eq.s32.totalorder %s16, 0
    %p97 = por %p95, %p96
    %s99 = sadd.s32 %s98, 1
    %p102 = scmp.eq.s32.totalorder %s10, 1
    %p103 = scmp.ne.s32.totalorder %s98, %s100
    %p104 = scmp.eq.s32.totalorder %s10, 0
    %p105 = por %p103, %p104
    %p106 = scmp.ne.s32.totalorder %s98, %s100
    %p107 = scmp.eq.s32.totalorder %s15, 1
    %p108 = por %p106, %p107
    %p109 = scmp.ne.s32.totalorder %s100, %s101
    %p110 = scmp.eq.s32.totalorder %s15, 0
    %p111 = por %p109, %p110
    %p112 = scmp.ne.s32.totalorder %s100, %s101
    %p113 = scmp.eq.s32.totalorder %s16, 1
    %p114 = por %p112, %p113
    %p116 = scmp.ne.s32.totalorder %s101, %s115
    %p117 = scmp.eq.s32.totalorder %s16, 0
    %p118 = por %p116, %p117
    %s119 = smul.u32 %s18, %s17
    %s120 = smul.u32 %s25, %s29
    %s121 = ssub.s32 %s119, %s120
    %p122 = scmp.eq.s32.totalorder %s121, 0
    %s124 = sadd.s32 %s123, 1
    %s125 = scalar_select %p122, %s123, %s124
    %p128 = pneg %p122
    %p129 = scmp.eq.s32.totalorder %s10, 1
    %p130 = por %p128, %p129
    %p131 = scmp.ne.s32.totalorder %s123, %s126
    %p132 = scmp.eq.s32.totalorder %s10, 0
    %p133 = por %p131, %p132
    %p134 = scmp.ne.s32.totalorder %s123, %s126
    %p135 = scmp.eq.s32.totalorder %s15, 1
    %p136 = por %p134, %p135
    %p137 = scmp.ne.s32.totalorder %s126, %s127
    %p138 = scmp.eq.s32.totalorder %s15, 0
    %p139 = por %p137, %p138
    %p140 = scmp.ne.s32.totalorder %s126, %s127
    %p141 = scmp.eq.s32.totalorder %s16, 1
    %p142 = por %p140, %p141
    %p144 = scmp.ne.s32.totalorder %s127, %s143
    %p145 = scmp.eq.s32.totalorder %s16, 0
    %p146 = por %p144, %p145
    %p147 = scmp.le.s32.totalorder 1, %s10
    %p148 = scmp.lt.s32.totalorder %s10, 3
    %p149 = pnand %p147, %p148
    %p150 = pneg %p149
    // Predicated region
    $region9: #{stem_forward.5} parent=5 // pred_check
      _
    $region10: #{stem_forward.5} parent=5 // pred_check_branch
      %152 = sbr.rel (%p149) target = $region12
    $region11: #{stem_forward.5} parent=5 // pred_region
      %s153 = ssub.s32 %s10, 1
      // Predicated region
      $region13: #{stem_forward.5} parent=11 // pred_check
        %p154 = pneg %p43
      $region14: #{stem_forward.5} parent=11 // pred_check_branch
        %156 = sbr.rel (%p154) target = $region16
      $region15: #{stem_forward.5} parent=11 // pred_region
        _
      $region16: #{stem_forward.5} parent=11 // pred_fallthru
        _
      // Predicated region
      $region17: #{stem_forward.5} parent=11 // pred_check
        %p157 = pneg %p69
      $region18: #{stem_forward.5} parent=11 // pred_check_branch
        %159 = sbr.rel (%p157) target = $region20
      $region19: #{stem_forward.5} parent=11 // pred_region
        %s160 = smul.u32 3, %s20
        %p161 = scmp.lt.s32.totalorder %s160, 2
        %s162 = scalar_select %p161, %s160, 2
        %s163 = smul.addr %s162, 4
        %s164 = scalar_lea.vmem %s1, %s163
        %s165 = smul.u32 3, %s20
      $region20: #{stem_forward.5} parent=11 // pred_fallthru
        _
      // Predicated region
      $region21: #{stem_forward.5} parent=11 // pred_check
        %p166 = pneg %p90
      $region22: #{stem_forward.5} parent=11 // pred_check_branch
        %168 = sbr.rel (%p166) target = $region24
      $region23: #{stem_forward.5} parent=11 // pred_region
        _
      $region24: #{stem_forward.5} parent=11 // pred_fallthru
        _
      // Predicated region
      $region25: #{stem_forward.5} parent=11 // pred_check
        %p169 = pneg %p111
      $region26: #{stem_forward.5} parent=11 // pred_check_branch
        %171 = sbr.rel (%p169) target = $region28
      $region27: #{stem_forward.5} parent=11 // pred_region
        _
      $region28: #{stem_forward.5} parent=11 // pred_fallthru
        _
    $region12: #{stem_forward.5} parent=5 // pred_fallthru
      _
    %p172 = scmp.lt.s32.totalorder %s10, 2
    // Predicated region
    $region29: #{stem_forward.5} parent=5 // pred_check
      %p173 = pneg %p172
    $region30: #{stem_forward.5} parent=5 // pred_check_branch
      %175 = sbr.rel (%p173) target = $region32
    $region31: #{stem_forward.5} parent=5 // pred_region
      _
    $region32: #{stem_forward.5} parent=5 // pred_fallthru
      _
    %p176 = scmp.le.s32.totalorder 1, %s10
    %p177 = scmp.lt.s32.totalorder %s10, 3
    %p178 = pnand %p176, %p177
    %p179 = pneg %p178
    // Predicated region
    $region33: #{stem_forward.5} parent=5 // pred_check
      _
    $region34: #{stem_forward.5} parent=5 // pred_check_branch
      %181 = sbr.rel (%p178) target = $region36
    $region35: #{stem_forward.5} parent=5 // pred_region
      %s182 = ssub.s32 %s10, 1
      %p183 = pneg %p43
      %p184 = pneg %p40
      %s185 = smul.u32 3, %s20
      %p186 = scmp.lt.s32.totalorder %s185, 2
      %s187 = scalar_select %p186, %s185, 2
      %s188 = smul.addr %s187, 4
      %s189 = scalar_lea.vmem %s1, %s188
      %p190 = pneg %p69
      %p191 = pneg %p66
      %p192 = pneg %p90
      %p193 = pneg %p87
      %p194 = pneg %p111
      %p195 = pneg %p108
      %p196 = pneg %p139
      %p197 = pneg %p136
      %s198 = smul.u32 %s20, %s19
      %s199 = smul.u32 3, %s198
      %p200 = scmp.lt.s32.totalorder %s199, 2
      %s201 = scalar_select %p200, %s199, 2
      %s202 = smul.addr %s201, 8
      %s203 = scalar_lea.vmem %s4, %s202
      %s204 = smul.u32 3, %s20
      %p205 = scmp.lt.s32.totalorder %s204, 2
      %s206 = scalar_select %p205, %s204, 2
      %s207 = smul.addr %s206, 4
      %s208 = scalar_lea.vmem %s1, %s207
      %s209 = smul.u32 3, %s20
      %s210 = smul.u32 %s20, %s19
      %s211 = smul.u32 3, %s210
      %p212 = scmp.lt.s32.totalorder %s211, 2
      %s213 = scalar_select %p212, %s211, 2
      %s214 = smul.addr %s213, 8
      %s215 = scalar_lea.vmem %s4, %s214
      %s216 = smul.u32 %s20, %s19
      %s217 = smul.u32 3, %s216
      %v219 = vld [vmem:[%s0] sm:$0xff]
      %v220 = vld [vmem:[%s0 + $0x8] sm:$0xf]
      %v221 = vld [vmem:[%s0 + $0xc] sm:$0xff]
      %v222 = vld [vmem:[%s0 + $0x14] sm:$0xf]
      %v223 = vld [vmem:[%s0 + $0x18] sm:$0xff]
      %v224 = vld [vmem:[%s0 + $0x20] sm:$0xf]
      %v225 = vld [vmem:[%s0 + $0x24] sm:$0xff]
      %v226 = vld [vmem:[%s0 + $0x2c] sm:$0xf]
      %v227 = vld [vmem:[%s208] sm:$0xff]
      %v228 = vld [vmem:[%s208 + $0x8] sm:$0xf]
      %v229 = vld [vmem:[%s208 + $0xc] sm:$0xff]
      %v230 = vld [vmem:[%s208 + $0x14] sm:$0xf]
      %v231 = vld [vmem:[%s208 + $0x18] sm:$0xff]
      %v232 = vld [vmem:[%s208 + $0x20] sm:$0xf]
      %v233 = vld [vmem:[%s208 + $0x24] sm:$0xff]
      %v234 = vld [vmem:[%s208 + $0x2c] sm:$0xf]
      %v235 = vld [vmem:[%s208 + $0x30] sm:$0xff]
      %v236 = vld [vmem:[%s208 + $0x38] sm:$0xf]
      %v237 = vld [vmem:[%s208 + $0x3c] sm:$0xff]
      %v238 = vld [vmem:[%s208 + $0x44] sm:$0xf]
      %v239 = vld [vmem:[%s208 + $0x48] sm:$0xff]
      %v240 = vld [vmem:[%s208 + $0x50] sm:$0xf]
      %v241 = vld [vmem:[%s208 + $0x54] sm:$0xff]
      %v242 = vld [vmem:[%s208 + $0x5c] sm:$0xf]
      %v243 = vld [vmem:[%s208 + $0x60] sm:$0xff]
      %v244 = vld [vmem:[%s208 + $0x68] sm:$0xf]
      %v245 = vld [vmem:[%s208 + $0x6c] sm:$0xff]
      %v246 = vld [vmem:[%s208 + $0x74] sm:$0xf]
      %v247 = vld [vmem:[%s208 + $0x78] sm:$0xff]
      %v248 = vld [vmem:[%s208 + $0x80] sm:$0xf]
      %v249 = vld [vmem:[%s208 + $0x84] sm:$0xff]
      %v250 = vld [vmem:[%s208 + $0x8c] sm:$0xf]
      %v251 = vld [vmem:[%s208 + $0x90] sm:$0xff]
      %v252 = vld [vmem:[%s208 + $0x98] sm:$0xf]
      %v253 = vld [vmem:[%s208 + $0x9c] sm:$0xff]
      %v254 = vld [vmem:[%s208 + $0xa4] sm:$0xf]
      %v255 = vld [vmem:[%s208 + $0xa8] sm:$0xff]
      %v256 = vld [vmem:[%s208 + $0xb0] sm:$0xf]
      %v257 = vld [vmem:[%s208 + $0xb4] sm:$0xff]
      %v258 = vld [vmem:[%s208 + $0xbc] sm:$0xf]
      %v259 = vld [vmem:[%s208 + $0xc0] sm:$0xff]
      %v260 = vld [vmem:[%s208 + $0xc8] sm:$0xf]
      %v261 = vld [vmem:[%s208 + $0xcc] sm:$0xff]
      %v262 = vld [vmem:[%s208 + $0xd4] sm:$0xf]
      %v263 = vld [vmem:[%s208 + $0xd8] sm:$0xff]
      %v264 = vld [vmem:[%s208 + $0xe0] sm:$0xf]
      %v265 = vld [vmem:[%s208 + $0xe4] sm:$0xff]
      %v266 = vld [vmem:[%s208 + $0xec] sm:$0xf]
      %v267 = vld [vmem:[%s208 + $0xf0] sm:$0xff]
      %v268 = vld [vmem:[%s208 + $0xf8] sm:$0xf]
      %v269 = vld [vmem:[%s208 + $0xfc] sm:$0xff]
      %v270 = vld [vmem:[%s208 + $0x104] sm:$0xf]
      %v271 = vld [vmem:[%s208 + $0x108] sm:$0xff]
      %v272 = vld [vmem:[%s208 + $0x110] sm:$0xf]
      %v273 = vld [vmem:[%s208 + $0x114] sm:$0xff]
      %v274 = vld [vmem:[%s208 + $0x11c] sm:$0xf]
      %v275 = vld [vmem:[%s208 + $0x120] sm:$0xff]
      %v276 = vld [vmem:[%s208 + $0x128] sm:$0xf]
      %v277 = vld [vmem:[%s208 + $0x12c] sm:$0xff]
      %v278 = vld [vmem:[%s208 + $0x134] sm:$0xf]
      %v279 = vld [vmem:[%s208 + $0x138] sm:$0xff]
      %v280 = vld [vmem:[%s208 + $0x140] sm:$0xf]
      %v281 = vld [vmem:[%s208 + $0x144] sm:$0xff]
      %v282 = vld [vmem:[%s208 + $0x14c] sm:$0xf]
      %v283 = vld [vmem:[%s208 + $0x150] sm:$0xff]
      %v284 = vld [vmem:[%s208 + $0x158] sm:$0xf]
      %v285 = vld [vmem:[%s208 + $0x15c] sm:$0xff]
      %v286 = vld [vmem:[%s208 + $0x164] sm:$0xf]
      %v287 = vld [vmem:[%s208 + $0x168] sm:$0xff]
      %v288 = vld [vmem:[%s208 + $0x170] sm:$0xf]
      %v289 = vld [vmem:[%s208 + $0x174] sm:$0xff]
      %v290 = vld [vmem:[%s208 + $0x17c] sm:$0xf]
      %v291 = vld [vmem:[%s208 + $0x180] sm:$0xff]
      %v292 = vld [vmem:[%s208 + $0x188] sm:$0xf]
      %v293 = vld [vmem:[%s208 + $0x18c] sm:$0xff]
      %v294 = vld [vmem:[%s208 + $0x194] sm:$0xf]
      %v295 = vld [vmem:[%s208 + $0x198] sm:$0xff]
      %v296 = vld [vmem:[%s208 + $0x1a0] sm:$0xf]
      %v297 = vld [vmem:[%s208 + $0x1a4] sm:$0xff]
      %v298 = vld [vmem:[%s208 + $0x1ac] sm:$0xf]
      %v307 = vunpack.c.l.b16 %v219
      %v308 = vunpack.c.h.b16 %v219
      %v309 = vunpack.c.l.b16 %v220
      %v310 = vunpack.c.l.b16 %v221
      %v311 = vunpack.c.h.b16 %v221
      %v312 = vunpack.c.l.b16 %v222
      %v313 = vunpack.c.l.b16 %v223
      %v314 = vunpack.c.h.b16 %v223
      %v315 = vunpack.c.l.b16 %v224
      %v316 = vunpack.c.l.b16 %v225
      %v317 = vunpack.c.h.b16 %v225
      %v318 = vunpack.c.l.b16 %v226
      %v319 = vpack.c.b16 %v310, %v307
      %v320 = vpack.c.b16 %v311, %v308
      %v321 = vpack.c.b16 %v312, %v309
      %v322 = vpack.c.b16 %v316, %v313
      %v323 = vpack.c.b16 %v317, %v314
      %v324 = vpack.c.b16 %v318, %v315
      %v401 = vunpack.c.l.b16 %v227
      %v402 = vunpack.c.h.b16 %v227
      %v403 = vunpack.c.l.b16 %v228
      %v404 = vunpack.c.l.b16 %v229
      %v405 = vunpack.c.h.b16 %v229
      %v406 = vunpack.c.l.b16 %v230
      %v407 = vunpack.c.l.b16 %v231
      %v408 = vunpack.c.h.b16 %v231
      %v409 = vunpack.c.l.b16 %v232
      %v410 = vunpack.c.l.b16 %v233
      %v411 = vunpack.c.h.b16 %v233
      %v412 = vunpack.c.l.b16 %v234
      %v413 = vunpack.c.l.b16 %v235
      %v414 = vunpack.c.h.b16 %v235
      %v415 = vunpack.c.l.b16 %v236
      %v416 = vunpack.c.l.b16 %v237
      %v417 = vunpack.c.h.b16 %v237
      %v418 = vunpack.c.l.b16 %v238
      %v419 = vunpack.c.l.b16 %v239
      %v420 = vunpack.c.h.b16 %v239
      %v421 = vunpack.c.l.b16 %v240
      %v422 = vunpack.c.l.b16 %v241
      %v423 = vunpack.c.h.b16 %v241
      %v424 = vunpack.c.l.b16 %v242
      %v425 = vunpack.c.l.b16 %v243
      %v426 = vunpack.c.h.b16 %v243
      %v427 = vunpack.c.l.b16 %v244
      %v428 = vunpack.c.l.b16 %v245
      %v429 = vunpack.c.h.b16 %v245
      %v430 = vunpack.c.l.b16 %v246
      %v431 = vunpack.c.l.b16 %v247
      %v432 = vunpack.c.h.b16 %v247
      %v433 = vunpack.c.l.b16 %v248
      %v434 = vunpack.c.l.b16 %v249
      %v435 = vunpack.c.h.b16 %v249
      %v436 = vunpack.c.l.b16 %v250
      %v437 = vunpack.c.l.b16 %v251
      %v438 = vunpack.c.h.b16 %v251
      %v439 = vunpack.c.l.b16 %v252
      %v440 = vunpack.c.l.b16 %v253
      %v441 = vunpack.c.h.b16 %v253
      %v442 = vunpack.c.l.b16 %v254
      %v443 = vunpack.c.l.b16 %v255
      %v444 = vunpack.c.h.b16 %v255
      %v445 = vunpack.c.l.b16 %v256
      %v446 = vunpack.c.l.b16 %v257
      %v447 = vunpack.c.h.b16 %v257
      %v448 = vunpack.c.l.b16 %v258
      %v449 = vunpack.c.l.b16 %v259
      %v450 = vunpack.c.h.b16 %v259
      %v451 = vunpack.c.l.b16 %v260
      %v452 = vunpack.c.l.b16 %v261
      %v453 = vunpack.c.h.b16 %v261
      %v454 = vunpack.c.l.b16 %v262
      %v455 = vunpack.c.l.b16 %v263
      %v456 = vunpack.c.h.b16 %v263
      %v457 = vunpack.c.l.b16 %v264
      %v458 = vunpack.c.l.b16 %v265
      %v459 = vunpack.c.h.b16 %v265
      %v460 = vunpack.c.l.b16 %v266
      %v461 = vunpack.c.l.b16 %v267
      %v462 = vunpack.c.h.b16 %v267
      %v463 = vunpack.c.l.b16 %v268
      %v464 = vunpack.c.l.b16 %v269
      %v465 = vunpack.c.h.b16 %v269
      %v466 = vunpack.c.l.b16 %v270
      %v467 = vunpack.c.l.b16 %v271
      %v468 = vunpack.c.h.b16 %v271
      %v469 = vunpack.c.l.b16 %v272
      %v470 = vunpack.c.l.b16 %v273
      %v471 = vunpack.c.h.b16 %v273
      %v472 = vunpack.c.l.b16 %v274
      %v473 = vunpack.c.l.b16 %v275
      %v474 = vunpack.c.h.b16 %v275
      %v475 = vunpack.c.l.b16 %v276
      %v476 = vunpack.c.l.b16 %v277
      %v477 = vunpack.c.h.b16 %v277
      %v478 = vunpack.c.l.b16 %v278
      %v479 = vunpack.c.l.b16 %v279
      %v480 = vunpack.c.h.b16 %v279
      %v481 = vunpack.c.l.b16 %v280
      %v482 = vunpack.c.l.b16 %v281
      %v483 = vunpack.c.h.b16 %v281
      %v484 = vunpack.c.l.b16 %v282
      %v485 = vunpack.c.l.b16 %v283
      %v486 = vunpack.c.h.b16 %v283
      %v487 = vunpack.c.l.b16 %v284
      %v488 = vunpack.c.l.b16 %v285
      %v489 = vunpack.c.h.b16 %v285
      %v490 = vunpack.c.l.b16 %v286
      %v491 = vunpack.c.l.b16 %v287
      %v492 = vunpack.c.h.b16 %v287
      %v493 = vunpack.c.l.b16 %v288
      %v494 = vunpack.c.l.b16 %v289
      %v495 = vunpack.c.h.b16 %v289
      %v496 = vunpack.c.l.b16 %v290
      %v497 = vunpack.c.l.b16 %v291
      %v498 = vunpack.c.h.b16 %v291
      %v499 = vunpack.c.l.b16 %v292
      %v500 = vunpack.c.l.b16 %v293
      %v501 = vunpack.c.h.b16 %v293
      %v502 = vunpack.c.l.b16 %v294
      %v503 = vunpack.c.l.b16 %v295
      %v504 = vunpack.c.h.b16 %v295
      %v505 = vunpack.c.l.b16 %v296
      %v506 = vunpack.c.l.b16 %v297
      %v507 = vunpack.c.h.b16 %v297
      %v508 = vunpack.c.l.b16 %v298
      %v509 = vpack.c.b16 %v404, %v401
      %v510 = vpack.c.b16 %v405, %v402
      %v511 = vpack.c.b16 %v406, %v403
      %v512 = vpack.c.b16 %v410, %v407
      %v513 = vpack.c.b16 %v411, %v408
      %v514 = vpack.c.b16 %v412, %v409
      %v515 = vpack.c.b16 %v416, %v413
      %v516 = vpack.c.b16 %v417, %v414
      %v517 = vpack.c.b16 %v418, %v415
      %v518 = vpack.c.b16 %v422, %v419
      %v519 = vpack.c.b16 %v423, %v420
      %v520 = vpack.c.b16 %v424, %v421
      %v521 = vpack.c.b16 %v428, %v425
      %v522 = vpack.c.b16 %v429, %v426
      %v523 = vpack.c.b16 %v430, %v427
      %v524 = vpack.c.b16 %v434, %v431
      %v525 = vpack.c.b16 %v435, %v432
      %v526 = vpack.c.b16 %v436, %v433
      %v527 = vpack.c.b16 %v440, %v437
      %v528 = vpack.c.b16 %v441, %v438
      %v529 = vpack.c.b16 %v442, %v439
      %v530 = vpack.c.b16 %v446, %v443
      %v531 = vpack.c.b16 %v447, %v444
      %v532 = vpack.c.b16 %v448, %v445
      %v533 = vpack.c.b16 %v452, %v449
      %v534 = vpack.c.b16 %v453, %v450
      %v535 = vpack.c.b16 %v454, %v451
      %v536 = vpack.c.b16 %v458, %v455
      %v537 = vpack.c.b16 %v459, %v456
      %v538 = vpack.c.b16 %v460, %v457
      %v539 = vpack.c.b16 %v464, %v461
      %v540 = vpack.c.b16 %v465, %v462
      %v541 = vpack.c.b16 %v466, %v463
      %v542 = vpack.c.b16 %v470, %v467
      %v543 = vpack.c.b16 %v471, %v468
      %v544 = vpack.c.b16 %v472, %v469
      %v545 = vpack.c.b16 %v476, %v473
      %v546 = vpack.c.b16 %v477, %v474
      %v547 = vpack.c.b16 %v478, %v475
      %v548 = vpack.c.b16 %v482, %v479
      %v549 = vpack.c.b16 %v483, %v480
      %v550 = vpack.c.b16 %v484, %v481
      %v551 = vpack.c.b16 %v488, %v485
      %v552 = vpack.c.b16 %v489, %v486
      %v553 = vpack.c.b16 %v490, %v487
      %v554 = vpack.c.b16 %v494, %v491
      %v555 = vpack.c.b16 %v495, %v492
      %v556 = vpack.c.b16 %v496, %v493
      %v557 = vpack.c.b16 %v500, %v497
      %v558 = vpack.c.b16 %v501, %v498
      %v559 = vpack.c.b16 %v502, %v499
      %v560 = vpack.c.b16 %v506, %v503
      %v561 = vpack.c.b16 %v507, %v504
      %v562 = vpack.c.b16 %v508, %v505
      %vm617 = vcmask 261120
      %v619 = vsel %vm617, %v321, 0
      %v622 = vsel %vm617, %v324, 0
      %624 = vmatprep.subr.bf16.mxu0 %v531
      %625 = vmatpush1.bf16.msra.mxu0 %v530
      %626 = vmatprep.subr.bf16.mxu0 %v528
      %627 = vmatpush1.bf16.msra.mxu0 %v527
      %628 = vmatprep.subr.bf16.mxu0 %v525
      %629 = vmatpush1.bf16.msra.mxu0 %v524
      %630 = vmatprep.subr.bf16.mxu0 %v522
      %631 = vmatpush1.bf16.msra.mxu0 %v521
      %632 = vmatprep.subr.bf16.mxu0 %v519
      %633 = vmatpush1.bf16.msra.mxu0 %v518
      %634 = vmatprep.subr.bf16.mxu0 %v516
      %635 = vmatpush1.bf16.msra.mxu0 %v515
      %636 = vmatprep.subr.bf16.mxu0 %v513
      %637 = vmatpush1.bf16.msra.mxu0 %v512
      %638 = vmatprep.subr.bf16.mxu0 %v510
      %639 = vmatpush1.bf16.msra.mxu0 %v509
      %640 = vmatprep.subr.bf16.mxu0 %v555
      %641 = vmatpush2.bf16.msra.mxu0 %v554
      %642 = vmatprep.subr.bf16.mxu0 %v552
      %643 = vmatpush2.bf16.msra.mxu0 %v551
      %644 = vmatprep.subr.bf16.mxu0 %v549
      %645 = vmatpush2.bf16.msra.mxu0 %v548
      %646 = vmatprep.subr.bf16.mxu0 %v546
      %647 = vmatpush2.bf16.msra.mxu0 %v545
      %648 = vmatprep.subr.bf16.mxu0 %v543
      %649 = vmatpush2.bf16.msra.mxu0 %v542
      %650 = vmatprep.subr.bf16.mxu0 %v540
      %651 = vmatpush2.bf16.msra.mxu0 %v539
      %652 = vmatprep.subr.bf16.mxu0 %v537
      %653 = vmatpush2.bf16.msra.mxu0 %v536
      %654 = vmatprep.subr.bf16.mxu0 %v534
      %655 = vmatpush2.bf16.msra.mxu0 %v533
      %656 = vmatprep.mubr.bf16.mxu0 %v320
      %657 = vmatmul.mubr.bf16.gmra.mxu0 %v319
      %v658 = vpop.f32.mrf.mxu0
      %v659 = vadd.f32 0.0, %v658
      %v660 = vpop.f32.mrf.mxu0
      %v661 = vadd.f32 0.0, %v660
      %v662 = vpop.f32.mrf.mxu0
      %v663 = vadd.f32 0.0, %v662
      %v664 = vpop.f32.mrf.mxu0
      %v665 = vadd.f32 0.0, %v664
      %666 = vmatprep.mubr.bf16.mxu0 %v323
      %667 = vmatmul.mubr.bf16.gmra.mxu0 %v322
      %v668 = vpop.f32.mrf.mxu0
      %v669 = vadd.f32 0.0, %v668
      %v670 = vpop.f32.mrf.mxu0
      %v671 = vadd.f32 0.0, %v670
      %v672 = vpop.f32.mrf.mxu0
      %v673 = vadd.f32 0.0, %v672
      %v674 = vpop.f32.mrf.mxu0
      %v675 = vadd.f32 0.0, %v674
      %676 = vdwg.mxu0
      %677 = vmatprep.subr.bf16.mxu0 0
      %678 = vmatpush1.bf16.msra.mxu0 0
      %679 = vmatprep.subr.bf16.mxu0 0
      %680 = vmatpush1.bf16.msra.mxu0 0
      %681 = vmatprep.subr.bf16.mxu0 0
      %682 = vmatpush1.bf16.msra.mxu0 0
      %683 = vmatprep.subr.bf16.mxu0 0
      %684 = vmatpush1.bf16.msra.mxu0 0
      %685 = vmatprep.subr.bf16.mxu0 0
      %686 = vmatpush1.bf16.msra.mxu0 0
      %687 = vmatprep.subr.bf16.mxu0 0
      %688 = vmatpush1.bf16.msra.mxu0 0
      %689 = vmatprep.subr.bf16.mxu0 %v561
      %690 = vmatpush1.bf16.msra.mxu0 %v560
      %691 = vmatprep.subr.bf16.mxu0 %v558
      %692 = vmatpush1.bf16.msra.mxu0 %v557
      %693 = vmatprep.subr.bf16.mxu0 0
      %694 = vmatpush2.bf16.msra.mxu0 0
      %695 = vmatprep.subr.bf16.mxu0 0
      %696 = vmatpush2.bf16.msra.mxu0 0
      %697 = vmatprep.subr.bf16.mxu0 0
      %698 = vmatpush2.bf16.msra.mxu0 0
      %699 = vmatprep.subr.bf16.mxu0 0
      %700 = vmatpush2.bf16.msra.mxu0 0
      %701 = vmatprep.subr.bf16.mxu0 0
      %702 = vmatpush2.bf16.msra.mxu0 0
      %703 = vmatprep.subr.bf16.mxu0 0
      %704 = vmatpush2.bf16.msra.mxu0 0
      %705 = vmatprep.subr.bf16.mxu0 0
      %706 = vmatpush2.bf16.msra.mxu0 0
      %707 = vmatprep.subr.bf16.mxu0 0
      %708 = vmatpush2.bf16.msra.mxu0 0
      %709 = vmatprep.mubr.bf16.mxu0 0
      %710 = vmatmul.mubr.bf16.gmra.mxu0 %v619
      %v711 = vpop.f32.mrf.mxu0
      %v712 = vadd.f32 %v659, %v711
      %v713 = vpop.f32.mrf.mxu0
      %v714 = vadd.f32 %v661, %v713
      %v715 = vpop.f32.mrf.mxu0
      %v716 = vadd.f32 %v663, %v715
      %v717 = vpop.f32.mrf.mxu0
      %v718 = vadd.f32 %v665, %v717
      %719 = vmatprep.mubr.bf16.mxu0 0
      %720 = vmatmul.mubr.bf16.gmra.mxu0 %v622
      %v721 = vpop.f32.mrf.mxu0
      %v722 = vadd.f32 %v669, %v721
      %v723 = vpop.f32.mrf.mxu0
      %v724 = vadd.f32 %v671, %v723
      %v725 = vpop.f32.mrf.mxu0
      %v726 = vadd.f32 %v673, %v725
      %v727 = vpop.f32.mrf.mxu0
      %v728 = vadd.f32 %v675, %v727
      %729 = vdwg.mxu0
      %730 = vmatprep.subr.bf16.mxu0 0
      %731 = vmatpush1.bf16.msra.mxu0 %v532
      %732 = vmatprep.subr.bf16.mxu0 0
      %733 = vmatpush1.bf16.msra.mxu0 %v529
      %734 = vmatprep.subr.bf16.mxu0 0
      %735 = vmatpush1.bf16.msra.mxu0 %v526
      %736 = vmatprep.subr.bf16.mxu0 0
      %737 = vmatpush1.bf16.msra.mxu0 %v523
      %738 = vmatprep.subr.bf16.mxu0 0
      %739 = vmatpush1.bf16.msra.mxu0 %v520
      %740 = vmatprep.subr.bf16.mxu0 0
      %741 = vmatpush1.bf16.msra.mxu0 %v517
      %742 = vmatprep.subr.bf16.mxu0 0
      %743 = vmatpush1.bf16.msra.mxu0 %v514
      %744 = vmatprep.subr.bf16.mxu0 0
      %745 = vmatpush1.bf16.msra.mxu0 %v511
      %746 = vmatprep.subr.bf16.mxu0 0
      %747 = vmatpush2.bf16.msra.mxu0 %v556
      %748 = vmatprep.subr.bf16.mxu0 0
      %749 = vmatpush2.bf16.msra.mxu0 %v553
      %750 = vmatprep.subr.bf16.mxu0 0
      %751 = vmatpush2.bf16.msra.mxu0 %v550
      %752 = vmatprep.subr.bf16.mxu0 0
      %753 = vmatpush2.bf16.msra.mxu0 %v547
      %754 = vmatprep.subr.bf16.mxu0 0
      %755 = vmatpush2.bf16.msra.mxu0 %v544
      %756 = vmatprep.subr.bf16.mxu0 0
      %757 = vmatpush2.bf16.msra.mxu0 %v541
      %758 = vmatprep.subr.bf16.mxu0 0
      %759 = vmatpush2.bf16.msra.mxu0 %v538
      %760 = vmatprep.subr.bf16.mxu0 0
      %761 = vmatpush2.bf16.msra.mxu0 %v535
      %762 = vmatprep.mubr.bf16.mxu0 %v320
      %763 = vmatmul.mubr.bf16.gmra.mxu0 %v319
      %v764 = vpop.f32.mrf.mxu0
      %v765 = vadd.f32 0.0, %v764
      %v766 = vpop.f32.mrf.mxu0
      %v767 = vpop.f32.mrf.mxu0
      %v768 = vadd.f32 0.0, %v767
      %v769 = vpop.f32.mrf.mxu0
      %770 = vmatprep.mubr.bf16.mxu0 %v323
      %771 = vmatmul.mubr.bf16.gmra.mxu0 %v322
      %v772 = vpop.f32.mrf.mxu0
      %v773 = vadd.f32 0.0, %v772
      %v774 = vpop.f32.mrf.mxu0
      %v775 = vpop.f32.mrf.mxu0
      %v776 = vadd.f32 0.0, %v775
      %v777 = vpop.f32.mrf.mxu0
      %778 = vdwg.mxu0
      %779 = vmatprep.subr.bf16.mxu0 0
      %780 = vmatpush1.bf16.msra.mxu0 0
      %781 = vmatprep.subr.bf16.mxu0 0
      %782 = vmatpush1.bf16.msra.mxu0 0
      %783 = vmatprep.subr.bf16.mxu0 0
      %784 = vmatpush1.bf16.msra.mxu0 0
      %785 = vmatprep.subr.bf16.mxu0 0
      %786 = vmatpush1.bf16.msra.mxu0 0
      %787 = vmatprep.subr.bf16.mxu0 0
      %788 = vmatpush1.bf16.msra.mxu0 0
      %789 = vmatprep.subr.bf16.mxu0 0
      %790 = vmatpush1.bf16.msra.mxu0 0
      %791 = vmatprep.subr.bf16.mxu0 0
      %792 = vmatpush1.bf16.msra.mxu0 %v562
      %793 = vmatprep.subr.bf16.mxu0 0
      %794 = vmatpush1.bf16.msra.mxu0 %v559
      %795 = vmatprep.subr.bf16.mxu0 0
      %796 = vmatpush2.bf16.msra.mxu0 0
      %797 = vmatprep.subr.bf16.mxu0 0
      %798 = vmatpush2.bf16.msra.mxu0 0
      %799 = vmatprep.subr.bf16.mxu0 0
      %800 = vmatpush2.bf16.msra.mxu0 0
      %801 = vmatprep.subr.bf16.mxu0 0
      %802 = vmatpush2.bf16.msra.mxu0 0
      %803 = vmatprep.subr.bf16.mxu0 0
      %804 = vmatpush2.bf16.msra.mxu0 0
      %805 = vmatprep.subr.bf16.mxu0 0
      %806 = vmatpush2.bf16.msra.mxu0 0
      %807 = vmatprep.subr.bf16.mxu0 0
      %808 = vmatpush2.bf16.msra.mxu0 0
      %809 = vmatprep.subr.bf16.mxu0 0
      %810 = vmatpush2.bf16.msra.mxu0 0
      %811 = vmatprep.mubr.bf16.mxu0 0
      %812 = vmatmul.mubr.bf16.gmra.mxu0 %v619
      %v813 = vpop.f32.mrf.mxu0
      %v814 = vadd.f32 %v765, %v813
      %v815 = vpop.f32.mrf.mxu0
      %v816 = vpop.f32.mrf.mxu0
      %v817 = vadd.f32 %v768, %v816
      %v818 = vpop.f32.mrf.mxu0
      %819 = vmatprep.mubr.bf16.mxu0 0
      %820 = vmatmul.mubr.bf16.gmra.mxu0 %v622
      %v821 = vpop.f32.mrf.mxu0
      %v822 = vadd.f32 %v773, %v821
      %v823 = vpop.f32.mrf.mxu0
      %v824 = vpop.f32.mrf.mxu0
      %v825 = vadd.f32 %v776, %v824
      %v826 = vpop.f32.mrf.mxu0
      %827 = vdwg.mxu0
      %p828 = scmp.eq.s32.totalorder %s19, 0
      %p829 = scmp.eq.s32.totalorder %s20, 0
      %p830 = pnand %p828, %p829
      %p831 = pneg %p830
      // Predicated region
      $region37: #{stem_forward.5} parent=35 // pred_check
        _
      $region38: #{stem_forward.5} parent=35 // pred_check_branch
        %833 = sbr.rel (%p830) target = $region40
      $region39: #{stem_forward.5} parent=35 // pred_region
        %vm834 = vcmask 7168
        %835 = vst.msk [vmem:[#allocation2] sm:$0xff] %vm834, 0.0
        %836 = vst.msk [vmem:[#allocation2 + $0x8] sm:$0xff] %vm834, 0.0
        %837 = vst.msk [vmem:[#allocation2 + $0x10] sm:$0xff] %vm834, 0.0
        %838 = vst.msk [vmem:[#allocation2 + $0x18] sm:$0xff] %vm834, 0.0
        %839 = vst.msk [vmem:[#allocation3] sm:$0xff] %vm834, 0.0
        %840 = vst.msk [vmem:[#allocation3 + $0x8] sm:$0xff] %vm834, 0.0
        %841 = vst.msk [vmem:[#allocation3 + $0x10] sm:$0xff] %vm834, 0.0
        %842 = vst.msk [vmem:[#allocation3 + $0x18] sm:$0xff] %vm834, 0.0
      $region40: #{stem_forward.5} parent=35 // pred_fallthru
        _
      // Predicated region
      $region41: #{stem_forward.5} parent=35 // pred_check
        %p843 = pneg %p828
      $region42: #{stem_forward.5} parent=35 // pred_check_branch
        %845 = sbr.rel (%p843) target = $region44
      $region43: #{stem_forward.5} parent=35 // pred_region
        %v846 = vld [vmem:[#allocation2] sm:$0xff]
        %v847 = vld [vmem:[#allocation2 + $0x8] sm:$0xff]
        %v848 = vld [vmem:[#allocation2 + $0x10] sm:$0xff]
        %v849 = vld [vmem:[#allocation2 + $0x18] sm:$0xff]
        %v850 = vadd.f32 %v712, %v714
        %v851 = vadd.f32 %v850, %v814
        %852 = vadd.xlane.f32.xlu0 %v851
        %v853 = vpop.xlane.xlu0 %852
        %v854 = vadd.f32 %v716, %v718
        %v855 = vadd.f32 %v854, %v817
        %856 = vadd.xlane.f32.xlu0 %v855
        %v857 = vpop.xlane.xlu0 %856
        %v858 = vadd.f32 %v722, %v724
        %v859 = vadd.f32 %v858, %v822
        %860 = vadd.xlane.f32.xlu0 %v859
        %v861 = vpop.xlane.xlu0 %860
        %v862 = vadd.f32 %v726, %v728
        %v863 = vadd.f32 %v862, %v825
        %864 = vadd.xlane.f32.xlu0 %v863
        %v865 = vpop.xlane.xlu0 %864
        %v866 = vadd.f32 %v846, %v853
        %v867 = vadd.f32 %v847, %v857
        %v868 = vadd.f32 %v848, %v861
        %v869 = vadd.f32 %v849, %v865
        %vm870 = vcmask 7168
        %871 = vst.msk [vmem:[#allocation2] sm:$0xff] %vm870, %v866
        %872 = vst.msk [vmem:[#allocation2 + $0x8] sm:$0xff] %vm870, %v867
        %873 = vst.msk [vmem:[#allocation2 + $0x10] sm:$0xff] %vm870, %v868
        %874 = vst.msk [vmem:[#allocation2 + $0x18] sm:$0xff] %vm870, %v869
        %v875 = vld [vmem:[#allocation3] sm:$0xff]
        %v876 = vld [vmem:[#allocation3 + $0x8] sm:$0xff]
        %v877 = vld [vmem:[#allocation3 + $0x10] sm:$0xff]
        %v878 = vld [vmem:[#allocation3 + $0x18] sm:$0xff]
        %v879 = vmul.f32 %v712, %v712
        %v880 = vmul.f32 %v714, %v714
        %v881 = vmul.f32 %v814, %v814
        %v882 = vmul.f32 %v716, %v716
        %v883 = vmul.f32 %v718, %v718
        %v884 = vmul.f32 %v817, %v817
        %v885 = vmul.f32 %v722, %v722
        %v886 = vmul.f32 %v724, %v724
        %v887 = vmul.f32 %v822, %v822
        %v888 = vmul.f32 %v726, %v726
        %v889 = vmul.f32 %v728, %v728
        %v890 = vmul.f32 %v825, %v825
        %v891 = vadd.f32 %v879, %v880
        %v892 = vadd.f32 %v891, %v881
        %893 = vadd.xlane.f32.xlu0 %v892
        %v894 = vpop.xlane.xlu0 %893
        %v895 = vadd.f32 %v882, %v883
        %v896 = vadd.f32 %v895, %v884
        %897 = vadd.xlane.f32.xlu0 %v896
        %v898 = vpop.xlane.xlu0 %897
        %v899 = vadd.f32 %v885, %v886
        %v900 = vadd.f32 %v899, %v887
        %901 = vadd.xlane.f32.xlu0 %v900
        %v902 = vpop.xlane.xlu0 %901
        %v903 = vadd.f32 %v888, %v889
        %v904 = vadd.f32 %v903, %v890
        %905 = vadd.xlane.f32.xlu0 %v904
        %v906 = vpop.xlane.xlu0 %905
        %v907 = vadd.f32 %v875, %v894
        %v908 = vadd.f32 %v876, %v898
        %v909 = vadd.f32 %v877, %v902
        %v910 = vadd.f32 %v878, %v906
        %911 = vst.msk [vmem:[#allocation3] sm:$0xff] %vm870, %v907
        %912 = vst.msk [vmem:[#allocation3 + $0x8] sm:$0xff] %vm870, %v908
        %913 = vst.msk [vmem:[#allocation3 + $0x10] sm:$0xff] %vm870, %v909
        %914 = vst.msk [vmem:[#allocation3 + $0x18] sm:$0xff] %vm870, %v910
      $region44: #{stem_forward.5} parent=35 // pred_fallthru
        _
      %p915 = scmp.eq.s32.totalorder %s19, 1
      %p916 = pnand %p915, %p829
      %p917 = pneg %p916
      // Predicated region
      $region45: #{stem_forward.5} parent=35 // pred_check
        _
      $region46: #{stem_forward.5} parent=35 // pred_check_branch
        %919 = sbr.rel (%p916) target = $region48
      $region47: #{stem_forward.5} parent=35 // pred_region
        %v920 = vld [vmem:[#allocation2] sm:$0xff]
        %v921 = vld [vmem:[#allocation2 + $0x8] sm:$0xff]
        %v922 = vld [vmem:[#allocation2 + $0x10] sm:$0xff]
        %v923 = vld [vmem:[#allocation2 + $0x18] sm:$0xff]
        %v924 = vmul.f32 %v920, 0.00295858
        %v925 = vmul.f32 %v921, 0.00295858
        %v926 = vmul.f32 %v922, 0.00295858
        %v927 = vmul.f32 %v923, 0.00295858
        %v928 = vld [vmem:[#allocation3] sm:$0xff]
        %v929 = vld [vmem:[#allocation3 + $0x8] sm:$0xff]
        %v930 = vld [vmem:[#allocation3 + $0x10] sm:$0xff]
        %v931 = vld [vmem:[#allocation3 + $0x18] sm:$0xff]
        %v932 = vmul.f32 %v928, 0.00295858
        %v933 = vmul.f32 %v929, 0.00295858
        %v934 = vmul.f32 %v930, 0.00295858
        %v935 = vmul.f32 %v931, 0.00295858
        %v936 = vmul.f32 %v924, %v924
        %v937 = vmul.f32 %v925, %v925
        %v938 = vmul.f32 %v926, %v926
        %v939 = vmul.f32 %v927, %v927
        %v940 = vsub.f32 %v932, %v936
        %v941 = vsub.f32 %v933, %v937
        %v942 = vsub.f32 %v934, %v938
        %v943 = vsub.f32 %v935, %v939
        %v944 = vld [vmem:[%s2] sm:$0xff]
        %v945 = vld [vmem:[%s2 + $0x8] sm:$0xff]
        %v946 = vld [vmem:[%s2 + $0x10] sm:$0xff]
        %v947 = vld [vmem:[%s2 + $0x18] sm:$0xff]
        %v948 = vadd.f32 %v940, 1e-05
        %v949 = vadd.f32 %v941, 1e-05
        %v950 = vadd.f32 %v942, 1e-05
        %v951 = vadd.f32 %v943, 1e-05
        %v952 = vrsqrt.pop %v948
        %v953 = vrsqrt.pop %v949
        %v954 = vrsqrt.pop %v950
        %v955 = vrsqrt.pop %v951
        %v956 = vmul.f32 %v944, %v952
        %v957 = vmul.f32 %v945, %v953
        %v958 = vmul.f32 %v946, %v954
        %v959 = vmul.f32 %v947, %v955
        %vm960 = vcmask 7168
        %961 = vst.msk [vmem:[#allocation4] sm:$0xff] %vm960, %v956
        %962 = vst.msk [vmem:[#allocation4 + $0x8] sm:$0xff] %vm960, %v957
        %963 = vst.msk [vmem:[#allocation4 + $0x10] sm:$0xff] %vm960, %v958
        %964 = vst.msk [vmem:[#allocation4 + $0x18] sm:$0xff] %vm960, %v959
        %v965 = vld [vmem:[%s3] sm:$0xff]
        %v966 = vld [vmem:[%s3 + $0x8] sm:$0xff]
        %v967 = vld [vmem:[%s3 + $0x10] sm:$0xff]
        %v968 = vld [vmem:[%s3 + $0x18] sm:$0xff]
        %v969 = vmul.f32 %v924, %v956
        %v970 = vmul.f32 %v925, %v957
        %v971 = vmul.f32 %v926, %v958
        %v972 = vmul.f32 %v927, %v959
        %v973 = vsub.f32 %v965, %v969
        %v974 = vsub.f32 %v966, %v970
        %v975 = vsub.f32 %v967, %v971
        %v976 = vsub.f32 %v968, %v972
        %977 = vst.msk [vmem:[#allocation5] sm:$0xff] %vm960, %v973
        %978 = vst.msk [vmem:[#allocation5 + $0x8] sm:$0xff] %vm960, %v974
        %979 = vst.msk [vmem:[#allocation5 + $0x10] sm:$0xff] %vm960, %v975
        %980 = vst.msk [vmem:[#allocation5 + $0x18] sm:$0xff] %vm960, %v976
      $region48: #{stem_forward.5} parent=35 // pred_fallthru
        _
      // Predicated region
      $region49: #{stem_forward.5} parent=35 // pred_check
        %p981 = pneg %p915
      $region50: #{stem_forward.5} parent=35 // pred_check_branch
        %983 = sbr.rel (%p981) target = $region52
      $region51: #{stem_forward.5} parent=35 // pred_region
        %v984 = vld [vmem:[#allocation4] sm:$0xff]
        %v985 = vld [vmem:[#allocation4 + $0x8] sm:$0xff]
        %v986 = vld [vmem:[#allocation4 + $0x10] sm:$0xff]
        %v987 = vld [vmem:[#allocation4 + $0x18] sm:$0xff]
        %989 = vset.pattern.permute.xlu0 0
        %990 = vperm.xlu0 %989, %v984
        %v991 = vpop.permute.xlu0 %990
        %994 = vset.pattern.permute.xlu0 0
        %995 = vperm.xlu0 %994, %v985
        %v996 = vpop.permute.xlu0 %995
        %999 = vset.pattern.permute.xlu0 0
        %1000 = vperm.xlu0 %999, %v986
        %v1001 = vpop.permute.xlu0 %1000
        %1004 = vset.pattern.permute.xlu0 0
        %1005 = vperm.xlu0 %1004, %v987
        %v1006 = vpop.permute.xlu0 %1005
        %v1008 = vmul.f32 %v712, %v991
        %v1009 = vmul.f32 %v714, %v991
        %v1010 = vmul.f32 %v814, %v991
        %v1011 = vmul.f32 %v716, %v996
        %v1012 = vmul.f32 %v718, %v996
        %v1013 = vmul.f32 %v817, %v996
        %v1014 = vmul.f32 %v722, %v1001
        %v1015 = vmul.f32 %v724, %v1001
        %v1016 = vmul.f32 %v822, %v1001
        %v1017 = vmul.f32 %v726, %v1006
        %v1018 = vmul.f32 %v728, %v1006
        %v1019 = vmul.f32 %v825, %v1006
        %v1020 = vld [vmem:[#allocation5] sm:$0xff]
        %v1021 = vld [vmem:[#allocation5 + $0x8] sm:$0xff]
        %v1022 = vld [vmem:[#allocation5 + $0x10] sm:$0xff]
        %v1023 = vld [vmem:[#allocation5 + $0x18] sm:$0xff]
        %1025 = vset.pattern.permute.xlu0 0
        %1026 = vperm.xlu0 %1025, %v1020
        %v1027 = vpop.permute.xlu0 %1026
        %1030 = vset.pattern.permute.xlu0 0
        %1031 = vperm.xlu0 %1030, %v1021
        %v1032 = vpop.permute.xlu0 %1031
        %1035 = vset.pattern.permute.xlu0 0
        %1036 = vperm.xlu0 %1035, %v1022
        %v1037 = vpop.permute.xlu0 %1036
        %1040 = vset.pattern.permute.xlu0 0
        %1041 = vperm.xlu0 %1040, %v1023
        %v1042 = vpop.permute.xlu0 %1041
        %v1044 = vadd.f32 %v1008, %v1027
        %v1045 = vadd.f32 %v1009, %v1027
        %v1046 = vadd.f32 %v1010, %v1027
        %v1047 = vadd.f32 %v1011, %v1032
        %v1048 = vadd.f32 %v1012, %v1032
        %v1049 = vadd.f32 %v1013, %v1032
        %v1050 = vadd.f32 %v1014, %v1037
        %v1051 = vadd.f32 %v1015, %v1037
        %v1052 = vadd.f32 %v1016, %v1037
        %v1053 = vadd.f32 %v1017, %v1042
        %v1054 = vadd.f32 %v1018, %v1042
        %v1055 = vadd.f32 %v1019, %v1042
        %v1056 = vmax.f32 %v1044, 0.0
        %v1057 = vmax.f32 %v1045, 0.0
        %v1058 = vmax.f32 %v1046, 0.0
        %v1059 = vmax.f32 %v1047, 0.0
        %v1060 = vmax.f32 %v1048, 0.0
        %v1061 = vmax.f32 %v1049, 0.0
        %v1062 = vmax.f32 %v1050, 0.0
        %v1063 = vmax.f32 %v1051, 0.0
        %v1064 = vmax.f32 %v1052, 0.0
        %v1065 = vmax.f32 %v1053, 0.0
        %v1066 = vmax.f32 %v1054, 0.0
        %v1067 = vmax.f32 %v1055, 0.0
        %1068 = vst [vmem:[%s215] sm:$0xff] %v1056
        %1069 = vst [vmem:[%s215 + $0x8] sm:$0xff] %v1057
        %1070 = vst [vmem:[%s215 + $0x10] sm:$0xff] %v1058
        %1071 = vst [vmem:[%s215 + $0x18] sm:$0xff] %v1059
        %1072 = vst [vmem:[%s215 + $0x20] sm:$0xff] %v1060
        %1073 = vst [vmem:[%s215 + $0x28] sm:$0xff] %v1061
        %1074 = vst [vmem:[%s215 + $0x30] sm:$0xff] %v1062
        %1075 = vst [vmem:[%s215 + $0x38] sm:$0xff] %v1063
        %1076 = vst [vmem:[%s215 + $0x40] sm:$0xff] %v1064
        %1077 = vst [vmem:[%s215 + $0x48] sm:$0xff] %v1065
        %1078 = vst [vmem:[%s215 + $0x50] sm:$0xff] %v1066
        %1079 = vst [vmem:[%s215 + $0x58] sm:$0xff] %v1067
      $region52: #{stem_forward.5} parent=35 // pred_fallthru
        _
      %s1080 = smul.u32 %s20, %s19
      %s1081 = smul.u32 3, %s1080
      %p1082 = scmp.lt.s32.totalorder %s1081, 2
      %s1083 = scalar_select %p1082, %s1081, 2
      %s1084 = smul.addr %s1083, 8
      %s1085 = scalar_lea.vmem %s4, %s1084
      // Predicated region
      $region53: #{stem_forward.5} parent=35 // pred_check
        %p1086 = pneg %p136
      $region54: #{stem_forward.5} parent=35 // pred_check_branch
        %1088 = sbr.rel (%p1086) target = $region56
      $region55: #{stem_forward.5} parent=35 // pred_region
        %s1089 = smul.u32 %s20, %s19
        %s1090 = smul.u32 3, %s1089
      $region56: #{stem_forward.5} parent=35 // pred_fallthru
        _
    $region36: #{stem_forward.5} parent=5 // pred_fallthru
      _
    %p1091 = scmp.le.s32.totalorder 2, %s10
    // Predicated region
    $region57: #{stem_forward.5} parent=5 // pred_check
      %p1092 = pneg %p1091
    $region58: #{stem_forward.5} parent=5 // pred_check_branch
      %1094 = sbr.rel (%p1092) target = $region60
    $region59: #{stem_forward.5} parent=5 // pred_region
      %s1095 = ssub.s32 %s10, 2
      // Predicated region
      $region61: #{stem_forward.5} parent=59 // pred_check
        %p1096 = pneg %p142
      $region62: #{stem_forward.5} parent=59 // pred_check_branch
        %1098 = sbr.rel (%p1096) target = $region64
      $region63: #{stem_forward.5} parent=59 // pred_region
        %s1099 = smul.u32 %s22, %s21
        %s1100 = smul.u32 3, %s1099
        %p1101 = scmp.lt.s32.totalorder %s1100, 2
        %s1102 = scalar_select %p1101, %s1100, 2
        %s1103 = smul.addr %s1102, 8
        %s1104 = scalar_lea.vmem %s4, %s1103
      $region64: #{stem_forward.5} parent=59 // pred_fallthru
        _
    $region60: #{stem_forward.5} parent=5 // pred_fallthru
      _
  $region6: #{stem_forward.5} parent=0 // loop_footer
    %s14 = sadd.s32 1, %s10
  $region7: #{stem_forward.5} parent=0 // loop_footer_branch
    %9 = sbr.rel target = $region3
  $region8: #{stem_forward.5} parent=0 // loop_exit
    _

// kernel: stem_forward.6
$region0: #{stem_forward.6}
  #allocation0 [shape = 'u32[]', space=smem, size = 0x4, offset = 0x4, fixed_abs, tag = 'smem constant byte address 0x4 - core index']
  #allocation1 [shape = 'u32[144,128]{1,0:T(1,128)}', space=vmem, size = 0x12000, scoped, tag = 'internal scratch']
  #allocation2 [shape = 'f32[64,1]{1,0:T(8,128)}', space=vmem, size = 0x8000, scoped, tag = 'scratch operand']
  #allocation3 [shape = 'f32[64,1]{1,0:T(8,128)}', space=vmem, size = 0x8000, scoped, tag = 'scratch operand']
  #allocation4 [shape = 'f32[64,1]{1,0:T(8,128)}', space=vmem, size = 0x8000, scoped, tag = 'scratch operand']
  #allocation5 [shape = 'f32[64,1]{1,0:T(8,128)}', space=vmem, size = 0x8000, scoped, tag = 'scratch operand']
  %s0 = inlined_call_operand.vmem [shape: bf16[64,288], index: 0, kind: input, shape index: {}]
  %s1 = inlined_call_operand.vmem [shape: bf16[288,384], index: 1, kind: input, shape index: {}]
  %s2 = inlined_call_operand.vmem [shape: f32[64,1], index: 2, kind: input, shape index: {}]
  %s3 = inlined_call_operand.vmem [shape: f32[64,1], index: 3, kind: input, shape index: {}]
  %s4 = inlined_call_operand.vmem [shape: f32[64,384], index: 4, kind: output, shape index: {}]
  %s5 = sld [smem:[#allocation0]]
  $region65: #{stem_forward.6} parent=0
    _
  %s7 = ssub.s32 1, %s5
  %s8 = scalar_select 0, %s7, %s5
  loop: start=0, step=1, limit=4
  $region2: #{stem_forward.6} parent=0 // loop_pre_header
    _
  $region3: #{stem_forward.6} parent=0 // loop_header
    %s10 = sphi 0, %s14
    %p11 = scmp.ge.s32.totalorder %s10, 4
    %s17 = sphi 0, %s29
    %s18 = sphi 0, %s25
    %s19 = sphi 0, %s17
    %s20 = sphi 0, %s18
    %s21 = sphi 0, %s19
    %s22 = sphi 0, %s20
    %s30 = sphi 0, %s30
    %s32 = sphi 0, %s30
    %s33 = sphi 0, %s32
    %s47 = sphi 0, %s33
    %s53 = sphi 0, %s55
    %s56 = sphi 0, %s53
    %s57 = sphi 0, %s56
    %s73 = sphi 0, %s57
    %s77 = sphi 0, %s77
    %s79 = sphi 0, %s77
    %s80 = sphi 0, %s79
    %s94 = sphi 0, %s80
    %s98 = sphi 0, %s98
    %s100 = sphi 0, %s98
    %s101 = sphi 0, %s100
    %s115 = sphi 0, %s101
    %s123 = sphi 0, %s125
    %s126 = sphi 0, %s123
    %s127 = sphi 0, %s126
    %s143 = sphi 0, %s127
  $region4: #{stem_forward.6} parent=0 // loop_header_branch
    %13 = sbr.rel (%p11) target = $region8
  $region5: #{stem_forward.6} parent=0 // loop_body
    %s15 = ssub.s32 %s10, 1
    %s16 = ssub.s32 %s10, 2
    %s23 = sadd.s32 1, %s18
    %p24 = scmp.ge.s32.totalorder %s23, 1
    %s25 = scalar_select %p24, 0, %s23
    %s26 = sadd.s32 1, %s17
    %s27 = scalar_select %p24, %s26, %s17
    %p28 = scmp.ge.s32.totalorder %s27, 2
    %s29 = scalar_select %p28, 0, %s27
    %s31 = sadd.s32 %s30, 1
    %p34 = scmp.eq.s32.totalorder %s10, 1
    %p35 = scmp.ne.s32.totalorder %s30, %s32
    %p36 = scmp.eq.s32.totalorder %s10, 0
    %p37 = por %p35, %p36
    %p38 = scmp.ne.s32.totalorder %s30, %s32
    %p39 = scmp.eq.s32.totalorder %s15, 1
    %p40 = por %p38, %p39
    %p41 = scmp.ne.s32.totalorder %s32, %s33
    %p42 = scmp.eq.s32.totalorder %s15, 0
    %p43 = por %p41, %p42
    %p44 = scmp.ne.s32.totalorder %s32, %s33
    %p45 = scmp.eq.s32.totalorder %s16, 1
    %p46 = por %p44, %p45
    %p48 = scmp.ne.s32.totalorder %s33, %s47
    %p49 = scmp.eq.s32.totalorder %s16, 0
    %p50 = por %p48, %p49
    %s51 = ssub.s32 %s18, %s25
    %p52 = scmp.eq.s32.totalorder %s51, 0
    %s54 = sadd.s32 %s53, 1
    %s55 = scalar_select %p52, %s53, %s54
    %p58 = pneg %p52
    %p59 = scmp.eq.s32.totalorder %s10, 1
    %p60 = por %p58, %p59
    %p61 = scmp.ne.s32.totalorder %s53, %s56
    %p62 = scmp.eq.s32.totalorder %s10, 0
    %p63 = por %p61, %p62
    %p64 = scmp.ne.s32.totalorder %s53, %s56
    %p65 = scmp.eq.s32.totalorder %s15, 1
    %p66 = por %p64, %p65
    %p67 = scmp.ne.s32.totalorder %s56, %s57
    %p68 = scmp.eq.s32.totalorder %s15, 0
    %p69 = por %p67, %p68
    %p70 = scmp.ne.s32.totalorder %s56, %s57
    %p71 = scmp.eq.s32.totalorder %s16, 1
    %p72 = por %p70, %p71
    %p74 = scmp.ne.s32.totalorder %s57, %s73
    %p75 = scmp.eq.s32.totalorder %s16, 0
    %p76 = por %p74, %p75
    %s78 = sadd.s32 %s77, 1
    %p81 = scmp.eq.s32.totalorder %s10, 1
    %p82 = scmp.ne.s32.totalorder %s77, %s79
    %p83 = scmp.eq.s32.totalorder %s10, 0
    %p84 = por %p82, %p83
    %p85 = scmp.ne.s32.totalorder %s77, %s79
    %p86 = scmp.eq.s32.totalorder %s15, 1
    %p87 = por %p85, %p86
    %p88 = scmp.ne.s32.totalorder %s79, %s80
    %p89 = scmp.eq.s32.totalorder %s15, 0
    %p90 = por %p88, %p89
    %p91 = scmp.ne.s32.totalorder %s79, %s80
    %p92 = scmp.eq.s32.totalorder %s16, 1
    %p93 = por %p91, %p92
    %p95 = scmp.ne.s32.totalorder %s80, %s94
    %p96 = scmp.eq.s32.totalorder %s16, 0
    %p97 = por %p95, %p96
    %s99 = sadd.s32 %s98, 1
    %p102 = scmp.eq.s32.totalorder %s10, 1
    %p103 = scmp.ne.s32.totalorder %s98, %s100
    %p104 = scmp.eq.s32.totalorder %s10, 0
    %p105 = por %p103, %p104
    %p106 = scmp.ne.s32.totalorder %s98, %s100
    %p107 = scmp.eq.s32.totalorder %s15, 1
    %p108 = por %p106, %p107
    %p109 = scmp.ne.s32.totalorder %s100, %s101
    %p110 = scmp.eq.s32.totalorder %s15, 0
    %p111 = por %p109, %p110
    %p112 = scmp.ne.s32.totalorder %s100, %s101
    %p113 = scmp.eq.s32.totalorder %s16, 1
    %p114 = por %p112, %p113
    %p116 = scmp.ne.s32.totalorder %s101, %s115
    %p117 = scmp.eq.s32.totalorder %s16, 0
    %p118 = por %p116, %p117
    %s119 = smul.u32 %s18, %s17
    %s120 = smul.u32 %s25, %s29
    %s121 = ssub.s32 %s119, %s120
    %p122 = scmp.eq.s32.totalorder %s121, 0
    %s124 = sadd.s32 %s123, 1
    %s125 = scalar_select %p122, %s123, %s124
    %p128 = pneg %p122
    %p129 = scmp.eq.s32.totalorder %s10, 1
    %p130 = por %p128, %p129
    %p131 = scmp.ne.s32.totalorder %s123, %s126
    %p132 = scmp.eq.s32.totalorder %s10, 0
    %p133 = por %p131, %p132
    %p134 = scmp.ne.s32.totalorder %s123, %s126
    %p135 = scmp.eq.s32.totalorder %s15, 1
    %p136 = por %p134, %p135
    %p137 = scmp.ne.s32.totalorder %s126, %s127
    %p138 = scmp.eq.s32.totalorder %s15, 0
    %p139 = por %p137, %p138
    %p140 = scmp.ne.s32.totalorder %s126, %s127
    %p141 = scmp.eq.s32.totalorder %s16, 1
    %p142 = por %p140, %p141
    %p144 = scmp.ne.s32.totalorder %s127, %s143
    %p145 = scmp.eq.s32.totalorder %s16, 0
    %p146 = por %p144, %p145
    %p147 = scmp.le.s32.totalorder 1, %s10
    %p148 = scmp.lt.s32.totalorder %s10, 3
    %p149 = pnand %p147, %p148
    %p150 = pneg %p149
    // Predicated region
    $region9: #{stem_forward.6} parent=5 // pred_check
      _
    $region10: #{stem_forward.6} parent=5 // pred_check_branch
      %152 = sbr.rel (%p149) target = $region12
    $region11: #{stem_forward.6} parent=5 // pred_region
      %s153 = ssub.s32 %s10, 1
      // Predicated region
      $region13: #{stem_forward.6} parent=11 // pred_check
        %p154 = pneg %p43
      $region14: #{stem_forward.6} parent=11 // pred_check_branch
        %156 = sbr.rel (%p154) target = $region16
      $region15: #{stem_forward.6} parent=11 // pred_region
        _
      $region16: #{stem_forward.6} parent=11 // pred_fallthru
        _
      // Predicated region
      $region17: #{stem_forward.6} parent=11 // pred_check
        %p157 = pneg %p69
      $region18: #{stem_forward.6} parent=11 // pred_check_branch
        %159 = sbr.rel (%p157) target = $region20
      $region19: #{stem_forward.6} parent=11 // pred_region
        %s160 = smul.u32 3, %s20
        %p161 = scmp.lt.s32.totalorder %s160, 2
        %s162 = scalar_select %p161, %s160, 2
        %s163 = smul.addr %s162, 4
        %s164 = scalar_lea.vmem %s1, %s163
        %s165 = smul.u32 3, %s20
      $region20: #{stem_forward.6} parent=11 // pred_fallthru
        _
      // Predicated region
      $region21: #{stem_forward.6} parent=11 // pred_check
        %p166 = pneg %p90
      $region22: #{stem_forward.6} parent=11 // pred_check_branch
        %168 = sbr.rel (%p166) target = $region24
      $region23: #{stem_forward.6} parent=11 // pred_region
        _
      $region24: #{stem_forward.6} parent=11 // pred_fallthru
        _
      // Predicated region
      $region25: #{stem_forward.6} parent=11 // pred_check
        %p169 = pneg %p111
      $region26: #{stem_forward.6} parent=11 // pred_check_branch
        %171 = sbr.rel (%p169) target = $region28
      $region27: #{stem_forward.6} parent=11 // pred_region
        _
      $region28: #{stem_forward.6} parent=11 // pred_fallthru
        _
    $region12: #{stem_forward.6} parent=5 // pred_fallthru
      _
    %p172 = scmp.lt.s32.totalorder %s10, 2
    // Predicated region
    $region29: #{stem_forward.6} parent=5 // pred_check
      %p173 = pneg %p172
    $region30: #{stem_forward.6} parent=5 // pred_check_branch
      %175 = sbr.rel (%p173) target = $region32
    $region31: #{stem_forward.6} parent=5 // pred_region
      _
    $region32: #{stem_forward.6} parent=5 // pred_fallthru
      _
    %p176 = scmp.le.s32.totalorder 1, %s10
    %p177 = scmp.lt.s32.totalorder %s10, 3
    %p178 = pnand %p176, %p177
    %p179 = pneg %p178
    // Predicated region
    $region33: #{stem_forward.6} parent=5 // pred_check
      _
    $region34: #{stem_forward.6} parent=5 // pred_check_branch
      %181 = sbr.rel (%p178) target = $region36
    $region35: #{stem_forward.6} parent=5 // pred_region
      %s182 = ssub.s32 %s10, 1
      %p183 = pneg %p43
      %p184 = pneg %p40
      %s185 = smul.u32 3, %s20
      %p186 = scmp.lt.s32.totalorder %s185, 2
      %s187 = scalar_select %p186, %s185, 2
      %s188 = smul.addr %s187, 4
      %s189 = scalar_lea.vmem %s1, %s188
      %p190 = pneg %p69
      %p191 = pneg %p66
      %p192 = pneg %p90
      %p193 = pneg %p87
      %p194 = pneg %p111
      %p195 = pneg %p108
      %p196 = pneg %p139
      %p197 = pneg %p136
      %s198 = smul.u32 %s20, %s19
      %s199 = smul.u32 3, %s198
      %p200 = scmp.lt.s32.totalorder %s199, 2
      %s201 = scalar_select %p200, %s199, 2
      %s202 = smul.addr %s201, 8
      %s203 = scalar_lea.vmem %s4, %s202
      %s204 = smul.u32 3, %s20
      %p205 = scmp.lt.s32.totalorder %s204, 2
      %s206 = scalar_select %p205, %s204, 2
      %s207 = smul.addr %s206, 4
      %s208 = scalar_lea.vmem %s1, %s207
      %s209 = smul.u32 3, %s20
      %s210 = smul.u32 %s20, %s19
      %s211 = smul.u32 3, %s210
      %p212 = scmp.lt.s32.totalorder %s211, 2
      %s213 = scalar_select %p212, %s211, 2
      %s214 = smul.addr %s213, 8
      %s215 = scalar_lea.vmem %s4, %s214
      %s216 = smul.u32 %s20, %s19
      %s217 = smul.u32 3, %s216
      %v219 = vld [vmem:[%s0] sm:$0xff]
      %v220 = vld [vmem:[%s0 + $0x8] sm:$0xf]
      %v221 = vld [vmem:[%s0 + $0xc] sm:$0xff]
      %v222 = vld [vmem:[%s0 + $0x14] sm:$0xf]
      %v223 = vld [vmem:[%s0 + $0x18] sm:$0xff]
      %v224 = vld [vmem:[%s0 + $0x20] sm:$0xf]
      %v225 = vld [vmem:[%s0 + $0x24] sm:$0xff]
      %v226 = vld [vmem:[%s0 + $0x2c] sm:$0xf]
      %v227 = vld [vmem:[%s0 + $0x30] sm:$0xff]
      %v228 = vld [vmem:[%s0 + $0x38] sm:$0xf]
      %v229 = vld [vmem:[%s0 + $0x3c] sm:$0xff]
      %v230 = vld [vmem:[%s0 + $0x44] sm:$0xf]
      %v231 = vld [vmem:[%s0 + $0x48] sm:$0xff]
      %v232 = vld [vmem:[%s0 + $0x50] sm:$0xf]
      %v233 = vld [vmem:[%s0 + $0x54] sm:$0xff]
      %v234 = vld [vmem:[%s0 + $0x5c] sm:$0xf]
      %v235 = vld [vmem:[%s208] sm:$0xff]
      %v236 = vld [vmem:[%s208 + $0x8] sm:$0xf]
      %v237 = vld [vmem:[%s208 + $0xc] sm:$0xff]
      %v238 = vld [vmem:[%s208 + $0x14] sm:$0xf]
      %v239 = vld [vmem:[%s208 + $0x18] sm:$0xff]
      %v240 = vld [vmem:[%s208 + $0x20] sm:$0xf]
      %v241 = vld [vmem:[%s208 + $0x24] sm:$0xff]
      %v242 = vld [vmem:[%s208 + $0x2c] sm:$0xf]
      %v243 = vld [vmem:[%s208 + $0x30] sm:$0xff]
      %v244 = vld [vmem:[%s208 + $0x38] sm:$0xf]
      %v245 = vld [vmem:[%s208 + $0x3c] sm:$0xff]
      %v246 = vld [vmem:[%s208 + $0x44] sm:$0xf]
      %v247 = vld [vmem:[%s208 + $0x48] sm:$0xff]
      %v248 = vld [vmem:[%s208 + $0x50] sm:$0xf]
      %v249 = vld [vmem:[%s208 + $0x54] sm:$0xff]
      %v250 = vld [vmem:[%s208 + $0x5c] sm:$0xf]
      %v251 = vld [vmem:[%s208 + $0x60] sm:$0xff]
      %v252 = vld [vmem:[%s208 + $0x68] sm:$0xf]
      %v253 = vld [vmem:[%s208 + $0x6c] sm:$0xff]
      %v254 = vld [vmem:[%s208 + $0x74] sm:$0xf]
      %v255 = vld [vmem:[%s208 + $0x78] sm:$0xff]
      %v256 = vld [vmem:[%s208 + $0x80] sm:$0xf]
      %v257 = vld [vmem:[%s208 + $0x84] sm:$0xff]
      %v258 = vld [vmem:[%s208 + $0x8c] sm:$0xf]
      %v259 = vld [vmem:[%s208 + $0x90] sm:$0xff]
      %v260 = vld [vmem:[%s208 + $0x98] sm:$0xf]
      %v261 = vld [vmem:[%s208 + $0x9c] sm:$0xff]
      %v262 = vld [vmem:[%s208 + $0xa4] sm:$0xf]
      %v263 = vld [vmem:[%s208 + $0xa8] sm:$0xff]
      %v264 = vld [vmem:[%s208 + $0xb0] sm:$0xf]
      %v265 = vld [vmem:[%s208 + $0xb4] sm:$0xff]
      %v266 = vld [vmem:[%s208 + $0xbc] sm:$0xf]
      %v267 = vld [vmem:[%s208 + $0xc0] sm:$0xff]
      %v268 = vld [vmem:[%s208 + $0xc8] sm:$0xf]
      %v269 = vld [vmem:[%s208 + $0xcc] sm:$0xff]
      %v270 = vld [vmem:[%s208 + $0xd4] sm:$0xf]
      %v271 = vld [vmem:[%s208 + $0xd8] sm:$0xff]
      %v272 = vld [vmem:[%s208 + $0xe0] sm:$0xf]
      %v273 = vld [vmem:[%s208 + $0xe4] sm:$0xff]
      %v274 = vld [vmem:[%s208 + $0xec] sm:$0xf]
      %v275 = vld [vmem:[%s208 + $0xf0] sm:$0xff]
      %v276 = vld [vmem:[%s208 + $0xf8] sm:$0xf]
      %v277 = vld [vmem:[%s208 + $0xfc] sm:$0xff]
      %v278 = vld [vmem:[%s208 + $0x104] sm:$0xf]
      %v279 = vld [vmem:[%s208 + $0x108] sm:$0xff]
      %v280 = vld [vmem:[%s208 + $0x110] sm:$0xf]
      %v281 = vld [vmem:[%s208 + $0x114] sm:$0xff]
      %v282 = vld [vmem:[%s208 + $0x11c] sm:$0xf]
      %v283 = vld [vmem:[%s208 + $0x120] sm:$0xff]
      %v284 = vld [vmem:[%s208 + $0x128] sm:$0xf]
      %v285 = vld [vmem:[%s208 + $0x12c] sm:$0xff]
      %v286 = vld [vmem:[%s208 + $0x134] sm:$0xf]
      %v287 = vld [vmem:[%s208 + $0x138] sm:$0xff]
      %v288 = vld [vmem:[%s208 + $0x140] sm:$0xf]
      %v289 = vld [vmem:[%s208 + $0x144] sm:$0xff]
      %v290 = vld [vmem:[%s208 + $0x14c] sm:$0xf]
      %v291 = vld [vmem:[%s208 + $0x150] sm:$0xff]
      %v292 = vld [vmem:[%s208 + $0x158] sm:$0xf]
      %v293 = vld [vmem:[%s208 + $0x15c] sm:$0xff]
      %v294 = vld [vmem:[%s208 + $0x164] sm:$0xf]
      %v295 = vld [vmem:[%s208 + $0x168] sm:$0xff]
      %v296 = vld [vmem:[%s208 + $0x170] sm:$0xf]
      %v297 = vld [vmem:[%s208 + $0x174] sm:$0xff]
      %v298 = vld [vmem:[%s208 + $0x17c] sm:$0xf]
      %v299 = vld [vmem:[%s208 + $0x180] sm:$0xff]
      %v300 = vld [vmem:[%s208 + $0x188] sm:$0xf]
      %v301 = vld [vmem:[%s208 + $0x18c] sm:$0xff]
      %v302 = vld [vmem:[%s208 + $0x194] sm:$0xf]
      %v303 = vld [vmem:[%s208 + $0x198] sm:$0xff]
      %v304 = vld [vmem:[%s208 + $0x1a0] sm:$0xf]
      %v305 = vld [vmem:[%s208 + $0x1a4] sm:$0xff]
      %v306 = vld [vmem:[%s208 + $0x1ac] sm:$0xf]
      %v323 = vunpack.c.l.b16 %v219
      %v324 = vunpack.c.h.b16 %v219
      %v325 = vunpack.c.l.b16 %v220
      %v326 = vunpack.c.l.b16 %v221
      %v327 = vunpack.c.h.b16 %v221
      %v328 = vunpack.c.l.b16 %v222
      %v329 = vunpack.c.l.b16 %v223
      %v330 = vunpack.c.h.b16 %v223
      %v331 = vunpack.c.l.b16 %v224
      %v332 = vunpack.c.l.b16 %v225
      %v333 = vunpack.c.h.b16 %v225
      %v334 = vunpack.c.l.b16 %v226
      %v335 = vunpack.c.l.b16 %v227
      %v336 = vunpack.c.h.b16 %v227
      %v337 = vunpack.c.l.b16 %v228
      %v338 = vunpack.c.l.b16 %v229
      %v339 = vunpack.c.h.b16 %v229
      %v340 = vunpack.c.l.b16 %v230
      %v341 = vunpack.c.l.b16 %v231
      %v342 = vunpack.c.h.b16 %v231
      %v343 = vunpack.c.l.b16 %v232
      %v344 = vunpack.c.l.b16 %v233
      %v345 = vunpack.c.h.b16 %v233
      %v346 = vunpack.c.l.b16 %v234
      %v347 = vpack.c.b16 %v326, %v323
      %v348 = vpack.c.b16 %v327, %v324
      %v349 = vpack.c.b16 %v328, %v325
      %v350 = vpack.c.b16 %v332, %v329
      %v351 = vpack.c.b16 %v333, %v330
      %v352 = vpack.c.b16 %v334, %v331
      %v353 = vpack.c.b16 %v338, %v335
      %v354 = vpack.c.b16 %v339, %v336
      %v355 = vpack.c.b16 %v340, %v337
      %v356 = vpack.c.b16 %v344, %v341
      %v357 = vpack.c.b16 %v345, %v342
      %v358 = vpack.c.b16 %v346, %v343
      %v439 = vunpack.c.l.b16 %v235
      %v440 = vunpack.c.h.b16 %v235
      %v441 = vunpack.c.l.b16 %v236
      %v442 = vunpack.c.l.b16 %v237
      %v443 = vunpack.c.h.b16 %v237
      %v444 = vunpack.c.l.b16 %v238
      %v445 = vunpack.c.l.b16 %v239
      %v446 = vunpack.c.h.b16 %v239
      %v447 = vunpack.c.l.b16 %v240
      %v448 = vunpack.c.l.b16 %v241
      %v449 = vunpack.c.h.b16 %v241
      %v450 = vunpack.c.l.b16 %v242
      %v451 = vunpack.c.l.b16 %v243
      %v452 = vunpack.c.h.b16 %v243
      %v453 = vunpack.c.l.b16 %v244
      %v454 = vunpack.c.l.b16 %v245
      %v455 = vunpack.c.h.b16 %v245
      %v456 = vunpack.c.l.b16 %v246
      %v457 = vunpack.c.l.b16 %v247
      %v458 = vunpack.c.h.b16 %v247
      %v459 = vunpack.c.l.b16 %v248
      %v460 = vunpack.c.l.b16 %v249
      %v461 = vunpack.c.h.b16 %v249
      %v462 = vunpack.c.l.b16 %v250
      %v463 = vunpack.c.l.b16 %v251
      %v464 = vunpack.c.h.b16 %v251
      %v465 = vunpack.c.l.b16 %v252
      %v466 = vunpack.c.l.b16 %v253
      %v467 = vunpack.c.h.b16 %v253
      %v468 = vunpack.c.l.b16 %v254
      %v469 = vunpack.c.l.b16 %v255
      %v470 = vunpack.c.h.b16 %v255
      %v471 = vunpack.c.l.b16 %v256
      %v472 = vunpack.c.l.b16 %v257
      %v473 = vunpack.c.h.b16 %v257
      %v474 = vunpack.c.l.b16 %v258
      %v475 = vunpack.c.l.b16 %v259
      %v476 = vunpack.c.h.b16 %v259
      %v477 = vunpack.c.l.b16 %v260
      %v478 = vunpack.c.l.b16 %v261
      %v479 = vunpack.c.h.b16 %v261
      %v480 = vunpack.c.l.b16 %v262
      %v481 = vunpack.c.l.b16 %v263
      %v482 = vunpack.c.h.b16 %v263
      %v483 = vunpack.c.l.b16 %v264
      %v484 = vunpack.c.l.b16 %v265
      %v485 = vunpack.c.h.b16 %v265
      %v486 = vunpack.c.l.b16 %v266
      %v487 = vunpack.c.l.b16 %v267
      %v488 = vunpack.c.h.b16 %v267
      %v489 = vunpack.c.l.b16 %v268
      %v490 = vunpack.c.l.b16 %v269
      %v491 = vunpack.c.h.b16 %v269
      %v492 = vunpack.c.l.b16 %v270
      %v493 = vunpack.c.l.b16 %v271
      %v494 = vunpack.c.h.b16 %v271
      %v495 = vunpack.c.l.b16 %v272
      %v496 = vunpack.c.l.b16 %v273
      %v497 = vunpack.c.h.b16 %v273
      %v498 = vunpack.c.l.b16 %v274
      %v499 = vunpack.c.l.b16 %v275
      %v500 = vunpack.c.h.b16 %v275
      %v501 = vunpack.c.l.b16 %v276
      %v502 = vunpack.c.l.b16 %v277
      %v503 = vunpack.c.h.b16 %v277
      %v504 = vunpack.c.l.b16 %v278
      %v505 = vunpack.c.l.b16 %v279
      %v506 = vunpack.c.h.b16 %v279
      %v507 = vunpack.c.l.b16 %v280
      %v508 = vunpack.c.l.b16 %v281
      %v509 = vunpack.c.h.b16 %v281
      %v510 = vunpack.c.l.b16 %v282
      %v511 = vunpack.c.l.b16 %v283
      %v512 = vunpack.c.h.b16 %v283
      %v513 = vunpack.c.l.b16 %v284
      %v514 = vunpack.c.l.b16 %v285
      %v515 = vunpack.c.h.b16 %v285
      %v516 = vunpack.c.l.b16 %v286
      %v517 = vunpack.c.l.b16 %v287
      %v518 = vunpack.c.h.b16 %v287
      %v519 = vunpack.c.l.b16 %v288
      %v520 = vunpack.c.l.b16 %v289
      %v521 = vunpack.c.h.b16 %v289
      %v522 = vunpack.c.l.b16 %v290
      %v523 = vunpack.c.l.b16 %v291
      %v524 = vunpack.c.h.b16 %v291
      %v525 = vunpack.c.l.b16 %v292
      %v526 = vunpack.c.l.b16 %v293
      %v527 = vunpack.c.h.b16 %v293
      %v528 = vunpack.c.l.b16 %v294
      %v529 = vunpack.c.l.b16 %v295
      %v530 = vunpack.c.h.b16 %v295
      %v531 = vunpack.c.l.b16 %v296
      %v532 = vunpack.c.l.b16 %v297
      %v533 = vunpack.c.h.b16 %v297
      %v534 = vunpack.c.l.b16 %v298
      %v535 = vunpack.c.l.b16 %v299
      %v536 = vunpack.c.h.b16 %v299
      %v537 = vunpack.c.l.b16 %v300
      %v538 = vunpack.c.l.b16 %v301
      %v539 = vunpack.c.h.b16 %v301
      %v540 = vunpack.c.l.b16 %v302
      %v541 = vunpack.c.l.b16 %v303
      %v542 = vunpack.c.h.b16 %v303
      %v543 = vunpack.c.l.b16 %v304
      %v544 = vunpack.c.l.b16 %v305
      %v545 = vunpack.c.h.b16 %v305
      %v546 = vunpack.c.l.b16 %v306
      %v547 = vpack.c.b16 %v442, %v439
      %v548 = vpack.c.b16 %v443, %v440
      %v549 = vpack.c.b16 %v444, %v441
      %v550 = vpack.c.b16 %v448, %v445
      %v551 = vpack.c.b16 %v449, %v446
      %v552 = vpack.c.b16 %v450, %v447
      %v553 = vpack.c.b16 %v454, %v451
      %v554 = vpack.c.b16 %v455, %v452
      %v555 = vpack.c.b16 %v456, %v453
      %v556 = vpack.c.b16 %v460, %v457
      %v557 = vpack.c.b16 %v461, %v458
      %v558 = vpack.c.b16 %v462, %v459
      %v559 = vpack.c.b16 %v466, %v463
      %v560 = vpack.c.b16 %v467, %v464
      %v561 = vpack.c.b16 %v468, %v465
      %v562 = vpack.c.b16 %v472, %v469
      %v563 = vpack.c.b16 %v473, %v470
      %v564 = vpack.c.b16 %v474, %v471
      %v565 = vpack.c.b16 %v478, %v475
      %v566 = vpack.c.b16 %v479, %v476
      %v567 = vpack.c.b16 %v480, %v477
      %v568 = vpack.c.b16 %v484, %v481
      %v569 = vpack.c.b16 %v485, %v482
      %v570 = vpack.c.b16 %v486, %v483
      %v571 = vpack.c.b16 %v490, %v487
      %v572 = vpack.c.b16 %v491, %v488
      %v573 = vpack.c.b16 %v492, %v489
      %v574 = vpack.c.b16 %v496, %v493
      %v575 = vpack.c.b16 %v497, %v494
      %v576 = vpack.c.b16 %v498, %v495
      %v577 = vpack.c.b16 %v502, %v499
      %v578 = vpack.c.b16 %v503, %v500
      %v579 = vpack.c.b16 %v504, %v501
      %v580 = vpack.c.b16 %v508, %v505
      %v581 = vpack.c.b16 %v509, %v506
      %v582 = vpack.c.b16 %v510, %v507
      %v583 = vpack.c.b16 %v514, %v511
      %v584 = vpack.c.b16 %v515, %v512
      %v585 = vpack.c.b16 %v516, %v513
      %v586 = vpack.c.b16 %v520, %v517
      %v587 = vpack.c.b16 %v521, %v518
      %v588 = vpack.c.b16 %v522, %v519
      %v589 = vpack.c.b16 %v526, %v523
      %v590 = vpack.c.b16 %v527, %v524
      %v591 = vpack.c.b16 %v528, %v525
      %v592 = vpack.c.b16 %v532, %v529
      %v593 = vpack.c.b16 %v533, %v530
      %v594 = vpack.c.b16 %v534, %v531
      %v595 = vpack.c.b16 %v538, %v535
      %v596 = vpack.c.b16 %v539, %v536
      %v597 = vpack.c.b16 %v540, %v537
      %v598 = vpack.c.b16 %v544, %v541
      %v599 = vpack.c.b16 %v545, %v542
      %v600 = vpack.c.b16 %v546, %v543
      %vm655 = vcmask 261120
      %v657 = vsel %vm655, %v349, 0
      %v660 = vsel %vm655, %v352, 0
      %v663 = vsel %vm655, %v355, 0
      %v666 = vsel %vm655, %v358, 0
      %668 = vmatprep.subr.bf16.mxu0 %v569
      %669 = vmatpush1.bf16.msra.mxu0 %v568
      %670 = vmatprep.subr.bf16.mxu0 %v566
      %671 = vmatpush1.bf16.msra.mxu0 %v565
      %672 = vmatprep.subr.bf16.mxu0 %v563
      %673 = vmatpush1.bf16.msra.mxu0 %v562
      %674 = vmatprep.subr.bf16.mxu0 %v560
      %675 = vmatpush1.bf16.msra.mxu0 %v559
      %676 = vmatprep.subr.bf16.mxu0 %v557
      %677 = vmatpush1.bf16.msra.mxu0 %v556
      %678 = vmatprep.subr.bf16.mxu0 %v554
      %679 = vmatpush1.bf16.msra.mxu0 %v553
      %680 = vmatprep.subr.bf16.mxu0 %v551
      %681 = vmatpush1.bf16.msra.mxu0 %v550
      %682 = vmatprep.subr.bf16.mxu0 %v548
      %683 = vmatpush1.bf16.msra.mxu0 %v547
      %684 = vmatprep.subr.bf16.mxu0 %v593
      %685 = vmatpush2.bf16.msra.mxu0 %v592
      %686 = vmatprep.subr.bf16.mxu0 %v590
      %687 = vmatpush2.bf16.msra.mxu0 %v589
      %688 = vmatprep.subr.bf16.mxu0 %v587
      %689 = vmatpush2.bf16.msra.mxu0 %v586
      %690 = vmatprep.subr.bf16.mxu0 %v584
      %691 = vmatpush2.bf16.msra.mxu0 %v583
      %692 = vmatprep.subr.bf16.mxu0 %v581
      %693 = vmatpush2.bf16.msra.mxu0 %v580
      %694 = vmatprep.subr.bf16.mxu0 %v578
      %695 = vmatpush2.bf16.msra.mxu0 %v577
      %696 = vmatprep.subr.bf16.mxu0 %v575
      %697 = vmatpush2.bf16.msra.mxu0 %v574
      %698 = vmatprep.subr.bf16.mxu0 %v572
      %699 = vmatpush2.bf16.msra.mxu0 %v571
      %700 = vmatprep.mubr.bf16.mxu0 %v348
      %701 = vmatmul.mubr.bf16.gmra.mxu0 %v347
      %v702 = vpop.f32.mrf.mxu0
      %v703 = vadd.f32 0.0, %v702
      %v704 = vpop.f32.mrf.mxu0
      %v705 = vadd.f32 0.0, %v704
      %v706 = vpop.f32.mrf.mxu0
      %v707 = vadd.f32 0.0, %v706
      %v708 = vpop.f32.mrf.mxu0
      %v709 = vadd.f32 0.0, %v708
      %710 = vmatprep.mubr.bf16.mxu0 %v351
      %711 = vmatmul.mubr.bf16.gmra.mxu0 %v350
      %v712 = vpop.f32.mrf.mxu0
      %v713 = vadd.f32 0.0, %v712
      %v714 = vpop.f32.mrf.mxu0
      %v715 = vadd.f32 0.0, %v714
      %v716 = vpop.f32.mrf.mxu0
      %v717 = vadd.f32 0.0, %v716
      %v718 = vpop.f32.mrf.mxu0
      %v719 = vadd.f32 0.0, %v718
      %720 = vmatprep.mubr.bf16.mxu0 %v354
      %721 = vmatmul.mubr.bf16.gmra.mxu0 %v353
      %v722 = vpop.f32.mrf.mxu0
      %v723 = vadd.f32 0.0, %v722
      %v724 = vpop.f32.mrf.mxu0
      %v725 = vadd.f32 0.0, %v724
      %v726 = vpop.f32.mrf.mxu0
      %v727 = vadd.f32 0.0, %v726
      %v728 = vpop.f32.mrf.mxu0
      %v729 = vadd.f32 0.0, %v728
      %730 = vmatprep.mubr.bf16.mxu0 %v357
      %731 = vmatmul.mubr.bf16.gmra.mxu0 %v356
      %v732 = vpop.f32.mrf.mxu0
      %v733 = vadd.f32 0.0, %v732
      %v734 = vpop.f32.mrf.mxu0
      %v735 = vadd.f32 0.0, %v734
      %v736 = vpop.f32.mrf.mxu0
      %v737 = vadd.f32 0.0, %v736
      %v738 = vpop.f32.mrf.mxu0
      %v739 = vadd.f32 0.0, %v738
      %740 = vdwg.mxu0
      %741 = vmatprep.subr.bf16.mxu0 0
      %742 = vmatpush1.bf16.msra.mxu0 0
      %743 = vmatprep.subr.bf16.mxu0 0
      %744 = vmatpush1.bf16.msra.mxu0 0
      %745 = vmatprep.subr.bf16.mxu0 0
      %746 = vmatpush1.bf16.msra.mxu0 0
      %747 = vmatprep.subr.bf16.mxu0 0
      %748 = vmatpush1.bf16.msra.mxu0 0
      %749 = vmatprep.subr.bf16.mxu0 0
      %750 = vmatpush1.bf16.msra.mxu0 0
      %751 = vmatprep.subr.bf16.mxu0 0
      %752 = vmatpush1.bf16.msra.mxu0 0
      %753 = vmatprep.subr.bf16.mxu0 %v599
      %754 = vmatpush1.bf16.msra.mxu0 %v598
      %755 = vmatprep.subr.bf16.mxu0 %v596
      %756 = vmatpush1.bf16.msra.mxu0 %v595
      %757 = vmatprep.subr.bf16.mxu0 0
      %758 = vmatpush2.bf16.msra.mxu0 0
      %759 = vmatprep.subr.bf16.mxu0 0
      %760 = vmatpush2.bf16.msra.mxu0 0
      %761 = vmatprep.subr.bf16.mxu0 0
      %762 = vmatpush2.bf16.msra.mxu0 0
      %763 = vmatprep.subr.bf16.mxu0 0
      %764 = vmatpush2.bf16.msra.mxu0 0
      %765 = vmatprep.subr.bf16.mxu0 0
      %766 = vmatpush2.bf16.msra.mxu0 0
      %767 = vmatprep.subr.bf16.mxu0 0
      %768 = vmatpush2.bf16.msra.mxu0 0
      %769 = vmatprep.subr.bf16.mxu0 0
      %770 = vmatpush2.bf16.msra.mxu0 0
      %771 = vmatprep.subr.bf16.mxu0 0
      %772 = vmatpush2.bf16.msra.mxu0 0
      %773 = vmatprep.mubr.bf16.mxu0 0
      %774 = vmatmul.mubr.bf16.gmra.mxu0 %v657
      %v775 = vpop.f32.mrf.mxu0
      %v776 = vadd.f32 %v703, %v775
      %v777 = vpop.f32.mrf.mxu0
      %v778 = vadd.f32 %v705, %v777
      %v779 = vpop.f32.mrf.mxu0
      %v780 = vadd.f32 %v707, %v779
      %v781 = vpop.f32.mrf.mxu0
      %v782 = vadd.f32 %v709, %v781
      %783 = vmatprep.mubr.bf16.mxu0 0
      %784 = vmatmul.mubr.bf16.gmra.mxu0 %v660
      %v785 = vpop.f32.mrf.mxu0
      %v786 = vadd.f32 %v713, %v785
      %v787 = vpop.f32.mrf.mxu0
      %v788 = vadd.f32 %v715, %v787
      %v789 = vpop.f32.mrf.mxu0
      %v790 = vadd.f32 %v717, %v789
      %v791 = vpop.f32.mrf.mxu0
      %v792 = vadd.f32 %v719, %v791
      %793 = vmatprep.mubr.bf16.mxu0 0
      %794 = vmatmul.mubr.bf16.gmra.mxu0 %v663
      %v795 = vpop.f32.mrf.mxu0
      %v796 = vadd.f32 %v723, %v795
      %v797 = vpop.f32.mrf.mxu0
      %v798 = vadd.f32 %v725, %v797
      %v799 = vpop.f32.mrf.mxu0
      %v800 = vadd.f32 %v727, %v799
      %v801 = vpop.f32.mrf.mxu0
      %v802 = vadd.f32 %v729, %v801
      %803 = vmatprep.mubr.bf16.mxu0 0
      %804 = vmatmul.mubr.bf16.gmra.mxu0 %v666
      %v805 = vpop.f32.mrf.mxu0
      %v806 = vadd.f32 %v733, %v805
      %v807 = vpop.f32.mrf.mxu0
      %v808 = vadd.f32 %v735, %v807
      %v809 = vpop.f32.mrf.mxu0
      %v810 = vadd.f32 %v737, %v809
      %v811 = vpop.f32.mrf.mxu0
      %v812 = vadd.f32 %v739, %v811
      %813 = vdwg.mxu0
      %814 = vmatprep.subr.bf16.mxu0 0
      %815 = vmatpush1.bf16.msra.mxu0 %v570
      %816 = vmatprep.subr.bf16.mxu0 0
      %817 = vmatpush1.bf16.msra.mxu0 %v567
      %818 = vmatprep.subr.bf16.mxu0 0
      %819 = vmatpush1.bf16.msra.mxu0 %v564
      %820 = vmatprep.subr.bf16.mxu0 0
      %821 = vmatpush1.bf16.msra.mxu0 %v561
      %822 = vmatprep.subr.bf16.mxu0 0
      %823 = vmatpush1.bf16.msra.mxu0 %v558
      %824 = vmatprep.subr.bf16.mxu0 0
      %825 = vmatpush1.bf16.msra.mxu0 %v555
      %826 = vmatprep.subr.bf16.mxu0 0
      %827 = vmatpush1.bf16.msra.mxu0 %v552
      %828 = vmatprep.subr.bf16.mxu0 0
      %829 = vmatpush1.bf16.msra.mxu0 %v549
      %830 = vmatprep.subr.bf16.mxu0 0
      %831 = vmatpush2.bf16.msra.mxu0 %v594
      %832 = vmatprep.subr.bf16.mxu0 0
      %833 = vmatpush2.bf16.msra.mxu0 %v591
      %834 = vmatprep.subr.bf16.mxu0 0
      %835 = vmatpush2.bf16.msra.mxu0 %v588
      %836 = vmatprep.subr.bf16.mxu0 0
      %837 = vmatpush2.bf16.msra.mxu0 %v585
      %838 = vmatprep.subr.bf16.mxu0 0
      %839 = vmatpush2.bf16.msra.mxu0 %v582
      %840 = vmatprep.subr.bf16.mxu0 0
      %841 = vmatpush2.bf16.msra.mxu0 %v579
      %842 = vmatprep.subr.bf16.mxu0 0
      %843 = vmatpush2.bf16.msra.mxu0 %v576
      %844 = vmatprep.subr.bf16.mxu0 0
      %845 = vmatpush2.bf16.msra.mxu0 %v573
      %846 = vmatprep.mubr.bf16.mxu0 %v348
      %847 = vmatmul.mubr.bf16.gmra.mxu0 %v347
      %v848 = vpop.f32.mrf.mxu0
      %v849 = vadd.f32 0.0, %v848
      %v850 = vpop.f32.mrf.mxu0
      %v851 = vpop.f32.mrf.mxu0
      %v852 = vadd.f32 0.0, %v851
      %v853 = vpop.f32.mrf.mxu0
      %854 = vmatprep.mubr.bf16.mxu0 %v351
      %855 = vmatmul.mubr.bf16.gmra.mxu0 %v350
      %v856 = vpop.f32.mrf.mxu0
      %v857 = vadd.f32 0.0, %v856
      %v858 = vpop.f32.mrf.mxu0
      %v859 = vpop.f32.mrf.mxu0
      %v860 = vadd.f32 0.0, %v859
      %v861 = vpop.f32.mrf.mxu0
      %862 = vmatprep.mubr.bf16.mxu0 %v354
      %863 = vmatmul.mubr.bf16.gmra.mxu0 %v353
      %v864 = vpop.f32.mrf.mxu0
      %v865 = vadd.f32 0.0, %v864
      %v866 = vpop.f32.mrf.mxu0
      %v867 = vpop.f32.mrf.mxu0
      %v868 = vadd.f32 0.0, %v867
      %v869 = vpop.f32.mrf.mxu0
      %870 = vmatprep.mubr.bf16.mxu0 %v357
      %871 = vmatmul.mubr.bf16.gmra.mxu0 %v356
      %v872 = vpop.f32.mrf.mxu0
      %v873 = vadd.f32 0.0, %v872
      %v874 = vpop.f32.mrf.mxu0
      %v875 = vpop.f32.mrf.mxu0
      %v876 = vadd.f32 0.0, %v875
      %v877 = vpop.f32.mrf.mxu0
      %878 = vdwg.mxu0
      %879 = vmatprep.subr.bf16.mxu0 0
      %880 = vmatpush1.bf16.msra.mxu0 0
      %881 = vmatprep.subr.bf16.mxu0 0
      %882 = vmatpush1.bf16.msra.mxu0 0
      %883 = vmatprep.subr.bf16.mxu0 0
      %884 = vmatpush1.bf16.msra.mxu0 0
      %885 = vmatprep.subr.bf16.mxu0 0
      %886 = vmatpush1.bf16.msra.mxu0 0
      %887 = vmatprep.subr.bf16.mxu0 0
      %888 = vmatpush1.bf16.msra.mxu0 0
      %889 = vmatprep.subr.bf16.mxu0 0
      %890 = vmatpush1.bf16.msra.mxu0 0
      %891 = vmatprep.subr.bf16.mxu0 0
      %892 = vmatpush1.bf16.msra.mxu0 %v600
      %893 = vmatprep.subr.bf16.mxu0 0
      %894 = vmatpush1.bf16.msra.mxu0 %v597
      %895 = vmatprep.subr.bf16.mxu0 0
      %896 = vmatpush2.bf16.msra.mxu0 0
      %897 = vmatprep.subr.bf16.mxu0 0
      %898 = vmatpush2.bf16.msra.mxu0 0
      %899 = vmatprep.subr.bf16.mxu0 0
      %900 = vmatpush2.bf16.msra.mxu0 0
      %901 = vmatprep.subr.bf16.mxu0 0
      %902 = vmatpush2.bf16.msra.mxu0 0
      %903 = vmatprep.subr.bf16.mxu0 0
      %904 = vmatpush2.bf16.msra.mxu0 0
      %905 = vmatprep.subr.bf16.mxu0 0
      %906 = vmatpush2.bf16.msra.mxu0 0
      %907 = vmatprep.subr.bf16.mxu0 0
      %908 = vmatpush2.bf16.msra.mxu0 0
      %909 = vmatprep.subr.bf16.mxu0 0
      %910 = vmatpush2.bf16.msra.mxu0 0
      %911 = vmatprep.mubr.bf16.mxu0 0
      %912 = vmatmul.mubr.bf16.gmra.mxu0 %v657
      %v913 = vpop.f32.mrf.mxu0
      %v914 = vadd.f32 %v849, %v913
      %v915 = vpop.f32.mrf.mxu0
      %v916 = vpop.f32.mrf.mxu0
      %v917 = vadd.f32 %v852, %v916
      %v918 = vpop.f32.mrf.mxu0
      %919 = vmatprep.mubr.bf16.mxu0 0
      %920 = vmatmul.mubr.bf16.gmra.mxu0 %v660
      %v921 = vpop.f32.mrf.mxu0
      %v922 = vadd.f32 %v857, %v921
      %v923 = vpop.f32.mrf.mxu0
      %v924 = vpop.f32.mrf.mxu0
      %v925 = vadd.f32 %v860, %v924
      %v926 = vpop.f32.mrf.mxu0
      %927 = vmatprep.mubr.bf16.mxu0 0
      %928 = vmatmul.mubr.bf16.gmra.mxu0 %v663
      %v929 = vpop.f32.mrf.mxu0
      %v930 = vadd.f32 %v865, %v929
      %v931 = vpop.f32.mrf.mxu0
      %v932 = vpop.f32.mrf.mxu0
      %v933 = vadd.f32 %v868, %v932
      %v934 = vpop.f32.mrf.mxu0
      %935 = vmatprep.mubr.bf16.mxu0 0
      %936 = vmatmul.mubr.bf16.gmra.mxu0 %v666
      %v937 = vpop.f32.mrf.mxu0
      %v938 = vadd.f32 %v873, %v937
      %v939 = vpop.f32.mrf.mxu0
      %v940 = vpop.f32.mrf.mxu0
      %v941 = vadd.f32 %v876, %v940
      %v942 = vpop.f32.mrf.mxu0
      %943 = vdwg.mxu0
      %p944 = scmp.eq.s32.totalorder %s19, 0
      %p945 = scmp.eq.s32.totalorder %s20, 0
      %p946 = pnand %p944, %p945
      %p947 = pneg %p946
      // Predicated region
      $region37: #{stem_forward.6} parent=35 // pred_check
        _
      $region38: #{stem_forward.6} parent=35 // pred_check_branch
        %949 = sbr.rel (%p946) target = $region40
      $region39: #{stem_forward.6} parent=35 // pred_region
        %vm950 = vcmask 7168
        %951 = vst.msk [vmem:[#allocation2] sm:$0xff] %vm950, 0.0
        %952 = vst.msk [vmem:[#allocation2 + $0x8] sm:$0xff] %vm950, 0.0
        %953 = vst.msk [vmem:[#allocation2 + $0x10] sm:$0xff] %vm950, 0.0
        %954 = vst.msk [vmem:[#allocation2 + $0x18] sm:$0xff] %vm950, 0.0
        %955 = vst.msk [vmem:[#allocation2 + $0x20] sm:$0xff] %vm950, 0.0
        %956 = vst.msk [vmem:[#allocation2 + $0x28] sm:$0xff] %vm950, 0.0
        %957 = vst.msk [vmem:[#allocation2 + $0x30] sm:$0xff] %vm950, 0.0
        %958 = vst.msk [vmem:[#allocation2 + $0x38] sm:$0xff] %vm950, 0.0
        %959 = vst.msk [vmem:[#allocation3] sm:$0xff] %vm950, 0.0
        %960 = vst.msk [vmem:[#allocation3 + $0x8] sm:$0xff] %vm950, 0.0
        %961 = vst.msk [vmem:[#allocation3 + $0x10] sm:$0xff] %vm950, 0.0
        %962 = vst.msk [vmem:[#allocation3 + $0x18] sm:$0xff] %vm950, 0.0
        %963 = vst.msk [vmem:[#allocation3 + $0x20] sm:$0xff] %vm950, 0.0
        %964 = vst.msk [vmem:[#allocation3 + $0x28] sm:$0xff] %vm950, 0.0
        %965 = vst.msk [vmem:[#allocation3 + $0x30] sm:$0xff] %vm950, 0.0
        %966 = vst.msk [vmem:[#allocation3 + $0x38] sm:$0xff] %vm950, 0.0
      $region40: #{stem_forward.6} parent=35 // pred_fallthru
        _
      // Predicated region
      $region41: #{stem_forward.6} parent=35 // pred_check
        %p967 = pneg %p944
      $region42: #{stem_forward.6} parent=35 // pred_check_branch
        %969 = sbr.rel (%p967) target = $region44
      $region43: #{stem_forward.6} parent=35 // pred_region
        %v970 = vld [vmem:[#allocation2] sm:$0xff]
        %v971 = vld [vmem:[#allocation2 + $0x8] sm:$0xff]
        %v972 = vld [vmem:[#allocation2 + $0x10] sm:$0xff]
        %v973 = vld [vmem:[#allocation2 + $0x18] sm:$0xff]
        %v974 = vld [vmem:[#allocation2 + $0x20] sm:$0xff]
        %v975 = vld [vmem:[#allocation2 + $0x28] sm:$0xff]
        %v976 = vld [vmem:[#allocation2 + $0x30] sm:$0xff]
        %v977 = vld [vmem:[#allocation2 + $0x38] sm:$0xff]
        %v978 = vadd.f32 %v776, %v778
        %v979 = vadd.f32 %v978, %v914
        %980 = vadd.xlane.f32.xlu0 %v979
        %v981 = vpop.xlane.xlu0 %980
        %v982 = vadd.f32 %v780, %v782
        %v983 = vadd.f32 %v982, %v917
        %984 = vadd.xlane.f32.xlu0 %v983
        %v985 = vpop.xlane.xlu0 %984
        %v986 = vadd.f32 %v786, %v788
        %v987 = vadd.f32 %v986, %v922
        %988 = vadd.xlane.f32.xlu0 %v987
        %v989 = vpop.xlane.xlu0 %988
        %v990 = vadd.f32 %v790, %v792
        %v991 = vadd.f32 %v990, %v925
        %992 = vadd.xlane.f32.xlu0 %v991
        %v993 = vpop.xlane.xlu0 %992
        %v994 = vadd.f32 %v796, %v798
        %v995 = vadd.f32 %v994, %v930
        %996 = vadd.xlane.f32.xlu0 %v995
        %v997 = vpop.xlane.xlu0 %996
        %v998 = vadd.f32 %v800, %v802
        %v999 = vadd.f32 %v998, %v933
        %1000 = vadd.xlane.f32.xlu0 %v999
        %v1001 = vpop.xlane.xlu0 %1000
        %v1002 = vadd.f32 %v806, %v808
        %v1003 = vadd.f32 %v1002, %v938
        %1004 = vadd.xlane.f32.xlu0 %v1003
        %v1005 = vpop.xlane.xlu0 %1004
        %v1006 = vadd.f32 %v810, %v812
        %v1007 = vadd.f32 %v1006, %v941
        %1008 = vadd.xlane.f32.xlu0 %v1007
        %v1009 = vpop.xlane.xlu0 %1008
        %v1010 = vadd.f32 %v970, %v981
        %v1011 = vadd.f32 %v971, %v985
        %v1012 = vadd.f32 %v972, %v989
        %v1013 = vadd.f32 %v973, %v993
        %v1014 = vadd.f32 %v974, %v997
        %v1015 = vadd.f32 %v975, %v1001
        %v1016 = vadd.f32 %v976, %v1005
        %v1017 = vadd.f32 %v977, %v1009
        %vm1018 = vcmask 7168
        %1019 = vst.msk [vmem:[#allocation2] sm:$0xff] %vm1018, %v1010
        %1020 = vst.msk [vmem:[#allocation2 + $0x8] sm:$0xff] %vm1018, %v1011
        %1021 = vst.msk [vmem:[#allocation2 + $0x10] sm:$0xff] %vm1018, %v1012
        %1022 = vst.msk [vmem:[#allocation2 + $0x18] sm:$0xff] %vm1018, %v1013
        %1023 = vst.msk [vmem:[#allocation2 + $0x20] sm:$0xff] %vm1018, %v1014
        %1024 = vst.msk [vmem:[#allocation2 + $0x28] sm:$0xff] %vm1018, %v1015
        %1025 = vst.msk [vmem:[#allocation2 + $0x30] sm:$0xff] %vm1018, %v1016
        %1026 = vst.msk [vmem:[#allocation2 + $0x38] sm:$0xff] %vm1018, %v1017
        %v1027 = vld [vmem:[#allocation3] sm:$0xff]
        %v1028 = vld [vmem:[#allocation3 + $0x8] sm:$0xff]
        %v1029 = vld [vmem:[#allocation3 + $0x10] sm:$0xff]
        %v1030 = vld [vmem:[#allocation3 + $0x18] sm:$0xff]
        %v1031 = vld [vmem:[#allocation3 + $0x20] sm:$0xff]
        %v1032 = vld [vmem:[#allocation3 + $0x28] sm:$0xff]
        %v1033 = vld [vmem:[#allocation3 + $0x30] sm:$0xff]
        %v1034 = vld [vmem:[#allocation3 + $0x38] sm:$0xff]
        %v1035 = vmul.f32 %v776, %v776
        %v1036 = vmul.f32 %v778, %v778
        %v1037 = vmul.f32 %v914, %v914
        %v1038 = vmul.f32 %v780, %v780
        %v1039 = vmul.f32 %v782, %v782
        %v1040 = vmul.f32 %v917, %v917
        %v1041 = vmul.f32 %v786, %v786
        %v1042 = vmul.f32 %v788, %v788
        %v1043 = vmul.f32 %v922, %v922
        %v1044 = vmul.f32 %v790, %v790
        %v1045 = vmul.f32 %v792, %v792
        %v1046 = vmul.f32 %v925, %v925
        %v1047 = vmul.f32 %v796, %v796
        %v1048 = vmul.f32 %v798, %v798
        %v1049 = vmul.f32 %v930, %v930
        %v1050 = vmul.f32 %v800, %v800
        %v1051 = vmul.f32 %v802, %v802
        %v1052 = vmul.f32 %v933, %v933
        %v1053 = vmul.f32 %v806, %v806
        %v1054 = vmul.f32 %v808, %v808
        %v1055 = vmul.f32 %v938, %v938
        %v1056 = vmul.f32 %v810, %v810
        %v1057 = vmul.f32 %v812, %v812
        %v1058 = vmul.f32 %v941, %v941
        %v1059 = vadd.f32 %v1035, %v1036
        %v1060 = vadd.f32 %v1059, %v1037
        %1061 = vadd.xlane.f32.xlu0 %v1060
        %v1062 = vpop.xlane.xlu0 %1061
        %v1063 = vadd.f32 %v1038, %v1039
        %v1064 = vadd.f32 %v1063, %v1040
        %1065 = vadd.xlane.f32.xlu0 %v1064
        %v1066 = vpop.xlane.xlu0 %1065
        %v1067 = vadd.f32 %v1041, %v1042
        %v1068 = vadd.f32 %v1067, %v1043
        %1069 = vadd.xlane.f32.xlu0 %v1068
        %v1070 = vpop.xlane.xlu0 %1069
        %v1071 = vadd.f32 %v1044, %v1045
        %v1072 = vadd.f32 %v1071, %v1046
        %1073 = vadd.xlane.f32.xlu0 %v1072
        %v1074 = vpop.xlane.xlu0 %1073
        %v1075 = vadd.f32 %v1047, %v1048
        %v1076 = vadd.f32 %v1075, %v1049
        %1077 = vadd.xlane.f32.xlu0 %v1076
        %v1078 = vpop.xlane.xlu0 %1077
        %v1079 = vadd.f32 %v1050, %v1051
        %v1080 = vadd.f32 %v1079, %v1052
        %1081 = vadd.xlane.f32.xlu0 %v1080
        %v1082 = vpop.xlane.xlu0 %1081
        %v1083 = vadd.f32 %v1053, %v1054
        %v1084 = vadd.f32 %v1083, %v1055
        %1085 = vadd.xlane.f32.xlu0 %v1084
        %v1086 = vpop.xlane.xlu0 %1085
        %v1087 = vadd.f32 %v1056, %v1057
        %v1088 = vadd.f32 %v1087, %v1058
        %1089 = vadd.xlane.f32.xlu0 %v1088
        %v1090 = vpop.xlane.xlu0 %1089
        %v1091 = vadd.f32 %v1027, %v1062
        %v1092 = vadd.f32 %v1028, %v1066
        %v1093 = vadd.f32 %v1029, %v1070
        %v1094 = vadd.f32 %v1030, %v1074
        %v1095 = vadd.f32 %v1031, %v1078
        %v1096 = vadd.f32 %v1032, %v1082
        %v1097 = vadd.f32 %v1033, %v1086
        %v1098 = vadd.f32 %v1034, %v1090
        %1099 = vst.msk [vmem:[#allocation3] sm:$0xff] %vm1018, %v1091
        %1100 = vst.msk [vmem:[#allocation3 + $0x8] sm:$0xff] %vm1018, %v1092
        %1101 = vst.msk [vmem:[#allocation3 + $0x10] sm:$0xff] %vm1018, %v1093
        %1102 = vst.msk [vmem:[#allocation3 + $0x18] sm:$0xff] %vm1018, %v1094
        %1103 = vst.msk [vmem:[#allocation3 + $0x20] sm:$0xff] %vm1018, %v1095
        %1104 = vst.msk [vmem:[#allocation3 + $0x28] sm:$0xff] %vm1018, %v1096
        %1105 = vst.msk [vmem:[#allocation3 + $0x30] sm:$0xff] %vm1018, %v1097
        %1106 = vst.msk [vmem:[#allocation3 + $0x38] sm:$0xff] %vm1018, %v1098
      $region44: #{stem_forward.6} parent=35 // pred_fallthru
        _
      %p1107 = scmp.eq.s32.totalorder %s19, 1
      %p1108 = pnand %p1107, %p945
      %p1109 = pneg %p1108
      // Predicated region
      $region45: #{stem_forward.6} parent=35 // pred_check
        _
      $region46: #{stem_forward.6} parent=35 // pred_check_branch
        %1111 = sbr.rel (%p1108) target = $region48
      $region47: #{stem_forward.6} parent=35 // pred_region
        %v1112 = vld [vmem:[#allocation2] sm:$0xff]
        %v1113 = vld [vmem:[#allocation2 + $0x8] sm:$0xff]
        %v1114 = vld [vmem:[#allocation2 + $0x10] sm:$0xff]
        %v1115 = vld [vmem:[#allocation2 + $0x18] sm:$0xff]
        %v1116 = vld [vmem:[#allocation2 + $0x20] sm:$0xff]
        %v1117 = vld [vmem:[#allocation2 + $0x28] sm:$0xff]
        %v1118 = vld [vmem:[#allocation2 + $0x30] sm:$0xff]
        %v1119 = vld [vmem:[#allocation2 + $0x38] sm:$0xff]
        %v1120 = vmul.f32 %v1112, 0.00295858
        %v1121 = vmul.f32 %v1113, 0.00295858
        %v1122 = vmul.f32 %v1114, 0.00295858
        %v1123 = vmul.f32 %v1115, 0.00295858
        %v1124 = vmul.f32 %v1116, 0.00295858
        %v1125 = vmul.f32 %v1117, 0.00295858
        %v1126 = vmul.f32 %v1118, 0.00295858
        %v1127 = vmul.f32 %v1119, 0.00295858
        %v1128 = vld [vmem:[#allocation3] sm:$0xff]
        %v1129 = vld [vmem:[#allocation3 + $0x8] sm:$0xff]
        %v1130 = vld [vmem:[#allocation3 + $0x10] sm:$0xff]
        %v1131 = vld [vmem:[#allocation3 + $0x18] sm:$0xff]
        %v1132 = vld [vmem:[#allocation3 + $0x20] sm:$0xff]
        %v1133 = vld [vmem:[#allocation3 + $0x28] sm:$0xff]
        %v1134 = vld [vmem:[#allocation3 + $0x30] sm:$0xff]
        %v1135 = vld [vmem:[#allocation3 + $0x38] sm:$0xff]
        %v1136 = vmul.f32 %v1128, 0.00295858
        %v1137 = vmul.f32 %v1129, 0.00295858
        %v1138 = vmul.f32 %v1130, 0.00295858
        %v1139 = vmul.f32 %v1131, 0.00295858
        %v1140 = vmul.f32 %v1132, 0.00295858
        %v1141 = vmul.f32 %v1133, 0.00295858
        %v1142 = vmul.f32 %v1134, 0.00295858
        %v1143 = vmul.f32 %v1135, 0.00295858
        %v1144 = vmul.f32 %v1120, %v1120
        %v1145 = vmul.f32 %v1121, %v1121
        %v1146 = vmul.f32 %v1122, %v1122
        %v1147 = vmul.f32 %v1123, %v1123
        %v1148 = vmul.f32 %v1124, %v1124
        %v1149 = vmul.f32 %v1125, %v1125
        %v1150 = vmul.f32 %v1126, %v1126
        %v1151 = vmul.f32 %v1127, %v1127
        %v1152 = vsub.f32 %v1136, %v1144
        %v1153 = vsub.f32 %v1137, %v1145
        %v1154 = vsub.f32 %v1138, %v1146
        %v1155 = vsub.f32 %v1139, %v1147
        %v1156 = vsub.f32 %v1140, %v1148
        %v1157 = vsub.f32 %v1141, %v1149
        %v1158 = vsub.f32 %v1142, %v1150
        %v1159 = vsub.f32 %v1143, %v1151
        %v1160 = vld [vmem:[%s2] sm:$0xff]
        %v1161 = vld [vmem:[%s2 + $0x8] sm:$0xff]
        %v1162 = vld [vmem:[%s2 + $0x10] sm:$0xff]
        %v1163 = vld [vmem:[%s2 + $0x18] sm:$0xff]
        %v1164 = vld [vmem:[%s2 + $0x20] sm:$0xff]
        %v1165 = vld [vmem:[%s2 + $0x28] sm:$0xff]
        %v1166 = vld [vmem:[%s2 + $0x30] sm:$0xff]
        %v1167 = vld [vmem:[%s2 + $0x38] sm:$0xff]
        %v1168 = vadd.f32 %v1152, 1e-05
        %v1169 = vadd.f32 %v1153, 1e-05
        %v1170 = vadd.f32 %v1154, 1e-05
        %v1171 = vadd.f32 %v1155, 1e-05
        %v1172 = vadd.f32 %v1156, 1e-05
        %v1173 = vadd.f32 %v1157, 1e-05
        %v1174 = vadd.f32 %v1158, 1e-05
        %v1175 = vadd.f32 %v1159, 1e-05
        %v1176 = vrsqrt.pop %v1168
        %v1177 = vrsqrt.pop %v1169
        %v1178 = vrsqrt.pop %v1170
        %v1179 = vrsqrt.pop %v1171
        %v1180 = vrsqrt.pop %v1172
        %v1181 = vrsqrt.pop %v1173
        %v1182 = vrsqrt.pop %v1174
        %v1183 = vrsqrt.pop %v1175
        %v1184 = vmul.f32 %v1160, %v1176
        %v1185 = vmul.f32 %v1161, %v1177
        %v1186 = vmul.f32 %v1162, %v1178
        %v1187 = vmul.f32 %v1163, %v1179
        %v1188 = vmul.f32 %v1164, %v1180
        %v1189 = vmul.f32 %v1165, %v1181
        %v1190 = vmul.f32 %v1166, %v1182
        %v1191 = vmul.f32 %v1167, %v1183
        %vm1192 = vcmask 7168
        %1193 = vst.msk [vmem:[#allocation4] sm:$0xff] %vm1192, %v1184
        %1194 = vst.msk [vmem:[#allocation4 + $0x8] sm:$0xff] %vm1192, %v1185
        %1195 = vst.msk [vmem:[#allocation4 + $0x10] sm:$0xff] %vm1192, %v1186
        %1196 = vst.msk [vmem:[#allocation4 + $0x18] sm:$0xff] %vm1192, %v1187
        %1197 = vst.msk [vmem:[#allocation4 + $0x20] sm:$0xff] %vm1192, %v1188
        %1198 = vst.msk [vmem:[#allocation4 + $0x28] sm:$0xff] %vm1192, %v1189
        %1199 = vst.msk [vmem:[#allocation4 + $0x30] sm:$0xff] %vm1192, %v1190
        %1200 = vst.msk [vmem:[#allocation4 + $0x38] sm:$0xff] %vm1192, %v1191
        %v1201 = vld [vmem:[%s3] sm:$0xff]
        %v1202 = vld [vmem:[%s3 + $0x8] sm:$0xff]
        %v1203 = vld [vmem:[%s3 + $0x10] sm:$0xff]
        %v1204 = vld [vmem:[%s3 + $0x18] sm:$0xff]
        %v1205 = vld [vmem:[%s3 + $0x20] sm:$0xff]
        %v1206 = vld [vmem:[%s3 + $0x28] sm:$0xff]
        %v1207 = vld [vmem:[%s3 + $0x30] sm:$0xff]
        %v1208 = vld [vmem:[%s3 + $0x38] sm:$0xff]
        %v1209 = vmul.f32 %v1120, %v1184
        %v1210 = vmul.f32 %v1121, %v1185
        %v1211 = vmul.f32 %v1122, %v1186
        %v1212 = vmul.f32 %v1123, %v1187
        %v1213 = vmul.f32 %v1124, %v1188
        %v1214 = vmul.f32 %v1125, %v1189
        %v1215 = vmul.f32 %v1126, %v1190
        %v1216 = vmul.f32 %v1127, %v1191
        %v1217 = vsub.f32 %v1201, %v1209
        %v1218 = vsub.f32 %v1202, %v1210
        %v1219 = vsub.f32 %v1203, %v1211
        %v1220 = vsub.f32 %v1204, %v1212
        %v1221 = vsub.f32 %v1205, %v1213
        %v1222 = vsub.f32 %v1206, %v1214
        %v1223 = vsub.f32 %v1207, %v1215
        %v1224 = vsub.f32 %v1208, %v1216
        %1225 = vst.msk [vmem:[#allocation5] sm:$0xff] %vm1192, %v1217
        %1226 = vst.msk [vmem:[#allocation5 + $0x8] sm:$0xff] %vm1192, %v1218
        %1227 = vst.msk [vmem:[#allocation5 + $0x10] sm:$0xff] %vm1192, %v1219
        %1228 = vst.msk [vmem:[#allocation5 + $0x18] sm:$0xff] %vm1192, %v1220
        %1229 = vst.msk [vmem:[#allocation5 + $0x20] sm:$0xff] %vm1192, %v1221
        %1230 = vst.msk [vmem:[#allocation5 + $0x28] sm:$0xff] %vm1192, %v1222
        %1231 = vst.msk [vmem:[#allocation5 + $0x30] sm:$0xff] %vm1192, %v1223
        %1232 = vst.msk [vmem:[#allocation5 + $0x38] sm:$0xff] %vm1192, %v1224
      $region48: #{stem_forward.6} parent=35 // pred_fallthru
        _
      // Predicated region
      $region49: #{stem_forward.6} parent=35 // pred_check
        %p1233 = pneg %p1107
      $region50: #{stem_forward.6} parent=35 // pred_check_branch
        %1235 = sbr.rel (%p1233) target = $region52
      $region51: #{stem_forward.6} parent=35 // pred_region
        %v1236 = vld [vmem:[#allocation4] sm:$0xff]
        %v1237 = vld [vmem:[#allocation4 + $0x8] sm:$0xff]
        %v1238 = vld [vmem:[#allocation4 + $0x10] sm:$0xff]
        %v1239 = vld [vmem:[#allocation4 + $0x18] sm:$0xff]
        %v1240 = vld [vmem:[#allocation4 + $0x20] sm:$0xff]
        %v1241 = vld [vmem:[#allocation4 + $0x28] sm:$0xff]
        %v1242 = vld [vmem:[#allocation4 + $0x30] sm:$0xff]
        %v1243 = vld [vmem:[#allocation4 + $0x38] sm:$0xff]
        %1245 = vset.pattern.permute.xlu0 0
        %1246 = vperm.xlu0 %1245, %v1236
        %v1247 = vpop.permute.xlu0 %1246
        %1250 = vset.pattern.permute.xlu0 0
        %1251 = vperm.xlu0 %1250, %v1237
        %v1252 = vpop.permute.xlu0 %1251
        %1255 = vset.pattern.permute.xlu0 0
        %1256 = vperm.xlu0 %1255, %v1238
        %v1257 = vpop.permute.xlu0 %1256
        %1260 = vset.pattern.permute.xlu0 0
        %1261 = vperm.xlu0 %1260, %v1239
        %v1262 = vpop.permute.xlu0 %1261
        %1265 = vset.pattern.permute.xlu0 0
        %1266 = vperm.xlu0 %1265, %v1240
        %v1267 = vpop.permute.xlu0 %1266
        %1270 = vset.pattern.permute.xlu0 0
        %1271 = vperm.xlu0 %1270, %v1241
        %v1272 = vpop.permute.xlu0 %1271
        %1275 = vset.pattern.permute.xlu0 0
        %1276 = vperm.xlu0 %1275, %v1242
        %v1277 = vpop.permute.xlu0 %1276
        %1280 = vset.pattern.permute.xlu0 0
        %1281 = vperm.xlu0 %1280, %v1243
        %v1282 = vpop.permute.xlu0 %1281
        %v1284 = vmul.f32 %v776, %v1247
        %v1285 = vmul.f32 %v778, %v1247
        %v1286 = vmul.f32 %v914, %v1247
        %v1287 = vmul.f32 %v780, %v1252
        %v1288 = vmul.f32 %v782, %v1252
        %v1289 = vmul.f32 %v917, %v1252
        %v1290 = vmul.f32 %v786, %v1257
        %v1291 = vmul.f32 %v788, %v1257
        %v1292 = vmul.f32 %v922, %v1257
        %v1293 = vmul.f32 %v790, %v1262
        %v1294 = vmul.f32 %v792, %v1262
        %v1295 = vmul.f32 %v925, %v1262
        %v1296 = vmul.f32 %v796, %v1267
        %v1297 = vmul.f32 %v798, %v1267
        %v1298 = vmul.f32 %v930, %v1267
        %v1299 = vmul.f32 %v800, %v1272
        %v1300 = vmul.f32 %v802, %v1272
        %v1301 = vmul.f32 %v933, %v1272
        %v1302 = vmul.f32 %v806, %v1277
        %v1303 = vmul.f32 %v808, %v1277
        %v1304 = vmul.f32 %v938, %v1277
        %v1305 = vmul.f32 %v810, %v1282
        %v1306 = vmul.f32 %v812, %v1282
        %v1307 = vmul.f32 %v941, %v1282
        %v1308 = vld [vmem:[#allocation5] sm:$0xff]
        %v1309 = vld [vmem:[#allocation5 + $0x8] sm:$0xff]
        %v1310 = vld [vmem:[#allocation5 + $0x10] sm:$0xff]
        %v1311 = vld [vmem:[#allocation5 + $0x18] sm:$0xff]
        %v1312 = vld [vmem:[#allocation5 + $0x20] sm:$0xff]
        %v1313 = vld [vmem:[#allocation5 + $0x28] sm:$0xff]
        %v1314 = vld [vmem:[#allocation5 + $0x30] sm:$0xff]
        %v1315 = vld [vmem:[#allocation5 + $0x38] sm:$0xff]
        %1317 = vset.pattern.permute.xlu0 0
        %1318 = vperm.xlu0 %1317, %v1308
        %v1319 = vpop.permute.xlu0 %1318
        %1322 = vset.pattern.permute.xlu0 0
        %1323 = vperm.xlu0 %1322, %v1309
        %v1324 = vpop.permute.xlu0 %1323
        %1327 = vset.pattern.permute.xlu0 0
        %1328 = vperm.xlu0 %1327, %v1310
        %v1329 = vpop.permute.xlu0 %1328
        %1332 = vset.pattern.permute.xlu0 0
        %1333 = vperm.xlu0 %1332, %v1311
        %v1334 = vpop.permute.xlu0 %1333
        %1337 = vset.pattern.permute.xlu0 0
        %1338 = vperm.xlu0 %1337, %v1312
        %v1339 = vpop.permute.xlu0 %1338
        %1342 = vset.pattern.permute.xlu0 0
        %1343 = vperm.xlu0 %1342, %v1313
        %v1344 = vpop.permute.xlu0 %1343
        %1347 = vset.pattern.permute.xlu0 0
        %1348 = vperm.xlu0 %1347, %v1314
        %v1349 = vpop.permute.xlu0 %1348
        %1352 = vset.pattern.permute.xlu0 0
        %1353 = vperm.xlu0 %1352, %v1315
        %v1354 = vpop.permute.xlu0 %1353
        %v1356 = vadd.f32 %v1284, %v1319
        %v1357 = vadd.f32 %v1285, %v1319
        %v1358 = vadd.f32 %v1286, %v1319
        %v1359 = vadd.f32 %v1287, %v1324
        %v1360 = vadd.f32 %v1288, %v1324
        %v1361 = vadd.f32 %v1289, %v1324
        %v1362 = vadd.f32 %v1290, %v1329
        %v1363 = vadd.f32 %v1291, %v1329
        %v1364 = vadd.f32 %v1292, %v1329
        %v1365 = vadd.f32 %v1293, %v1334
        %v1366 = vadd.f32 %v1294, %v1334
        %v1367 = vadd.f32 %v1295, %v1334
        %v1368 = vadd.f32 %v1296, %v1339
        %v1369 = vadd.f32 %v1297, %v1339
        %v1370 = vadd.f32 %v1298, %v1339
        %v1371 = vadd.f32 %v1299, %v1344
        %v1372 = vadd.f32 %v1300, %v1344
        %v1373 = vadd.f32 %v1301, %v1344
        %v1374 = vadd.f32 %v1302, %v1349
        %v1375 = vadd.f32 %v1303, %v1349
        %v1376 = vadd.f32 %v1304, %v1349
        %v1377 = vadd.f32 %v1305, %v1354
        %v1378 = vadd.f32 %v1306, %v1354
        %v1379 = vadd.f32 %v1307, %v1354
        %v1380 = vmax.f32 %v1356, 0.0
        %v1381 = vmax.f32 %v1357, 0.0
        %v1382 = vmax.f32 %v1358, 0.0
        %v1383 = vmax.f32 %v1359, 0.0
        %v1384 = vmax.f32 %v1360, 0.0
        %v1385 = vmax.f32 %v1361, 0.0
        %v1386 = vmax.f32 %v1362, 0.0
        %v1387 = vmax.f32 %v1363, 0.0
        %v1388 = vmax.f32 %v1364, 0.0
        %v1389 = vmax.f32 %v1365, 0.0
        %v1390 = vmax.f32 %v1366, 0.0
        %v1391 = vmax.f32 %v1367, 0.0
        %v1392 = vmax.f32 %v1368, 0.0
        %v1393 = vmax.f32 %v1369, 0.0
        %v1394 = vmax.f32 %v1370, 0.0
        %v1395 = vmax.f32 %v1371, 0.0
        %v1396 = vmax.f32 %v1372, 0.0
        %v1397 = vmax.f32 %v1373, 0.0
        %v1398 = vmax.f32 %v1374, 0.0
        %v1399 = vmax.f32 %v1375, 0.0
        %v1400 = vmax.f32 %v1376, 0.0
        %v1401 = vmax.f32 %v1377, 0.0
        %v1402 = vmax.f32 %v1378, 0.0
        %v1403 = vmax.f32 %v1379, 0.0
        %1404 = vst [vmem:[%s215] sm:$0xff] %v1380
        %1405 = vst [vmem:[%s215 + $0x8] sm:$0xff] %v1381
        %1406 = vst [vmem:[%s215 + $0x10] sm:$0xff] %v1382
        %1407 = vst [vmem:[%s215 + $0x18] sm:$0xff] %v1383
        %1408 = vst [vmem:[%s215 + $0x20] sm:$0xff] %v1384
        %1409 = vst [vmem:[%s215 + $0x28] sm:$0xff] %v1385
        %1410 = vst [vmem:[%s215 + $0x30] sm:$0xff] %v1386
        %1411 = vst [vmem:[%s215 + $0x38] sm:$0xff] %v1387
        %1412 = vst [vmem:[%s215 + $0x40] sm:$0xff] %v1388
        %1413 = vst [vmem:[%s215 + $0x48] sm:$0xff] %v1389
        %1414 = vst [vmem:[%s215 + $0x50] sm:$0xff] %v1390
        %1415 = vst [vmem:[%s215 + $0x58] sm:$0xff] %v1391
        %1416 = vst [vmem:[%s215 + $0x60] sm:$0xff] %v1392
        %1417 = vst [vmem:[%s215 + $0x68] sm:$0xff] %v1393
        %1418 = vst [vmem:[%s215 + $0x70] sm:$0xff] %v1394
        %1419 = vst [vmem:[%s215 + $0x78] sm:$0xff] %v1395
        %1420 = vst [vmem:[%s215 + $0x80] sm:$0xff] %v1396
        %1421 = vst [vmem:[%s215 + $0x88] sm:$0xff] %v1397
        %1422 = vst [vmem:[%s215 + $0x90] sm:$0xff] %v1398
        %1423 = vst [vmem:[%s215 + $0x98] sm:$0xff] %v1399
        %1424 = vst [vmem:[%s215 + $0xa0] sm:$0xff] %v1400
        %1425 = vst [vmem:[%s215 + $0xa8] sm:$0xff] %v1401
        %1426 = vst [vmem:[%s215 + $0xb0] sm:$0xff] %v1402
        %1427 = vst [vmem:[%s215 + $0xb8] sm:$0xff] %v1403
      $region52: #{stem_forward.6} parent=35 // pred_fallthru
        _
      %s1428 = smul.u32 %s20, %s19
      %s1429 = smul.u32 3, %s1428
      %p1430 = scmp.lt.s32.totalorder %s1429, 2
      %s1431 = scalar_select %p1430, %s1429, 2
      %s1432 = smul.addr %s1431, 8
      %s1433 = scalar_lea.vmem %s4, %s1432
      // Predicated region
      $region53: #{stem_forward.6} parent=35 // pred_check
        %p1434 = pneg %p136
      $region54: #{stem_forward.6} parent=35 // pred_check_branch
        %1436 = sbr.rel (%p1434) target = $region56
      $region55: #{stem_forward.6} parent=35 // pred_region
        %s1437 = smul.u32 %s20, %s19
        %s1438 = smul.u32 3, %s1437
      $region56: #{stem_forward.6} parent=35 // pred_fallthru
        _
    $region36: #{stem_forward.6} parent=5 // pred_fallthru
      _
    %p1439 = scmp.le.s32.totalorder 2, %s10
    // Predicated region
    $region57: #{stem_forward.6} parent=5 // pred_check
      %p1440 = pneg %p1439
    $region58: #{stem_forward.6} parent=5 // pred_check_branch
      %1442 = sbr.rel (%p1440) target = $region60
    $region59: #{stem_forward.6} parent=5 // pred_region
      %s1443 = ssub.s32 %s10, 2
      // Predicated region
      $region61: #{stem_forward.6} parent=59 // pred_check
        %p1444 = pneg %p142
      $region62: #{stem_forward.6} parent=59 // pred_check_branch
        %1446 = sbr.rel (%p1444) target = $region64
      $region63: #{stem_forward.6} parent=59 // pred_region
        %s1447 = smul.u32 %s22, %s21
        %s1448 = smul.u32 3, %s1447
        %p1449 = scmp.lt.s32.totalorder %s1448, 2
        %s1450 = scalar_select %p1449, %s1448, 2
        %s1451 = smul.addr %s1450, 8
        %s1452 = scalar_lea.vmem %s4, %s1451
      $region64: #{stem_forward.6} parent=59 // pred_fallthru
        _
    $region60: #{stem_forward.6} parent=5 // pred_fallthru
      _
  $region6: #{stem_forward.6} parent=0 // loop_footer
    %s14 = sadd.s32 1, %s10
  $region7: #{stem_forward.6} parent=0 // loop_footer_branch
    %9 = sbr.rel target = $region3
  $region8: #{stem_forward.6} parent=0 // loop_exit
    _

// kernel: stem_forward.7
$region0: #{stem_forward.7}
  #allocation0 [shape = 'u32[]', space=smem, size = 0x4, offset = 0x4, fixed_abs, tag = 'smem constant byte address 0x4 - core index']
  #allocation1 [shape = 'u32[144,128]{1,0:T(1,128)}', space=vmem, size = 0x12000, scoped, tag = 'internal scratch']
  %s0 = inlined_call_operand.vmem [shape: f32[64,9,128], index: 0, kind: input, shape index: {}]
  %s1 = inlined_call_operand.vmem [shape: f32[64,128], index: 1, kind: output, shape index: {}]
  %s2 = sld [smem:[#allocation0]]
  $region14: #{stem_forward.7} parent=0
    _
  %s4 = ssub.s32 1, %s2
  %s5 = scalar_select 0, %s4, %s2
  // Predicated region
  $region2: #{stem_forward.7} parent=0 // pred_check
    _
  $region3: #{stem_forward.7} parent=0 // pred_check_branch
    %7 = sbr.rel (0) target = $region5
  $region4: #{stem_forward.7} parent=0 // pred_region
    _
  $region5: #{stem_forward.7} parent=0 // pred_fallthru
    _
  %v8 = vld [vmem:[%s0] sm:$0x1]
  %v9 = vld [vmem:[%s0 + $0x10] sm:$0x1]
  %v10 = vld [vmem:[%s0 + $0x20] sm:$0x1]
  %v11 = vld [vmem:[%s0 + $0x30] sm:$0x1]
  %v12 = vld [vmem:[%s0 + $0x40] sm:$0x1]
  %v13 = vld [vmem:[%s0 + $0x50] sm:$0x1]
  %v14 = vld [vmem:[%s0 + $0x60] sm:$0x1]
  %v15 = vld [vmem:[%s0 + $0x70] sm:$0x1]
  %v16 = vld [vmem:[%s0 + $0x80] sm:$0x1]
  %v17 = vld [vmem:[%s0 + $0x90] sm:$0x1]
  %v18 = vld [vmem:[%s0 + $0xa0] sm:$0x1]
  %v19 = vld [vmem:[%s0 + $0xb0] sm:$0x1]
  %v20 = vld [vmem:[%s0 + $0xc0] sm:$0x1]
  %v21 = vld [vmem:[%s0 + $0xd0] sm:$0x1]
  %v22 = vld [vmem:[%s0 + $0xe0] sm:$0x1]
  %v23 = vld [vmem:[%s0 + $0xf0] sm:$0x1]
  %v24 = vld [vmem:[%s0 + $0x100] sm:$0x1]
  %v25 = vld [vmem:[%s0 + $0x110] sm:$0x1]
  %v26 = vld [vmem:[%s0 + $0x120] sm:$0x1]
  %v27 = vld [vmem:[%s0 + $0x130] sm:$0x1]
  %v28 = vld [vmem:[%s0 + $0x140] sm:$0x1]
  %v29 = vld [vmem:[%s0 + $0x150] sm:$0x1]
  %v30 = vld [vmem:[%s0 + $0x160] sm:$0x1]
  %v31 = vld [vmem:[%s0 + $0x170] sm:$0x1]
  %v32 = vld [vmem:[%s0 + $0x180] sm:$0x1]
  %v33 = vld [vmem:[%s0 + $0x190] sm:$0x1]
  %v34 = vld [vmem:[%s0 + $0x1a0] sm:$0x1]
  %v35 = vld [vmem:[%s0 + $0x1b0] sm:$0x1]
  %v36 = vld [vmem:[%s0 + $0x1c0] sm:$0x1]
  %v37 = vld [vmem:[%s0 + $0x1d0] sm:$0x1]
  %v38 = vld [vmem:[%s0 + $0x1e0] sm:$0x1]
  %v39 = vld [vmem:[%s0 + $0x1f0] sm:$0x1]
  %v40 = vld [vmem:[%s0 + $0x200] sm:$0x1]
  %v41 = vld [vmem:[%s0 + $0x210] sm:$0x1]
  %v42 = vld [vmem:[%s0 + $0x220] sm:$0x1]
  %v43 = vld [vmem:[%s0 + $0x230] sm:$0x1]
  %v44 = vld [vmem:[%s0 + $0x240] sm:$0x1]
  %v45 = vld [vmem:[%s0 + $0x250] sm:$0x1]
  %v46 = vld [vmem:[%s0 + $0x260] sm:$0x1]
  %v47 = vld [vmem:[%s0 + $0x270] sm:$0x1]
  %v48 = vld [vmem:[%s0 + $0x280] sm:$0x1]
  %v49 = vld [vmem:[%s0 + $0x290] sm:$0x1]
  %v50 = vld [vmem:[%s0 + $0x2a0] sm:$0x1]
  %v51 = vld [vmem:[%s0 + $0x2b0] sm:$0x1]
  %v52 = vld [vmem:[%s0 + $0x2c0] sm:$0x1]
  %v53 = vld [vmem:[%s0 + $0x2d0] sm:$0x1]
  %v54 = vld [vmem:[%s0 + $0x2e0] sm:$0x1]
  %v55 = vld [vmem:[%s0 + $0x2f0] sm:$0x1]
  %v56 = vld [vmem:[%s0 + $0x300] sm:$0x1]
  %v57 = vld [vmem:[%s0 + $0x310] sm:$0x1]
  %v58 = vld [vmem:[%s0 + $0x320] sm:$0x1]
  %v59 = vld [vmem:[%s0 + $0x330] sm:$0x1]
  %v60 = vld [vmem:[%s0 + $0x340] sm:$0x1]
  %v61 = vld [vmem:[%s0 + $0x350] sm:$0x1]
  %v62 = vld [vmem:[%s0 + $0x360] sm:$0x1]
  %v63 = vld [vmem:[%s0 + $0x370] sm:$0x1]
  %v64 = vld [vmem:[%s0 + $0x380] sm:$0x1]
  %v65 = vld [vmem:[%s0 + $0x390] sm:$0x1]
  %v66 = vld [vmem:[%s0 + $0x3a0] sm:$0x1]
  %v67 = vld [vmem:[%s0 + $0x3b0] sm:$0x1]
  %v68 = vld [vmem:[%s0 + $0x3c0] sm:$0x1]
  %v69 = vld [vmem:[%s0 + $0x3d0] sm:$0x1]
  %v70 = vld [vmem:[%s0 + $0x3e0] sm:$0x1]
  %v71 = vld [vmem:[%s0 + $0x3f0] sm:$0x1]
  %v72 = vld [vmem:[%s0 + $0x1] sm:$0x1]
  %v73 = vld [vmem:[%s0 + $0x11] sm:$0x1]
  %v74 = vld [vmem:[%s0 + $0x21] sm:$0x1]
  %v75 = vld [vmem:[%s0 + $0x31] sm:$0x1]
  %v76 = vld [vmem:[%s0 + $0x41] sm:$0x1]
  %v77 = vld [vmem:[%s0 + $0x51] sm:$0x1]
  %v78 = vld [vmem:[%s0 + $0x61] sm:$0x1]
  %v79 = vld [vmem:[%s0 + $0x71] sm:$0x1]
  %v80 = vld [vmem:[%s0 + $0x81] sm:$0x1]
  %v81 = vld [vmem:[%s0 + $0x91] sm:$0x1]
  %v82 = vld [vmem:[%s0 + $0xa1] sm:$0x1]
  %v83 = vld [vmem:[%s0 + $0xb1] sm:$0x1]
  %v84 = vld [vmem:[%s0 + $0xc1] sm:$0x1]
  %v85 = vld [vmem:[%s0 + $0xd1] sm:$0x1]
  %v86 = vld [vmem:[%s0 + $0xe1] sm:$0x1]
  %v87 = vld [vmem:[%s0 + $0xf1] sm:$0x1]
  %v88 = vld [vmem:[%s0 + $0x101] sm:$0x1]
  %v89 = vld [vmem:[%s0 + $0x111] sm:$0x1]
  %v90 = vld [vmem:[%s0 + $0x121] sm:$0x1]
  %v91 = vld [vmem:[%s0 + $0x131] sm:$0x1]
  %v92 = vld [vmem:[%s0 + $0x141] sm:$0x1]
  %v93 = vld [vmem:[%s0 + $0x151] sm:$0x1]
  %v94 = vld [vmem:[%s0 + $0x161] sm:$0x1]
  %v95 = vld [vmem:[%s0 + $0x171] sm:$0x1]
  %v96 = vld [vmem:[%s0 + $0x181] sm:$0x1]
  %v97 = vld [vmem:[%s0 + $0x191] sm:$0x1]
  %v98 = vld [vmem:[%s0 + $0x1a1] sm:$0x1]
  %v99 = vld [vmem:[%s0 + $0x1b1] sm:$0x1]
  %v100 = vld [vmem:[%s0 + $0x1c1] sm:$0x1]
  %v101 = vld [vmem:[%s0 + $0x1d1] sm:$0x1]
  %v102 = vld [vmem:[%s0 + $0x1e1] sm:$0x1]
  %v103 = vld [vmem:[%s0 + $0x1f1] sm:$0x1]
  %v104 = vld [vmem:[%s0 + $0x201] sm:$0x1]
  %v105 = vld [vmem:[%s0 + $0x211] sm:$0x1]
  %v106 = vld [vmem:[%s0 + $0x221] sm:$0x1]
  %v107 = vld [vmem:[%s0 + $0x231] sm:$0x1]
  %v108 = vld [vmem:[%s0 + $0x241] sm:$0x1]
  %v109 = vld [vmem:[%s0 + $0x251] sm:$0x1]
  %v110 = vld [vmem:[%s0 + $0x261] sm:$0x1]
  %v111 = vld [vmem:[%s0 + $0x271] sm:$0x1]
  %v112 = vld [vmem:[%s0 + $0x281] sm:$0x1]
  %v113 = vld [vmem:[%s0 + $0x291] sm:$0x1]
  %v114 = vld [vmem:[%s0 + $0x2a1] sm:$0x1]
  %v115 = vld [vmem:[%s0 + $0x2b1] sm:$0x1]
  %v116 = vld [vmem:[%s0 + $0x2c1] sm:$0x1]
  %v117 = vld [vmem:[%s0 + $0x2d1] sm:$0x1]
  %v118 = vld [vmem:[%s0 + $0x2e1] sm:$0x1]
  %v119 = vld [vmem:[%s0 + $0x2f1] sm:$0x1]
  %v120 = vld [vmem:[%s0 + $0x301] sm:$0x1]
  %v121 = vld [vmem:[%s0 + $0x311] sm:$0x1]
  %v122 = vld [vmem:[%s0 + $0x321] sm:$0x1]
  %v123 = vld [vmem:[%s0 + $0x331] sm:$0x1]
  %v124 = vld [vmem:[%s0 + $0x341] sm:$0x1]
  %v125 = vld [vmem:[%s0 + $0x351] sm:$0x1]
  %v126 = vld [vmem:[%s0 + $0x361] sm:$0x1]
  %v127 = vld [vmem:[%s0 + $0x371] sm:$0x1]
  %v128 = vld [vmem:[%s0 + $0x381] sm:$0x1]
  %v129 = vld [vmem:[%s0 + $0x391] sm:$0x1]
  %v130 = vld [vmem:[%s0 + $0x3a1] sm:$0x1]
  %v131 = vld [vmem:[%s0 + $0x3b1] sm:$0x1]
  %v132 = vld [vmem:[%s0 + $0x3c1] sm:$0x1]
  %v133 = vld [vmem:[%s0 + $0x3d1] sm:$0x1]
  %v134 = vld [vmem:[%s0 + $0x3e1] sm:$0x1]
  %v135 = vld [vmem:[%s0 + $0x3f1] sm:$0x1]
  %v136 = vmax.f32 %v8, %v72
  %v137 = vmax.f32 %v9, %v73
  %v138 = vmax.f32 %v10, %v74
  %v139 = vmax.f32 %v11, %v75
  %v140 = vmax.f32 %v12, %v76
  %v141 = vmax.f32 %v13, %v77
  %v142 = vmax.f32 %v14, %v78
  %v143 = vmax.f32 %v15, %v79
  %v144 = vmax.f32 %v16, %v80
  %v145 = vmax.f32 %v17, %v81
  %v146 = vmax.f32 %v18, %v82
  %v147 = vmax.f32 %v19, %v83
  %v148 = vmax.f32 %v20, %v84
  %v149 = vmax.f32 %v21, %v85
  %v150 = vmax.f32 %v22, %v86
  %v151 = vmax.f32 %v23, %v87
  %v152 = vmax.f32 %v24, %v88
  %v153 = vmax.f32 %v25, %v89
  %v154 = vmax.f32 %v26, %v90
  %v155 = vmax.f32 %v27, %v91
  %v156 = vmax.f32 %v28, %v92
  %v157 = vmax.f32 %v29, %v93
  %v158 = vmax.f32 %v30, %v94
  %v159 = vmax.f32 %v31, %v95
  %v160 = vmax.f32 %v32, %v96
  %v161 = vmax.f32 %v33, %v97
  %v162 = vmax.f32 %v34, %v98
  %v163 = vmax.f32 %v35, %v99
  %v164 = vmax.f32 %v36, %v100
  %v165 = vmax.f32 %v37, %v101
  %v166 = vmax.f32 %v38, %v102
  %v167 = vmax.f32 %v39, %v103
  %v168 = vmax.f32 %v40, %v104
  %v169 = vmax.f32 %v41, %v105
  %v170 = vmax.f32 %v42, %v106
  %v171 = vmax.f32 %v43, %v107
  %v172 = vmax.f32 %v44, %v108
  %v173 = vmax.f32 %v45, %v109
  %v174 = vmax.f32 %v46, %v110
  %v175 = vmax.f32 %v47, %v111
  %v176 = vmax.f32 %v48, %v112
  %v177 = vmax.f32 %v49, %v113
  %v178 = vmax.f32 %v50, %v114
  %v179 = vmax.f32 %v51, %v115
  %v180 = vmax.f32 %v52, %v116
  %v181 = vmax.f32 %v53, %v117
  %v182 = vmax.f32 %v54, %v118
  %v183 = vmax.f32 %v55, %v119
  %v184 = vmax.f32 %v56, %v120
  %v185 = vmax.f32 %v57, %v121
  %v186 = vmax.f32 %v58, %v122
  %v187 = vmax.f32 %v59, %v123
  %v188 = vmax.f32 %v60, %v124
  %v189 = vmax.f32 %v61, %v125
  %v190 = vmax.f32 %v62, %v126
  %v191 = vmax.f32 %v63, %v127
  %v192 = vmax.f32 %v64, %v128
  %v193 = vmax.f32 %v65, %v129
  %v194 = vmax.f32 %v66, %v130
  %v195 = vmax.f32 %v67, %v131
  %v196 = vmax.f32 %v68, %v132
  %v197 = vmax.f32 %v69, %v133
  %v198 = vmax.f32 %v70, %v134
  %v199 = vmax.f32 %v71, %v135
  %v200 = vld [vmem:[%s0 + $0x2] sm:$0x1]
  %v201 = vld [vmem:[%s0 + $0x12] sm:$0x1]
  %v202 = vld [vmem:[%s0 + $0x22] sm:$0x1]
  %v203 = vld [vmem:[%s0 + $0x32] sm:$0x1]
  %v204 = vld [vmem:[%s0 + $0x42] sm:$0x1]
  %v205 = vld [vmem:[%s0 + $0x52] sm:$0x1]
  %v206 = vld [vmem:[%s0 + $0x62] sm:$0x1]
  %v207 = vld [vmem:[%s0 + $0x72] sm:$0x1]
  %v208 = vld [vmem:[%s0 + $0x82] sm:$0x1]
  %v209 = vld [vmem:[%s0 + $0x92] sm:$0x1]
  %v210 = vld [vmem:[%s0 + $0xa2] sm:$0x1]
  %v211 = vld [vmem:[%s0 + $0xb2] sm:$0x1]
  %v212 = vld [vmem:[%s0 + $0xc2] sm:$0x1]
  %v213 = vld [vmem:[%s0 + $0xd2] sm:$0x1]
  %v214 = vld [vmem:[%s0 + $0xe2] sm:$0x1]
  %v215 = vld [vmem:[%s0 + $0xf2] sm:$0x1]
  %v216 = vld [vmem:[%s0 + $0x102] sm:$0x1]
  %v217 = vld [vmem:[%s0 + $0x112] sm:$0x1]
  %v218 = vld [vmem:[%s0 + $0x122] sm:$0x1]
  %v219 = vld [vmem:[%s0 + $0x132] sm:$0x1]
  %v220 = vld [vmem:[%s0 + $0x142] sm:$0x1]
  %v221 = vld [vmem:[%s0 + $0x152] sm:$0x1]
  %v222 = vld [vmem:[%s0 + $0x162] sm:$0x1]
  %v223 = vld [vmem:[%s0 + $0x172] sm:$0x1]
  %v224 = vld [vmem:[%s0 + $0x182] sm:$0x1]
  %v225 = vld [vmem:[%s0 + $0x192] sm:$0x1]
  %v226 = vld [vmem:[%s0 + $0x1a2] sm:$0x1]
  %v227 = vld [vmem:[%s0 + $0x1b2] sm:$0x1]
  %v228 = vld [vmem:[%s0 + $0x1c2] sm:$0x1]
  %v229 = vld [vmem:[%s0 + $0x1d2] sm:$0x1]
  %v230 = vld [vmem:[%s0 + $0x1e2] sm:$0x1]
  %v231 = vld [vmem:[%s0 + $0x1f2] sm:$0x1]
  %v232 = vld [vmem:[%s0 + $0x202] sm:$0x1]
  %v233 = vld [vmem:[%s0 + $0x212] sm:$0x1]
  %v234 = vld [vmem:[%s0 + $0x222] sm:$0x1]
  %v235 = vld [vmem:[%s0 + $0x232] sm:$0x1]
  %v236 = vld [vmem:[%s0 + $0x242] sm:$0x1]
  %v237 = vld [vmem:[%s0 + $0x252] sm:$0x1]
  %v238 = vld [vmem:[%s0 + $0x262] sm:$0x1]
  %v239 = vld [vmem:[%s0 + $0x272] sm:$0x1]
  %v240 = vld [vmem:[%s0 + $0x282] sm:$0x1]
  %v241 = vld [vmem:[%s0 + $0x292] sm:$0x1]
  %v242 = vld [vmem:[%s0 + $0x2a2] sm:$0x1]
  %v243 = vld [vmem:[%s0 + $0x2b2] sm:$0x1]
  %v244 = vld [vmem:[%s0 + $0x2c2] sm:$0x1]
  %v245 = vld [vmem:[%s0 + $0x2d2] sm:$0x1]
  %v246 = vld [vmem:[%s0 + $0x2e2] sm:$0x1]
  %v247 = vld [vmem:[%s0 + $0x2f2] sm:$0x1]
  %v248 = vld [vmem:[%s0 + $0x302] sm:$0x1]
  %v249 = vld [vmem:[%s0 + $0x312] sm:$0x1]
  %v250 = vld [vmem:[%s0 + $0x322] sm:$0x1]
  %v251 = vld [vmem:[%s0 + $0x332] sm:$0x1]
  %v252 = vld [vmem:[%s0 + $0x342] sm:$0x1]
  %v253 = vld [vmem:[%s0 + $0x352] sm:$0x1]
  %v254 = vld [vmem:[%s0 + $0x362] sm:$0x1]
  %v255 = vld [vmem:[%s0 + $0x372] sm:$0x1]
  %v256 = vld [vmem:[%s0 + $0x382] sm:$0x1]
  %v257 = vld [vmem:[%s0 + $0x392] sm:$0x1]
  %v258 = vld [vmem:[%s0 + $0x3a2] sm:$0x1]
  %v259 = vld [vmem:[%s0 + $0x3b2] sm:$0x1]
  %v260 = vld [vmem:[%s0 + $0x3c2] sm:$0x1]
  %v261 = vld [vmem:[%s0 + $0x3d2] sm:$0x1]
  %v262 = vld [vmem:[%s0 + $0x3e2] sm:$0x1]
  %v263 = vld [vmem:[%s0 + $0x3f2] sm:$0x1]
  %v264 = vmax.f32 %v136, %v200
  %v265 = vmax.f32 %v137, %v201
  %v266 = vmax.f32 %v138, %v202
  %v267 = vmax.f32 %v139, %v203
  %v268 = vmax.f32 %v140, %v204
  %v269 = vmax.f32 %v141, %v205
  %v270 = vmax.f32 %v142, %v206
  %v271 = vmax.f32 %v143, %v207
  %v272 = vmax.f32 %v144, %v208
  %v273 = vmax.f32 %v145, %v209
  %v274 = vmax.f32 %v146, %v210
  %v275 = vmax.f32 %v147, %v211
  %v276 = vmax.f32 %v148, %v212
  %v277 = vmax.f32 %v149, %v213
  %v278 = vmax.f32 %v150, %v214
  %v279 = vmax.f32 %v151, %v215
  %v280 = vmax.f32 %v152, %v216
  %v281 = vmax.f32 %v153, %v217
  %v282 = vmax.f32 %v154, %v218
  %v283 = vmax.f32 %v155, %v219
  %v284 = vmax.f32 %v156, %v220
  %v285 = vmax.f32 %v157, %v221
  %v286 = vmax.f32 %v158, %v222
  %v287 = vmax.f32 %v159, %v223
  %v288 = vmax.f32 %v160, %v224
  %v289 = vmax.f32 %v161, %v225
  %v290 = vmax.f32 %v162, %v226
  %v291 = vmax.f32 %v163, %v227
  %v292 = vmax.f32 %v164, %v228
  %v293 = vmax.f32 %v165, %v229
  %v294 = vmax.f32 %v166, %v230
  %v295 = vmax.f32 %v167, %v231
  %v296 = vmax.f32 %v168, %v232
  %v297 = vmax.f32 %v169, %v233
  %v298 = vmax.f32 %v170, %v234
  %v299 = vmax.f32 %v171, %v235
  %v300 = vmax.f32 %v172, %v236
  %v301 = vmax.f32 %v173, %v237
  %v302 = vmax.f32 %v174, %v238
  %v303 = vmax.f32 %v175, %v239
  %v304 = vmax.f32 %v176, %v240
  %v305 = vmax.f32 %v177, %v241
  %v306 = vmax.f32 %v178, %v242
  %v307 = vmax.f32 %v179, %v243
  %v308 = vmax.f32 %v180, %v244
  %v309 = vmax.f32 %v181, %v245
  %v310 = vmax.f32 %v182, %v246
  %v311 = vmax.f32 %v183, %v247
  %v312 = vmax.f32 %v184, %v248
  %v313 = vmax.f32 %v185, %v249
  %v314 = vmax.f32 %v186, %v250
  %v315 = vmax.f32 %v187, %v251
  %v316 = vmax.f32 %v188, %v252
  %v317 = vmax.f32 %v189, %v253
  %v318 = vmax.f32 %v190, %v254
  %v319 = vmax.f32 %v191, %v255
  %v320 = vmax.f32 %v192, %v256
  %v321 = vmax.f32 %v193, %v257
  %v322 = vmax.f32 %v194, %v258
  %v323 = vmax.f32 %v195, %v259
  %v324 = vmax.f32 %v196, %v260
  %v325 = vmax.f32 %v197, %v261
  %v326 = vmax.f32 %v198, %v262
  %v327 = vmax.f32 %v199, %v263
  %v328 = vld [vmem:[%s0 + $0x3] sm:$0x1]
  %v329 = vld [vmem:[%s0 + $0x13] sm:$0x1]
  %v330 = vld [vmem:[%s0 + $0x23] sm:$0x1]
  %v331 = vld [vmem:[%s0 + $0x33] sm:$0x1]
  %v332 = vld [vmem:[%s0 + $0x43] sm:$0x1]
  %v333 = vld [vmem:[%s0 + $0x53] sm:$0x1]
  %v334 = vld [vmem:[%s0 + $0x63] sm:$0x1]
  %v335 = vld [vmem:[%s0 + $0x73] sm:$0x1]
  %v336 = vld [vmem:[%s0 + $0x83] sm:$0x1]
  %v337 = vld [vmem:[%s0 + $0x93] sm:$0x1]
  %v338 = vld [vmem:[%s0 + $0xa3] sm:$0x1]
  %v339 = vld [vmem:[%s0 + $0xb3] sm:$0x1]
  %v340 = vld [vmem:[%s0 + $0xc3] sm:$0x1]
  %v341 = vld [vmem:[%s0 + $0xd3] sm:$0x1]
  %v342 = vld [vmem:[%s0 + $0xe3] sm:$0x1]
  %v343 = vld [vmem:[%s0 + $0xf3] sm:$0x1]
  %v344 = vld [vmem:[%s0 + $0x103] sm:$0x1]
  %v345 = vld [vmem:[%s0 + $0x113] sm:$0x1]
  %v346 = vld [vmem:[%s0 + $0x123] sm:$0x1]
  %v347 = vld [vmem:[%s0 + $0x133] sm:$0x1]
  %v348 = vld [vmem:[%s0 + $0x143] sm:$0x1]
  %v349 = vld [vmem:[%s0 + $0x153] sm:$0x1]
  %v350 = vld [vmem:[%s0 + $0x163] sm:$0x1]
  %v351 = vld [vmem:[%s0 + $0x173] sm:$0x1]
  %v352 = vld [vmem:[%s0 + $0x183] sm:$0x1]
  %v353 = vld [vmem:[%s0 + $0x193] sm:$0x1]
  %v354 = vld [vmem:[%s0 + $0x1a3] sm:$0x1]
  %v355 = vld [vmem:[%s0 + $0x1b3] sm:$0x1]
  %v356 = vld [vmem:[%s0 + $0x1c3] sm:$0x1]
  %v357 = vld [vmem:[%s0 + $0x1d3] sm:$0x1]
  %v358 = vld [vmem:[%s0 + $0x1e3] sm:$0x1]
  %v359 = vld [vmem:[%s0 + $0x1f3] sm:$0x1]
  %v360 = vld [vmem:[%s0 + $0x203] sm:$0x1]
  %v361 = vld [vmem:[%s0 + $0x213] sm:$0x1]
  %v362 = vld [vmem:[%s0 + $0x223] sm:$0x1]
  %v363 = vld [vmem:[%s0 + $0x233] sm:$0x1]
  %v364 = vld [vmem:[%s0 + $0x243] sm:$0x1]
  %v365 = vld [vmem:[%s0 + $0x253] sm:$0x1]
  %v366 = vld [vmem:[%s0 + $0x263] sm:$0x1]
  %v367 = vld [vmem:[%s0 + $0x273] sm:$0x1]
  %v368 = vld [vmem:[%s0 + $0x283] sm:$0x1]
  %v369 = vld [vmem:[%s0 + $0x293] sm:$0x1]
  %v370 = vld [vmem:[%s0 + $0x2a3] sm:$0x1]
  %v371 = vld [vmem:[%s0 + $0x2b3] sm:$0x1]
  %v372 = vld [vmem:[%s0 + $0x2c3] sm:$0x1]
  %v373 = vld [vmem:[%s0 + $0x2d3] sm:$0x1]
  %v374 = vld [vmem:[%s0 + $0x2e3] sm:$0x1]
  %v375 = vld [vmem:[%s0 + $0x2f3] sm:$0x1]
  %v376 = vld [vmem:[%s0 + $0x303] sm:$0x1]
  %v377 = vld [vmem:[%s0 + $0x313] sm:$0x1]
  %v378 = vld [vmem:[%s0 + $0x323] sm:$0x1]
  %v379 = vld [vmem:[%s0 + $0x333] sm:$0x1]
  %v380 = vld [vmem:[%s0 + $0x343] sm:$0x1]
  %v381 = vld [vmem:[%s0 + $0x353] sm:$0x1]
  %v382 = vld [vmem:[%s0 + $0x363] sm:$0x1]
  %v383 = vld [vmem:[%s0 + $0x373] sm:$0x1]
  %v384 = vld [vmem:[%s0 + $0x383] sm:$0x1]
  %v385 = vld [vmem:[%s0 + $0x393] sm:$0x1]
  %v386 = vld [vmem:[%s0 + $0x3a3] sm:$0x1]
  %v387 = vld [vmem:[%s0 + $0x3b3] sm:$0x1]
  %v388 = vld [vmem:[%s0 + $0x3c3] sm:$0x1]
  %v389 = vld [vmem:[%s0 + $0x3d3] sm:$0x1]
  %v390 = vld [vmem:[%s0 + $0x3e3] sm:$0x1]
  %v391 = vld [vmem:[%s0 + $0x3f3] sm:$0x1]
  %v392 = vmax.f32 %v264, %v328
  %v393 = vmax.f32 %v265, %v329
  %v394 = vmax.f32 %v266, %v330
  %v395 = vmax.f32 %v267, %v331
  %v396 = vmax.f32 %v268, %v332
  %v397 = vmax.f32 %v269, %v333
  %v398 = vmax.f32 %v270, %v334
  %v399 = vmax.f32 %v271, %v335
  %v400 = vmax.f32 %v272, %v336
  %v401 = vmax.f32 %v273, %v337
  %v402 = vmax.f32 %v274, %v338
  %v403 = vmax.f32 %v275, %v339
  %v404 = vmax.f32 %v276, %v340
  %v405 = vmax.f32 %v277, %v341
  %v406 = vmax.f32 %v278, %v342
  %v407 = vmax.f32 %v279, %v343
  %v408 = vmax.f32 %v280, %v344
  %v409 = vmax.f32 %v281, %v345
  %v410 = vmax.f32 %v282, %v346
  %v411 = vmax.f32 %v283, %v347
  %v412 = vmax.f32 %v284, %v348
  %v413 = vmax.f32 %v285, %v349
  %v414 = vmax.f32 %v286, %v350
  %v415 = vmax.f32 %v287, %v351
  %v416 = vmax.f32 %v288, %v352
  %v417 = vmax.f32 %v289, %v353
  %v418 = vmax.f32 %v290, %v354
  %v419 = vmax.f32 %v291, %v355
  %v420 = vmax.f32 %v292, %v356
  %v421 = vmax.f32 %v293, %v357
  %v422 = vmax.f32 %v294, %v358
  %v423 = vmax.f32 %v295, %v359
  %v424 = vmax.f32 %v296, %v360
  %v425 = vmax.f32 %v297, %v361
  %v426 = vmax.f32 %v298, %v362
  %v427 = vmax.f32 %v299, %v363
  %v428 = vmax.f32 %v300, %v364
  %v429 = vmax.f32 %v301, %v365
  %v430 = vmax.f32 %v302, %v366
  %v431 = vmax.f32 %v303, %v367
  %v432 = vmax.f32 %v304, %v368
  %v433 = vmax.f32 %v305, %v369
  %v434 = vmax.f32 %v306, %v370
  %v435 = vmax.f32 %v307, %v371
  %v436 = vmax.f32 %v308, %v372
  %v437 = vmax.f32 %v309, %v373
  %v438 = vmax.f32 %v310, %v374
  %v439 = vmax.f32 %v311, %v375
  %v440 = vmax.f32 %v312, %v376
  %v441 = vmax.f32 %v313, %v377
  %v442 = vmax.f32 %v314, %v378
  %v443 = vmax.f32 %v315, %v379
  %v444 = vmax.f32 %v316, %v380
  %v445 = vmax.f32 %v317, %v381
  %v446 = vmax.f32 %v318, %v382
  %v447 = vmax.f32 %v319, %v383
  %v448 = vmax.f32 %v320, %v384
  %v449 = vmax.f32 %v321, %v385
  %v450 = vmax.f32 %v322, %v386
  %v451 = vmax.f32 %v323, %v387
  %v452 = vmax.f32 %v324, %v388
  %v453 = vmax.f32 %v325, %v389
  %v454 = vmax.f32 %v326, %v390
  %v455 = vmax.f32 %v327, %v391
  %v456 = vld [vmem:[%s0 + $0x4] sm:$0x1]
  %v457 = vld [vmem:[%s0 + $0x14] sm:$0x1]
  %v458 = vld [vmem:[%s0 + $0x24] sm:$0x1]
  %v459 = vld [vmem:[%s0 + $0x34] sm:$0x1]
  %v460 = vld [vmem:[%s0 + $0x44] sm:$0x1]
  %v461 = vld [vmem:[%s0 + $0x54] sm:$0x1]
  %v462 = vld [vmem:[%s0 + $0x64] sm:$0x1]
  %v463 = vld [vmem:[%s0 + $0x74] sm:$0x1]
  %v464 = vld [vmem:[%s0 + $0x84] sm:$0x1]
  %v465 = vld [vmem:[%s0 + $0x94] sm:$0x1]
  %v466 = vld [vmem:[%s0 + $0xa4] sm:$0x1]
  %v467 = vld [vmem:[%s0 + $0xb4] sm:$0x1]
  %v468 = vld [vmem:[%s0 + $0xc4] sm:$0x1]
  %v469 = vld [vmem:[%s0 + $0xd4] sm:$0x1]
  %v470 = vld [vmem:[%s0 + $0xe4] sm:$0x1]
  %v471 = vld [vmem:[%s0 + $0xf4] sm:$0x1]
  %v472 = vld [vmem:[%s0 + $0x104] sm:$0x1]
  %v473 = vld [vmem:[%s0 + $0x114] sm:$0x1]
  %v474 = vld [vmem:[%s0 + $0x124] sm:$0x1]
  %v475 = vld [vmem:[%s0 + $0x134] sm:$0x1]
  %v476 = vld [vmem:[%s0 + $0x144] sm:$0x1]
  %v477 = vld [vmem:[%s0 + $0x154] sm:$0x1]
  %v478 = vld [vmem:[%s0 + $0x164] sm:$0x1]
  %v479 = vld [vmem:[%s0 + $0x174] sm:$0x1]
  %v480 = vld [vmem:[%s0 + $0x184] sm:$0x1]
  %v481 = vld [vmem:[%s0 + $0x194] sm:$0x1]
  %v482 = vld [vmem:[%s0 + $0x1a4] sm:$0x1]
  %v483 = vld [vmem:[%s0 + $0x1b4] sm:$0x1]
  %v484 = vld [vmem:[%s0 + $0x1c4] sm:$0x1]
  %v485 = vld [vmem:[%s0 + $0x1d4] sm:$0x1]
  %v486 = vld [vmem:[%s0 + $0x1e4] sm:$0x1]
  %v487 = vld [vmem:[%s0 + $0x1f4] sm:$0x1]
  %v488 = vld [vmem:[%s0 + $0x204] sm:$0x1]
  %v489 = vld [vmem:[%s0 + $0x214] sm:$0x1]
  %v490 = vld [vmem:[%s0 + $0x224] sm:$0x1]
  %v491 = vld [vmem:[%s0 + $0x234] sm:$0x1]
  %v492 = vld [vmem:[%s0 + $0x244] sm:$0x1]
  %v493 = vld [vmem:[%s0 + $0x254] sm:$0x1]
  %v494 = vld [vmem:[%s0 + $0x264] sm:$0x1]
  %v495 = vld [vmem:[%s0 + $0x274] sm:$0x1]
  %v496 = vld [vmem:[%s0 + $0x284] sm:$0x1]
  %v497 = vld [vmem:[%s0 + $0x294] sm:$0x1]
  %v498 = vld [vmem:[%s0 + $0x2a4] sm:$0x1]
  %v499 = vld [vmem:[%s0 + $0x2b4] sm:$0x1]
  %v500 = vld [vmem:[%s0 + $0x2c4] sm:$0x1]
  %v501 = vld [vmem:[%s0 + $0x2d4] sm:$0x1]
  %v502 = vld [vmem:[%s0 + $0x2e4] sm:$0x1]
  %v503 = vld [vmem:[%s0 + $0x2f4] sm:$0x1]
  %v504 = vld [vmem:[%s0 + $0x304] sm:$0x1]
  %v505 = vld [vmem:[%s0 + $0x314] sm:$0x1]
  %v506 = vld [vmem:[%s0 + $0x324] sm:$0x1]
  %v507 = vld [vmem:[%s0 + $0x334] sm:$0x1]
  %v508 = vld [vmem:[%s0 + $0x344] sm:$0x1]
  %v509 = vld [vmem:[%s0 + $0x354] sm:$0x1]
  %v510 = vld [vmem:[%s0 + $0x364] sm:$0x1]
  %v511 = vld [vmem:[%s0 + $0x374] sm:$0x1]
  %v512 = vld [vmem:[%s0 + $0x384] sm:$0x1]
  %v513 = vld [vmem:[%s0 + $0x394] sm:$0x1]
  %v514 = vld [vmem:[%s0 + $0x3a4] sm:$0x1]
  %v515 = vld [vmem:[%s0 + $0x3b4] sm:$0x1]
  %v516 = vld [vmem:[%s0 + $0x3c4] sm:$0x1]
  %v517 = vld [vmem:[%s0 + $0x3d4] sm:$0x1]
  %v518 = vld [vmem:[%s0 + $0x3e4] sm:$0x1]
  %v519 = vld [vmem:[%s0 + $0x3f4] sm:$0x1]
  %v520 = vmax.f32 %v392, %v456
  %v521 = vmax.f32 %v393, %v457
  %v522 = vmax.f32 %v394, %v458
  %v523 = vmax.f32 %v395, %v459
  %v524 = vmax.f32 %v396, %v460
  %v525 = vmax.f32 %v397, %v461
  %v526 = vmax.f32 %v398, %v462
  %v527 = vmax.f32 %v399, %v463
  %v528 = vmax.f32 %v400, %v464
  %v529 = vmax.f32 %v401, %v465
  %v530 = vmax.f32 %v402, %v466
  %v531 = vmax.f32 %v403, %v467
  %v532 = vmax.f32 %v404, %v468
  %v533 = vmax.f32 %v405, %v469
  %v534 = vmax.f32 %v406, %v470
  %v535 = vmax.f32 %v407, %v471
  %v536 = vmax.f32 %v408, %v472
  %v537 = vmax.f32 %v409, %v473
  %v538 = vmax.f32 %v410, %v474
  %v539 = vmax.f32 %v411, %v475
  %v540 = vmax.f32 %v412, %v476
  %v541 = vmax.f32 %v413, %v477
  %v542 = vmax.f32 %v414, %v478
  %v543 = vmax.f32 %v415, %v479
  %v544 = vmax.f32 %v416, %v480
  %v545 = vmax.f32 %v417, %v481
  %v546 = vmax.f32 %v418, %v482
  %v547 = vmax.f32 %v419, %v483
  %v548 = vmax.f32 %v420, %v484
  %v549 = vmax.f32 %v421, %v485
  %v550 = vmax.f32 %v422, %v486
  %v551 = vmax.f32 %v423, %v487
  %v552 = vmax.f32 %v424, %v488
  %v553 = vmax.f32 %v425, %v489
  %v554 = vmax.f32 %v426, %v490
  %v555 = vmax.f32 %v427, %v491
  %v556 = vmax.f32 %v428, %v492
  %v557 = vmax.f32 %v429, %v493
  %v558 = vmax.f32 %v430, %v494
  %v559 = vmax.f32 %v431, %v495
  %v560 = vmax.f32 %v432, %v496
  %v561 = vmax.f32 %v433, %v497
  %v562 = vmax.f32 %v434, %v498
  %v563 = vmax.f32 %v435, %v499
  %v564 = vmax.f32 %v436, %v500
  %v565 = vmax.f32 %v437, %v501
  %v566 = vmax.f32 %v438, %v502
  %v567 = vmax.f32 %v439, %v503
  %v568 = vmax.f32 %v440, %v504
  %v569 = vmax.f32 %v441, %v505
  %v570 = vmax.f32 %v442, %v506
  %v571 = vmax.f32 %v443, %v507
  %v572 = vmax.f32 %v444, %v508
  %v573 = vmax.f32 %v445, %v509
  %v574 = vmax.f32 %v446, %v510
  %v575 = vmax.f32 %v447, %v511
  %v576 = vmax.f32 %v448, %v512
  %v577 = vmax.f32 %v449, %v513
  %v578 = vmax.f32 %v450, %v514
  %v579 = vmax.f32 %v451, %v515
  %v580 = vmax.f32 %v452, %v516
  %v581 = vmax.f32 %v453, %v517
  %v582 = vmax.f32 %v454, %v518
  %v583 = vmax.f32 %v455, %v519
  %v584 = vld [vmem:[%s0 + $0x5] sm:$0x1]
  %v585 = vld [vmem:[%s0 + $0x15] sm:$0x1]
  %v586 = vld [vmem:[%s0 + $0x25] sm:$0x1]
  %v587 = vld [vmem:[%s0 + $0x35] sm:$0x1]
  %v588 = vld [vmem:[%s0 + $0x45] sm:$0x1]
  %v589 = vld [vmem:[%s0 + $0x55] sm:$0x1]
  %v590 = vld [vmem:[%s0 + $0x65] sm:$0x1]
  %v591 = vld [vmem:[%s0 + $0x75] sm:$0x1]
  %v592 = vld [vmem:[%s0 + $0x85] sm:$0x1]
  %v593 = vld [vmem:[%s0 + $0x95] sm:$0x1]
  %v594 = vld [vmem:[%s0 + $0xa5] sm:$0x1]
  %v595 = vld [vmem:[%s0 + $0xb5] sm:$0x1]
  %v596 = vld [vmem:[%s0 + $0xc5] sm:$0x1]
  %v597 = vld [vmem:[%s0 + $0xd5] sm:$0x1]
  %v598 = vld [vmem:[%s0 + $0xe5] sm:$0x1]
  %v599 = vld [vmem:[%s0 + $0xf5] sm:$0x1]
  %v600 = vld [vmem:[%s0 + $0x105] sm:$0x1]
  %v601 = vld [vmem:[%s0 + $0x115] sm:$0x1]
  %v602 = vld [vmem:[%s0 + $0x125] sm:$0x1]
  %v603 = vld [vmem:[%s0 + $0x135] sm:$0x1]
  %v604 = vld [vmem:[%s0 + $0x145] sm:$0x1]
  %v605 = vld [vmem:[%s0 + $0x155] sm:$0x1]
  %v606 = vld [vmem:[%s0 + $0x165] sm:$0x1]
  %v607 = vld [vmem:[%s0 + $0x175] sm:$0x1]
  %v608 = vld [vmem:[%s0 + $0x185] sm:$0x1]
  %v609 = vld [vmem:[%s0 + $0x195] sm:$0x1]
  %v610 = vld [vmem:[%s0 + $0x1a5] sm:$0x1]
  %v611 = vld [vmem:[%s0 + $0x1b5] sm:$0x1]
  %v612 = vld [vmem:[%s0 + $0x1c5] sm:$0x1]
  %v613 = vld [vmem:[%s0 + $0x1d5] sm:$0x1]
  %v614 = vld [vmem:[%s0 + $0x1e5] sm:$0x1]
  %v615 = vld [vmem:[%s0 + $0x1f5] sm:$0x1]
  %v616 = vld [vmem:[%s0 + $0x205] sm:$0x1]
  %v617 = vld [vmem:[%s0 + $0x215] sm:$0x1]
  %v618 = vld [vmem:[%s0 + $0x225] sm:$0x1]
  %v619 = vld [vmem:[%s0 + $0x235] sm:$0x1]
  %v620 = vld [vmem:[%s0 + $0x245] sm:$0x1]
  %v621 = vld [vmem:[%s0 + $0x255] sm:$0x1]
  %v622 = vld [vmem:[%s0 + $0x265] sm:$0x1]
  %v623 = vld [vmem:[%s0 + $0x275] sm:$0x1]
  %v624 = vld [vmem:[%s0 + $0x285] sm:$0x1]
  %v625 = vld [vmem:[%s0 + $0x295] sm:$0x1]
  %v626 = vld [vmem:[%s0 + $0x2a5] sm:$0x1]
  %v627 = vld [vmem:[%s0 + $0x2b5] sm:$0x1]
  %v628 = vld [vmem:[%s0 + $0x2c5] sm:$0x1]
  %v629 = vld [vmem:[%s0 + $0x2d5] sm:$0x1]
  %v630 = vld [vmem:[%s0 + $0x2e5] sm:$0x1]
  %v631 = vld [vmem:[%s0 + $0x2f5] sm:$0x1]
  %v632 = vld [vmem:[%s0 + $0x305] sm:$0x1]
  %v633 = vld [vmem:[%s0 + $0x315] sm:$0x1]
  %v634 = vld [vmem:[%s0 + $0x325] sm:$0x1]
  %v635 = vld [vmem:[%s0 + $0x335] sm:$0x1]
  %v636 = vld [vmem:[%s0 + $0x345] sm:$0x1]
  %v637 = vld [vmem:[%s0 + $0x355] sm:$0x1]
  %v638 = vld [vmem:[%s0 + $0x365] sm:$0x1]
  %v639 = vld [vmem:[%s0 + $0x375] sm:$0x1]
  %v640 = vld [vmem:[%s0 + $0x385] sm:$0x1]
  %v641 = vld [vmem:[%s0 + $0x395] sm:$0x1]
  %v642 = vld [vmem:[%s0 + $0x3a5] sm:$0x1]
  %v643 = vld [vmem:[%s0 + $0x3b5] sm:$0x1]
  %v644 = vld [vmem:[%s0 + $0x3c5] sm:$0x1]
  %v645 = vld [vmem:[%s0 + $0x3d5] sm:$0x1]
  %v646 = vld [vmem:[%s0 + $0x3e5] sm:$0x1]
  %v647 = vld [vmem:[%s0 + $0x3f5] sm:$0x1]
  %v648 = vmax.f32 %v520, %v584
  %v649 = vmax.f32 %v521, %v585
  %v650 = vmax.f32 %v522, %v586
  %v651 = vmax.f32 %v523, %v587
  %v652 = vmax.f32 %v524, %v588
  %v653 = vmax.f32 %v525, %v589
  %v654 = vmax.f32 %v526, %v590
  %v655 = vmax.f32 %v527, %v591
  %v656 = vmax.f32 %v528, %v592
  %v657 = vmax.f32 %v529, %v593
  %v658 = vmax.f32 %v530, %v594
  %v659 = vmax.f32 %v531, %v595
  %v660 = vmax.f32 %v532, %v596
  %v661 = vmax.f32 %v533, %v597
  %v662 = vmax.f32 %v534, %v598
  %v663 = vmax.f32 %v535, %v599
  %v664 = vmax.f32 %v536, %v600
  %v665 = vmax.f32 %v537, %v601
  %v666 = vmax.f32 %v538, %v602
  %v667 = vmax.f32 %v539, %v603
  %v668 = vmax.f32 %v540, %v604
  %v669 = vmax.f32 %v541, %v605
  %v670 = vmax.f32 %v542, %v606
  %v671 = vmax.f32 %v543, %v607
  %v672 = vmax.f32 %v544, %v608
  %v673 = vmax.f32 %v545, %v609
  %v674 = vmax.f32 %v546, %v610
  %v675 = vmax.f32 %v547, %v611
  %v676 = vmax.f32 %v548, %v612
  %v677 = vmax.f32 %v549, %v613
  %v678 = vmax.f32 %v550, %v614
  %v679 = vmax.f32 %v551, %v615
  %v680 = vmax.f32 %v552, %v616
  %v681 = vmax.f32 %v553, %v617
  %v682 = vmax.f32 %v554, %v618
  %v683 = vmax.f32 %v555, %v619
  %v684 = vmax.f32 %v556, %v620
  %v685 = vmax.f32 %v557, %v621
  %v686 = vmax.f32 %v558, %v622
  %v687 = vmax.f32 %v559, %v623
  %v688 = vmax.f32 %v560, %v624
  %v689 = vmax.f32 %v561, %v625
  %v690 = vmax.f32 %v562, %v626
  %v691 = vmax.f32 %v563, %v627
  %v692 = vmax.f32 %v564, %v628
  %v693 = vmax.f32 %v565, %v629
  %v694 = vmax.f32 %v566, %v630
  %v695 = vmax.f32 %v567, %v631
  %v696 = vmax.f32 %v568, %v632
  %v697 = vmax.f32 %v569, %v633
  %v698 = vmax.f32 %v570, %v634
  %v699 = vmax.f32 %v571, %v635
  %v700 = vmax.f32 %v572, %v636
  %v701 = vmax.f32 %v573, %v637
  %v702 = vmax.f32 %v574, %v638
  %v703 = vmax.f32 %v575, %v639
  %v704 = vmax.f32 %v576, %v640
  %v705 = vmax.f32 %v577, %v641
  %v706 = vmax.f32 %v578, %v642
  %v707 = vmax.f32 %v579, %v643
  %v708 = vmax.f32 %v580, %v644
  %v709 = vmax.f32 %v581, %v645
  %v710 = vmax.f32 %v582, %v646
  %v711 = vmax.f32 %v583, %v647
  %v712 = vld [vmem:[%s0 + $0x6] sm:$0x1]
  %v713 = vld [vmem:[%s0 + $0x16] sm:$0x1]
  %v714 = vld [vmem:[%s0 + $0x26] sm:$0x1]
  %v715 = vld [vmem:[%s0 + $0x36] sm:$0x1]
  %v716 = vld [vmem:[%s0 + $0x46] sm:$0x1]
  %v717 = vld [vmem:[%s0 + $0x56] sm:$0x1]
  %v718 = vld [vmem:[%s0 + $0x66] sm:$0x1]
  %v719 = vld [vmem:[%s0 + $0x76] sm:$0x1]
  %v720 = vld [vmem:[%s0 + $0x86] sm:$0x1]
  %v721 = vld [vmem:[%s0 + $0x96] sm:$0x1]
  %v722 = vld [vmem:[%s0 + $0xa6] sm:$0x1]
  %v723 = vld [vmem:[%s0 + $0xb6] sm:$0x1]
  %v724 = vld [vmem:[%s0 + $0xc6] sm:$0x1]
  %v725 = vld [vmem:[%s0 + $0xd6] sm:$0x1]
  %v726 = vld [vmem:[%s0 + $0xe6] sm:$0x1]
  %v727 = vld [vmem:[%s0 + $0xf6] sm:$0x1]
  %v728 = vld [vmem:[%s0 + $0x106] sm:$0x1]
  %v729 = vld [vmem:[%s0 + $0x116] sm:$0x1]
  %v730 = vld [vmem:[%s0 + $0x126] sm:$0x1]
  %v731 = vld [vmem:[%s0 + $0x136] sm:$0x1]
  %v732 = vld [vmem:[%s0 + $0x146] sm:$0x1]
  %v733 = vld [vmem:[%s0 + $0x156] sm:$0x1]
  %v734 = vld [vmem:[%s0 + $0x166] sm:$0x1]
  %v735 = vld [vmem:[%s0 + $0x176] sm:$0x1]
  %v736 = vld [vmem:[%s0 + $0x186] sm:$0x1]
  %v737 = vld [vmem:[%s0 + $0x196] sm:$0x1]
  %v738 = vld [vmem:[%s0 + $0x1a6] sm:$0x1]
  %v739 = vld [vmem:[%s0 + $0x1b6] sm:$0x1]
  %v740 = vld [vmem:[%s0 + $0x1c6] sm:$0x1]
  %v741 = vld [vmem:[%s0 + $0x1d6] sm:$0x1]
  %v742 = vld [vmem:[%s0 + $0x1e6] sm:$0x1]
  %v743 = vld [vmem:[%s0 + $0x1f6] sm:$0x1]
  %v744 = vld [vmem:[%s0 + $0x206] sm:$0x1]
  %v745 = vld [vmem:[%s0 + $0x216] sm:$0x1]
  %v746 = vld [vmem:[%s0 + $0x226] sm:$0x1]
  %v747 = vld [vmem:[%s0 + $0x236] sm:$0x1]
  %v748 = vld [vmem:[%s0 + $0x246] sm:$0x1]
  %v749 = vld [vmem:[%s0 + $0x256] sm:$0x1]
  %v750 = vld [vmem:[%s0 + $0x266] sm:$0x1]
  %v751 = vld [vmem:[%s0 + $0x276] sm:$0x1]
  %v752 = vld [vmem:[%s0 + $0x286] sm:$0x1]
  %v753 = vld [vmem:[%s0 + $0x296] sm:$0x1]
  %v754 = vld [vmem:[%s0 + $0x2a6] sm:$0x1]
  %v755 = vld [vmem:[%s0 + $0x2b6] sm:$0x1]
  %v756 = vld [vmem:[%s0 + $0x2c6] sm:$0x1]
  %v757 = vld [vmem:[%s0 + $0x2d6] sm:$0x1]
  %v758 = vld [vmem:[%s0 + $0x2e6] sm:$0x1]
  %v759 = vld [vmem:[%s0 + $0x2f6] sm:$0x1]
  %v760 = vld [vmem:[%s0 + $0x306] sm:$0x1]
  %v761 = vld [vmem:[%s0 + $0x316] sm:$0x1]
  %v762 = vld [vmem:[%s0 + $0x326] sm:$0x1]
  %v763 = vld [vmem:[%s0 + $0x336] sm:$0x1]
  %v764 = vld [vmem:[%s0 + $0x346] sm:$0x1]
  %v765 = vld [vmem:[%s0 + $0x356] sm:$0x1]
  %v766 = vld [vmem:[%s0 + $0x366] sm:$0x1]
  %v767 = vld [vmem:[%s0 + $0x376] sm:$0x1]
  %v768 = vld [vmem:[%s0 + $0x386] sm:$0x1]
  %v769 = vld [vmem:[%s0 + $0x396] sm:$0x1]
  %v770 = vld [vmem:[%s0 + $0x3a6] sm:$0x1]
  %v771 = vld [vmem:[%s0 + $0x3b6] sm:$0x1]
  %v772 = vld [vmem:[%s0 + $0x3c6] sm:$0x1]
  %v773 = vld [vmem:[%s0 + $0x3d6] sm:$0x1]
  %v774 = vld [vmem:[%s0 + $0x3e6] sm:$0x1]
  %v775 = vld [vmem:[%s0 + $0x3f6] sm:$0x1]
  %v776 = vmax.f32 %v648, %v712
  %v777 = vmax.f32 %v649, %v713
  %v778 = vmax.f32 %v650, %v714
  %v779 = vmax.f32 %v651, %v715
  %v780 = vmax.f32 %v652, %v716
  %v781 = vmax.f32 %v653, %v717
  %v782 = vmax.f32 %v654, %v718
  %v783 = vmax.f32 %v655, %v719
  %v784 = vmax.f32 %v656, %v720
  %v785 = vmax.f32 %v657, %v721
  %v786 = vmax.f32 %v658, %v722
  %v787 = vmax.f32 %v659, %v723
  %v788 = vmax.f32 %v660, %v724
  %v789 = vmax.f32 %v661, %v725
  %v790 = vmax.f32 %v662, %v726
  %v791 = vmax.f32 %v663, %v727
  %v792 = vmax.f32 %v664, %v728
  %v793 = vmax.f32 %v665, %v729
  %v794 = vmax.f32 %v666, %v730
  %v795 = vmax.f32 %v667, %v731
  %v796 = vmax.f32 %v668, %v732
  %v797 = vmax.f32 %v669, %v733
  %v798 = vmax.f32 %v670, %v734
  %v799 = vmax.f32 %v671, %v735
  %v800 = vmax.f32 %v672, %v736
  %v801 = vmax.f32 %v673, %v737
  %v802 = vmax.f32 %v674, %v738
  %v803 = vmax.f32 %v675, %v739
  %v804 = vmax.f32 %v676, %v740
  %v805 = vmax.f32 %v677, %v741
  %v806 = vmax.f32 %v678, %v742
  %v807 = vmax.f32 %v679, %v743
  %v808 = vmax.f32 %v680, %v744
  %v809 = vmax.f32 %v681, %v745
  %v810 = vmax.f32 %v682, %v746
  %v811 = vmax.f32 %v683, %v747
  %v812 = vmax.f32 %v684, %v748
  %v813 = vmax.f32 %v685, %v749
  %v814 = vmax.f32 %v686, %v750
  %v815 = vmax.f32 %v687, %v751
  %v816 = vmax.f32 %v688, %v752
  %v817 = vmax.f32 %v689, %v753
  %v818 = vmax.f32 %v690, %v754
  %v819 = vmax.f32 %v691, %v755
  %v820 = vmax.f32 %v692, %v756
  %v821 = vmax.f32 %v693, %v757
  %v822 = vmax.f32 %v694, %v758
  %v823 = vmax.f32 %v695, %v759
  %v824 = vmax.f32 %v696, %v760
  %v825 = vmax.f32 %v697, %v761
  %v826 = vmax.f32 %v698, %v762
  %v827 = vmax.f32 %v699, %v763
  %v828 = vmax.f32 %v700, %v764
  %v829 = vmax.f32 %v701, %v765
  %v830 = vmax.f32 %v702, %v766
  %v831 = vmax.f32 %v703, %v767
  %v832 = vmax.f32 %v704, %v768
  %v833 = vmax.f32 %v705, %v769
  %v834 = vmax.f32 %v706, %v770
  %v835 = vmax.f32 %v707, %v771
  %v836 = vmax.f32 %v708, %v772
  %v837 = vmax.f32 %v709, %v773
  %v838 = vmax.f32 %v710, %v774
  %v839 = vmax.f32 %v711, %v775
  %v840 = vld [vmem:[%s0 + $0x7] sm:$0x1]
  %v841 = vld [vmem:[%s0 + $0x17] sm:$0x1]
  %v842 = vld [vmem:[%s0 + $0x27] sm:$0x1]
  %v843 = vld [vmem:[%s0 + $0x37] sm:$0x1]
  %v844 = vld [vmem:[%s0 + $0x47] sm:$0x1]
  %v845 = vld [vmem:[%s0 + $0x57] sm:$0x1]
  %v846 = vld [vmem:[%s0 + $0x67] sm:$0x1]
  %v847 = vld [vmem:[%s0 + $0x77] sm:$0x1]
  %v848 = vld [vmem:[%s0 + $0x87] sm:$0x1]
  %v849 = vld [vmem:[%s0 + $0x97] sm:$0x1]
  %v850 = vld [vmem:[%s0 + $0xa7] sm:$0x1]
  %v851 = vld [vmem:[%s0 + $0xb7] sm:$0x1]
  %v852 = vld [vmem:[%s0 + $0xc7] sm:$0x1]
  %v853 = vld [vmem:[%s0 + $0xd7] sm:$0x1]
  %v854 = vld [vmem:[%s0 + $0xe7] sm:$0x1]
  %v855 = vld [vmem:[%s0 + $0xf7] sm:$0x1]
  %v856 = vld [vmem:[%s0 + $0x107] sm:$0x1]
  %v857 = vld [vmem:[%s0 + $0x117] sm:$0x1]
  %v858 = vld [vmem:[%s0 + $0x127] sm:$0x1]
  %v859 = vld [vmem:[%s0 + $0x137] sm:$0x1]
  %v860 = vld [vmem:[%s0 + $0x147] sm:$0x1]
  %v861 = vld [vmem:[%s0 + $0x157] sm:$0x1]
  %v862 = vld [vmem:[%s0 + $0x167] sm:$0x1]
  %v863 = vld [vmem:[%s0 + $0x177] sm:$0x1]
  %v864 = vld [vmem:[%s0 + $0x187] sm:$0x1]
  %v865 = vld [vmem:[%s0 + $0x197] sm:$0x1]
  %v866 = vld [vmem:[%s0 + $0x1a7] sm:$0x1]
  %v867 = vld [vmem:[%s0 + $0x1b7] sm:$0x1]
  %v868 = vld [vmem:[%s0 + $0x1c7] sm:$0x1]
  %v869 = vld [vmem:[%s0 + $0x1d7] sm:$0x1]
  %v870 = vld [vmem:[%s0 + $0x1e7] sm:$0x1]
  %v871 = vld [vmem:[%s0 + $0x1f7] sm:$0x1]
  %v872 = vld [vmem:[%s0 + $0x207] sm:$0x1]
  %v873 = vld [vmem:[%s0 + $0x217] sm:$0x1]
  %v874 = vld [vmem:[%s0 + $0x227] sm:$0x1]
  %v875 = vld [vmem:[%s0 + $0x237] sm:$0x1]
  %v876 = vld [vmem:[%s0 + $0x247] sm:$0x1]
  %v877 = vld [vmem:[%s0 + $0x257] sm:$0x1]
  %v878 = vld [vmem:[%s0 + $0x267] sm:$0x1]
  %v879 = vld [vmem:[%s0 + $0x277] sm:$0x1]
  %v880 = vld [vmem:[%s0 + $0x287] sm:$0x1]
  %v881 = vld [vmem:[%s0 + $0x297] sm:$0x1]
  %v882 = vld [vmem:[%s0 + $0x2a7] sm:$0x1]
  %v883 = vld [vmem:[%s0 + $0x2b7] sm:$0x1]
  %v884 = vld [vmem:[%s0 + $0x2c7] sm:$0x1]
  %v885 = vld [vmem:[%s0 + $0x2d7] sm:$0x1]
  %v886 = vld [vmem:[%s0 + $0x2e7] sm:$0x1]
  %v887 = vld [vmem:[%s0 + $0x2f7] sm:$0x1]
  %v888 = vld [vmem:[%s0 + $0x307] sm:$0x1]
  %v889 = vld [vmem:[%s0 + $0x317] sm:$0x1]
  %v890 = vld [vmem:[%s0 + $0x327] sm:$0x1]
  %v891 = vld [vmem:[%s0 + $0x337] sm:$0x1]
  %v892 = vld [vmem:[%s0 + $0x347] sm:$0x1]
  %v893 = vld [vmem:[%s0 + $0x357] sm:$0x1]
  %v894 = vld [vmem:[%s0 + $0x367] sm:$0x1]
  %v895 = vld [vmem:[%s0 + $0x377] sm:$0x1]
  %v896 = vld [vmem:[%s0 + $0x387] sm:$0x1]
  %v897 = vld [vmem:[%s0 + $0x397] sm:$0x1]
  %v898 = vld [vmem:[%s0 + $0x3a7] sm:$0x1]
  %v899 = vld [vmem:[%s0 + $0x3b7] sm:$0x1]
  %v900 = vld [vmem:[%s0 + $0x3c7] sm:$0x1]
  %v901 = vld [vmem:[%s0 + $0x3d7] sm:$0x1]
  %v902 = vld [vmem:[%s0 + $0x3e7] sm:$0x1]
  %v903 = vld [vmem:[%s0 + $0x3f7] sm:$0x1]
  %v904 = vmax.f32 %v776, %v840
  %v905 = vmax.f32 %v777, %v841
  %v906 = vmax.f32 %v778, %v842
  %v907 = vmax.f32 %v779, %v843
  %v908 = vmax.f32 %v780, %v844
  %v909 = vmax.f32 %v781, %v845
  %v910 = vmax.f32 %v782, %v846
  %v911 = vmax.f32 %v783, %v847
  %v912 = vmax.f32 %v784, %v848
  %v913 = vmax.f32 %v785, %v849
  %v914 = vmax.f32 %v786, %v850
  %v915 = vmax.f32 %v787, %v851
  %v916 = vmax.f32 %v788, %v852
  %v917 = vmax.f32 %v789, %v853
  %v918 = vmax.f32 %v790, %v854
  %v919 = vmax.f32 %v791, %v855
  %v920 = vmax.f32 %v792, %v856
  %v921 = vmax.f32 %v793, %v857
  %v922 = vmax.f32 %v794, %v858
  %v923 = vmax.f32 %v795, %v859
  %v924 = vmax.f32 %v796, %v860
  %v925 = vmax.f32 %v797, %v861
  %v926 = vmax.f32 %v798, %v862
  %v927 = vmax.f32 %v799, %v863
  %v928 = vmax.f32 %v800, %v864
  %v929 = vmax.f32 %v801, %v865
  %v930 = vmax.f32 %v802, %v866
  %v931 = vmax.f32 %v803, %v867
  %v932 = vmax.f32 %v804, %v868
  %v933 = vmax.f32 %v805, %v869
  %v934 = vmax.f32 %v806, %v870
  %v935 = vmax.f32 %v807, %v871
  %v936 = vmax.f32 %v808, %v872
  %v937 = vmax.f32 %v809, %v873
  %v938 = vmax.f32 %v810, %v874
  %v939 = vmax.f32 %v811, %v875
  %v940 = vmax.f32 %v812, %v876
  %v941 = vmax.f32 %v813, %v877
  %v942 = vmax.f32 %v814, %v878
  %v943 = vmax.f32 %v815, %v879
  %v944 = vmax.f32 %v816, %v880
  %v945 = vmax.f32 %v817, %v881
  %v946 = vmax.f32 %v818, %v882
  %v947 = vmax.f32 %v819, %v883
  %v948 = vmax.f32 %v820, %v884
  %v949 = vmax.f32 %v821, %v885
  %v950 = vmax.f32 %v822, %v886
  %v951 = vmax.f32 %v823, %v887
  %v952 = vmax.f32 %v824, %v888
  %v953 = vmax.f32 %v825, %v889
  %v954 = vmax.f32 %v826, %v890
  %v955 = vmax.f32 %v827, %v891
  %v956 = vmax.f32 %v828, %v892
  %v957 = vmax.f32 %v829, %v893
  %v958 = vmax.f32 %v830, %v894
  %v959 = vmax.f32 %v831, %v895
  %v960 = vmax.f32 %v832, %v896
  %v961 = vmax.f32 %v833, %v897
  %v962 = vmax.f32 %v834, %v898
  %v963 = vmax.f32 %v835, %v899
  %v964 = vmax.f32 %v836, %v900
  %v965 = vmax.f32 %v837, %v901
  %v966 = vmax.f32 %v838, %v902
  %v967 = vmax.f32 %v839, %v903
  %v968 = vld [vmem:[%s0 + $0x8] sm:$0x1]
  %v969 = vld [vmem:[%s0 + $0x18] sm:$0x1]
  %v970 = vld [vmem:[%s0 + $0x28] sm:$0x1]
  %v971 = vld [vmem:[%s0 + $0x38] sm:$0x1]
  %v972 = vld [vmem:[%s0 + $0x48] sm:$0x1]
  %v973 = vld [vmem:[%s0 + $0x58] sm:$0x1]
  %v974 = vld [vmem:[%s0 + $0x68] sm:$0x1]
  %v975 = vld [vmem:[%s0 + $0x78] sm:$0x1]
  %v976 = vld [vmem:[%s0 + $0x88] sm:$0x1]
  %v977 = vld [vmem:[%s0 + $0x98] sm:$0x1]
  %v978 = vld [vmem:[%s0 + $0xa8] sm:$0x1]
  %v979 = vld [vmem:[%s0 + $0xb8] sm:$0x1]
  %v980 = vld [vmem:[%s0 + $0xc8] sm:$0x1]
  %v981 = vld [vmem:[%s0 + $0xd8] sm:$0x1]
  %v982 = vld [vmem:[%s0 + $0xe8] sm:$0x1]
  %v983 = vld [vmem:[%s0 + $0xf8] sm:$0x1]
  %v984 = vld [vmem:[%s0 + $0x108] sm:$0x1]
  %v985 = vld [vmem:[%s0 + $0x118] sm:$0x1]
  %v986 = vld [vmem:[%s0 + $0x128] sm:$0x1]
  %v987 = vld [vmem:[%s0 + $0x138] sm:$0x1]
  %v988 = vld [vmem:[%s0 + $0x148] sm:$0x1]
  %v989 = vld [vmem:[%s0 + $0x158] sm:$0x1]
  %v990 = vld [vmem:[%s0 + $0x168] sm:$0x1]
  %v991 = vld [vmem:[%s0 + $0x178] sm:$0x1]
  %v992 = vld [vmem:[%s0 + $0x188] sm:$0x1]
  %v993 = vld [vmem:[%s0 + $0x198] sm:$0x1]
  %v994 = vld [vmem:[%s0 + $0x1a8] sm:$0x1]
  %v995 = vld [vmem:[%s0 + $0x1b8] sm:$0x1]
  %v996 = vld [vmem:[%s0 + $0x1c8] sm:$0x1]
  %v997 = vld [vmem:[%s0 + $0x1d8] sm:$0x1]
  %v998 = vld [vmem:[%s0 + $0x1e8] sm:$0x1]
  %v999 = vld [vmem:[%s0 + $0x1f8] sm:$0x1]
  %v1000 = vld [vmem:[%s0 + $0x208] sm:$0x1]
  %v1001 = vld [vmem:[%s0 + $0x218] sm:$0x1]
  %v1002 = vld [vmem:[%s0 + $0x228] sm:$0x1]
  %v1003 = vld [vmem:[%s0 + $0x238] sm:$0x1]
  %v1004 = vld [vmem:[%s0 + $0x248] sm:$0x1]
  %v1005 = vld [vmem:[%s0 + $0x258] sm:$0x1]
  %v1006 = vld [vmem:[%s0 + $0x268] sm:$0x1]
  %v1007 = vld [vmem:[%s0 + $0x278] sm:$0x1]
  %v1008 = vld [vmem:[%s0 + $0x288] sm:$0x1]
  %v1009 = vld [vmem:[%s0 + $0x298] sm:$0x1]
  %v1010 = vld [vmem:[%s0 + $0x2a8] sm:$0x1]
  %v1011 = vld [vmem:[%s0 + $0x2b8] sm:$0x1]
  %v1012 = vld [vmem:[%s0 + $0x2c8] sm:$0x1]
  %v1013 = vld [vmem:[%s0 + $0x2d8] sm:$0x1]
  %v1014 = vld [vmem:[%s0 + $0x2e8] sm:$0x1]
  %v1015 = vld [vmem:[%s0 + $0x2f8] sm:$0x1]
  %v1016 = vld [vmem:[%s0 + $0x308] sm:$0x1]
  %v1017 = vld [vmem:[%s0 + $0x318] sm:$0x1]
  %v1018 = vld [vmem:[%s0 + $0x328] sm:$0x1]
  %v1019 = vld [vmem:[%s0 + $0x338] sm:$0x1]
  %v1020 = vld [vmem:[%s0 + $0x348] sm:$0x1]
  %v1021 = vld [vmem:[%s0 + $0x358] sm:$0x1]
  %v1022 = vld [vmem:[%s0 + $0x368] sm:$0x1]
  %v1023 = vld [vmem:[%s0 + $0x378] sm:$0x1]
  %v1024 = vld [vmem:[%s0 + $0x388] sm:$0x1]
  %v1025 = vld [vmem:[%s0 + $0x398] sm:$0x1]
  %v1026 = vld [vmem:[%s0 + $0x3a8] sm:$0x1]
  %v1027 = vld [vmem:[%s0 + $0x3b8] sm:$0x1]
  %v1028 = vld [vmem:[%s0 + $0x3c8] sm:$0x1]
  %v1029 = vld [vmem:[%s0 + $0x3d8] sm:$0x1]
  %v1030 = vld [vmem:[%s0 + $0x3e8] sm:$0x1]
  %v1031 = vld [vmem:[%s0 + $0x3f8] sm:$0x1]
  %v1032 = vmax.f32 %v904, %v968
  %v1033 = vmax.f32 %v905, %v969
  %v1034 = vmax.f32 %v906, %v970
  %v1035 = vmax.f32 %v907, %v971
  %v1036 = vmax.f32 %v908, %v972
  %v1037 = vmax.f32 %v909, %v973
  %v1038 = vmax.f32 %v910, %v974
  %v1039 = vmax.f32 %v911, %v975
  %v1040 = vmax.f32 %v912, %v976
  %v1041 = vmax.f32 %v913, %v977
  %v1042 = vmax.f32 %v914, %v978
  %v1043 = vmax.f32 %v915, %v979
  %v1044 = vmax.f32 %v916, %v980
  %v1045 = vmax.f32 %v917, %v981
  %v1046 = vmax.f32 %v918, %v982
  %v1047 = vmax.f32 %v919, %v983
  %v1048 = vmax.f32 %v920, %v984
  %v1049 = vmax.f32 %v921, %v985
  %v1050 = vmax.f32 %v922, %v986
  %v1051 = vmax.f32 %v923, %v987
  %v1052 = vmax.f32 %v924, %v988
  %v1053 = vmax.f32 %v925, %v989
  %v1054 = vmax.f32 %v926, %v990
  %v1055 = vmax.f32 %v927, %v991
  %v1056 = vmax.f32 %v928, %v992
  %v1057 = vmax.f32 %v929, %v993
  %v1058 = vmax.f32 %v930, %v994
  %v1059 = vmax.f32 %v931, %v995
  %v1060 = vmax.f32 %v932, %v996
  %v1061 = vmax.f32 %v933, %v997
  %v1062 = vmax.f32 %v934, %v998
  %v1063 = vmax.f32 %v935, %v999
  %v1064 = vmax.f32 %v936, %v1000
  %v1065 = vmax.f32 %v937, %v1001
  %v1066 = vmax.f32 %v938, %v1002
  %v1067 = vmax.f32 %v939, %v1003
  %v1068 = vmax.f32 %v940, %v1004
  %v1069 = vmax.f32 %v941, %v1005
  %v1070 = vmax.f32 %v942, %v1006
  %v1071 = vmax.f32 %v943, %v1007
  %v1072 = vmax.f32 %v944, %v1008
  %v1073 = vmax.f32 %v945, %v1009
  %v1074 = vmax.f32 %v946, %v1010
  %v1075 = vmax.f32 %v947, %v1011
  %v1076 = vmax.f32 %v948, %v1012
  %v1077 = vmax.f32 %v949, %v1013
  %v1078 = vmax.f32 %v950, %v1014
  %v1079 = vmax.f32 %v951, %v1015
  %v1080 = vmax.f32 %v952, %v1016
  %v1081 = vmax.f32 %v953, %v1017
  %v1082 = vmax.f32 %v954, %v1018
  %v1083 = vmax.f32 %v955, %v1019
  %v1084 = vmax.f32 %v956, %v1020
  %v1085 = vmax.f32 %v957, %v1021
  %v1086 = vmax.f32 %v958, %v1022
  %v1087 = vmax.f32 %v959, %v1023
  %v1088 = vmax.f32 %v960, %v1024
  %v1089 = vmax.f32 %v961, %v1025
  %v1090 = vmax.f32 %v962, %v1026
  %v1091 = vmax.f32 %v963, %v1027
  %v1092 = vmax.f32 %v964, %v1028
  %v1093 = vmax.f32 %v965, %v1029
  %v1094 = vmax.f32 %v966, %v1030
  %v1095 = vmax.f32 %v967, %v1031
  %v1160 = vrot.slane %v1033, 7
  %vm1161 = vcmask 1041409
  %v1162 = vsel %vm1161, %v1160, %v1032
  %v1163 = vrot.slane %v1034, 6
  %vm1164 = vcmask 1042434
  %v1165 = vsel %vm1164, %v1163, %v1162
  %v1166 = vrot.slane %v1035, 5
  %vm1167 = vcmask 1043459
  %v1168 = vsel %vm1167, %v1166, %v1165
  %v1169 = vrot.slane %v1036, 4
  %vm1170 = vcmask 1044484
  %v1171 = vsel %vm1170, %v1169, %v1168
  %v1172 = vrot.slane %v1037, 3
  %vm1173 = vcmask 1045509
  %v1174 = vsel %vm1173, %v1172, %v1171
  %v1175 = vrot.slane %v1038, 2
  %vm1176 = vcmask 1046534
  %v1177 = vsel %vm1176, %v1175, %v1174
  %v1178 = vrot.slane %v1039, 1
  %vm1179 = vcmask 1047559
  %v1180 = vsel %vm1179, %v1178, %v1177
  %v1181 = vrot.slane %v1041, 7
  %v1182 = vsel %vm1161, %v1181, %v1040
  %v1183 = vrot.slane %v1042, 6
  %v1184 = vsel %vm1164, %v1183, %v1182
  %v1185 = vrot.slane %v1043, 5
  %v1186 = vsel %vm1167, %v1185, %v1184
  %v1187 = vrot.slane %v1044, 4
  %v1188 = vsel %vm1170, %v1187, %v1186
  %v1189 = vrot.slane %v1045, 3
  %v1190 = vsel %vm1173, %v1189, %v1188
  %v1191 = vrot.slane %v1046, 2
  %v1192 = vsel %vm1176, %v1191, %v1190
  %v1193 = vrot.slane %v1047, 1
  %v1194 = vsel %vm1179, %v1193, %v1192
  %v1195 = vrot.slane %v1049, 7
  %v1196 = vsel %vm1161, %v1195, %v1048
  %v1197 = vrot.slane %v1050, 6
  %v1198 = vsel %vm1164, %v1197, %v1196
  %v1199 = vrot.slane %v1051, 5
  %v1200 = vsel %vm1167, %v1199, %v1198
  %v1201 = vrot.slane %v1052, 4
  %v1202 = vsel %vm1170, %v1201, %v1200
  %v1203 = vrot.slane %v1053, 3
  %v1204 = vsel %vm1173, %v1203, %v1202
  %v1205 = vrot.slane %v1054, 2
  %v1206 = vsel %vm1176, %v1205, %v1204
  %v1207 = vrot.slane %v1055, 1
  %v1208 = vsel %vm1179, %v1207, %v1206
  %v1209 = vrot.slane %v1057, 7
  %v1210 = vsel %vm1161, %v1209, %v1056
  %v1211 = vrot.slane %v1058, 6
  %v1212 = vsel %vm1164, %v1211, %v1210
  %v1213 = vrot.slane %v1059, 5
  %v1214 = vsel %vm1167, %v1213, %v1212
  %v1215 = vrot.slane %v1060, 4
  %v1216 = vsel %vm1170, %v1215, %v1214
  %v1217 = vrot.slane %v1061, 3
  %v1218 = vsel %vm1173, %v1217, %v1216
  %v1219 = vrot.slane %v1062, 2
  %v1220 = vsel %vm1176, %v1219, %v1218
  %v1221 = vrot.slane %v1063, 1
  %v1222 = vsel %vm1179, %v1221, %v1220
  %v1223 = vrot.slane %v1065, 7
  %v1224 = vsel %vm1161, %v1223, %v1064
  %v1225 = vrot.slane %v1066, 6
  %v1226 = vsel %vm1164, %v1225, %v1224
  %v1227 = vrot.slane %v1067, 5
  %v1228 = vsel %vm1167, %v1227, %v1226
  %v1229 = vrot.slane %v1068, 4
  %v1230 = vsel %vm1170, %v1229, %v1228
  %v1231 = vrot.slane %v1069, 3
  %v1232 = vsel %vm1173, %v1231, %v1230
  %v1233 = vrot.slane %v1070, 2
  %v1234 = vsel %vm1176, %v1233, %v1232
  %v1235 = vrot.slane %v1071, 1
  %v1236 = vsel %vm1179, %v1235, %v1234
  %v1237 = vrot.slane %v1073, 7
  %v1238 = vsel %vm1161, %v1237, %v1072
  %v1239 = vrot.slane %v1074, 6
  %v1240 = vsel %vm1164, %v1239, %v1238
  %v1241 = vrot.slane %v1075, 5
  %v1242 = vsel %vm1167, %v1241, %v1240
  %v1243 = vrot.slane %v1076, 4
  %v1244 = vsel %vm1170, %v1243, %v1242
  %v1245 = vrot.slane %v1077, 3
  %v1246 = vsel %vm1173, %v1245, %v1244
  %v1247 = vrot.slane %v1078, 2
  %v1248 = vsel %vm1176, %v1247, %v1246
  %v1249 = vrot.slane %v1079, 1
  %v1250 = vsel %vm1179, %v1249, %v1248
  %v1251 = vrot.slane %v1081, 7
  %v1252 = vsel %vm1161, %v1251, %v1080
  %v1253 = vrot.slane %v1082, 6
  %v1254 = vsel %vm1164, %v1253, %v1252
  %v1255 = vrot.slane %v1083, 5
  %v1256 = vsel %vm1167, %v1255, %v1254
  %v1257 = vrot.slane %v1084, 4
  %v1258 = vsel %vm1170, %v1257, %v1256
  %v1259 = vrot.slane %v1085, 3
  %v1260 = vsel %vm1173, %v1259, %v1258
  %v1261 = vrot.slane %v1086, 2
  %v1262 = vsel %vm1176, %v1261, %v1260
  %v1263 = vrot.slane %v1087, 1
  %v1264 = vsel %vm1179, %v1263, %v1262
  %v1265 = vrot.slane %v1089, 7
  %v1266 = vsel %vm1161, %v1265, %v1088
  %v1267 = vrot.slane %v1090, 6
  %v1268 = vsel %vm1164, %v1267, %v1266
  %v1269 = vrot.slane %v1091, 5
  %v1270 = vsel %vm1167, %v1269, %v1268
  %v1271 = vrot.slane %v1092, 4
  %v1272 = vsel %vm1170, %v1271, %v1270
  %v1273 = vrot.slane %v1093, 3
  %v1274 = vsel %vm1173, %v1273, %v1272
  %v1275 = vrot.slane %v1094, 2
  %v1276 = vsel %vm1176, %v1275, %v1274
  %v1277 = vrot.slane %v1095, 1
  %v1278 = vsel %vm1179, %v1277, %v1276
  %1287 = vst [vmem:[%s1] sm:$0xff] %v1180
  %1288 = vst [vmem:[%s1 + $0x8] sm:$0xff] %v1194
  %1289 = vst [vmem:[%s1 + $0x10] sm:$0xff] %v1208
  %1290 = vst [vmem:[%s1 + $0x18] sm:$0xff] %v1222
  %1291 = vst [vmem:[%s1 + $0x20] sm:$0xff] %v1236
  %1292 = vst [vmem:[%s1 + $0x28] sm:$0xff] %v1250
  %1293 = vst [vmem:[%s1 + $0x30] sm:$0xff] %v1264
  %1294 = vst [vmem:[%s1 + $0x38] sm:$0xff] %v1278
  // Predicated region
  $region6: #{stem_forward.7} parent=0 // pred_check
    _
  $region7: #{stem_forward.7} parent=0 // pred_check_branch
    %1296 = sbr.rel (0) target = $region9
  $region8: #{stem_forward.7} parent=0 // pred_region
    _
  $region9: #{stem_forward.7} parent=0 // pred_fallthru
    _
  // Predicated region
  $region10: #{stem_forward.7} parent=0 // pred_check
    _
  $region11: #{stem_forward.7} parent=0 // pred_check_branch
    %1298 = sbr.rel (0) target = $region13
  $region12: #{stem_forward.7} parent=0 // pred_region
    _
  $region13: #{stem_forward.7} parent=0 // pred_fallthru
    _

</llo_original>
